<compile_context>
chip_gen: v7x
topology: tpu7x:2x2x1
jax: 0.10.0
libtpu: 0.0.40
codegen_flags: <defaults>
</compile_context>

<pallas_src>
import numpy as np
import jax
import jax.numpy as jnp
from jax.experimental import pallas as pl
from jax.experimental.pallas import tpu as pltpu


# ----------------------------------------------------------------------------
# Fused forward: one Pallas kernel
# ----------------------------------------------------------------------------

def vae_forward(x, p):
    """x: (B, S, Cin) channels-last.  Returns (output, mean, log_var)."""
    B, S, Cin = x.shape
    H = p['b1'].shape[1]
    L = p['bm'].shape[1]
    S2, S4 = S // 2, S // 4

    def kernel(x_ref, w1_ref, b1_ref, w2_ref, b2_ref,
               wm_ref, bm_ref, wmu_ref, bmu_ref, wlv_ref, blv_ref,
               wd1_ref, bd1_ref, wc1_ref, bc1_ref, wc2_ref, bc2_ref,
               wm2_ref, bm2_ref,
               out_ref, mean_ref, lv_ref,
               xpad_ref, hpad_ref, yfull_ref):
        f32 = jnp.float32

        # -------------------- encoder --------------------
        # conv1 (k=3, pad=1): pad in-kernel via scratch, im2col, single matmul.
        xpad_ref[:, 0, :] = jnp.zeros((B, Cin), f32)
        xpad_ref[:, S + 1, :] = jnp.zeros((B, Cin), f32)
        xpad_ref[:, 1:S + 1, :] = x_ref[...]
        xp = xpad_ref[...]
        p1 = jnp.concatenate([xp[:, k:k + S, :] for k in range(3)], axis=-1)  # (B,S,3Cin)
        h1 = jnp.maximum(
            jnp.dot(p1.reshape(B * S, 3 * Cin), w1_ref[...],
                    preferred_element_type=f32) + b1_ref[...], 0.0)
        h1 = h1.reshape(B, S, H)

        # maxpool(2,2) fused into the padded scratch fill for conv2.
        hpad_ref[:, 0, :] = jnp.zeros((B, H), f32)
        hpad_ref[:, S2 + 1, :] = jnp.zeros((B, H), f32)
        for q in range(S2):
            hpad_ref[:, 1 + q, :] = jnp.maximum(h1[:, 2 * q, :], h1[:, 2 * q + 1, :])

        # conv2 (k=3, pad=1): im2col, single matmul.
        hp = hpad_ref[...]
        p2 = jnp.concatenate([hp[:, k:k + S2, :] for k in range(3)], axis=-1)  # (B,S2,3H)
        h2 = jnp.maximum(
            jnp.dot(p2.reshape(B * S2, 3 * H), w2_ref[...],
                    preferred_element_type=f32) + b2_ref[...], 0.0)
        h2 = h2.reshape(B, S2, H)

        # maxpool(2,2) + sum over length, fused (pooled2 never materialized).
        s = jnp.zeros((B, H), f32)
        for q in range(S4):
            s = s + jnp.maximum(h2[:, 2 * q, :], h2[:, 2 * q + 1, :])

        enc = jnp.dot(s, wm_ref[...], preferred_element_type=f32) + bm_ref[...]
        mean_ref[...] = jnp.dot(enc, wmu_ref[...],
                                preferred_element_type=f32) + bmu_ref[...]
        lv_ref[...] = jnp.dot(enc, wlv_ref[...],
                              preferred_element_type=f32) + blv_ref[...]
        # TODO(synk): reparameterization_trick(mean, log_var) is computed in the
        # reference encoder but its sample z is discarded, so it is omitted.

        # -------------------- decoder --------------------
        # mlp1 + ReLU; weight columns pre-permuted to (position t, channel c)
        # so no in-kernel transpose is needed.
        d = jnp.maximum(jnp.dot(enc, wd1_ref[...],
                                preferred_element_type=f32) + bd1_ref[...], 0.0)
        # ConvTranspose1d(k=2, s=2) + ReLU as ONE block-diagonal matmul in the
        # lane domain: lane p*H+co of e1 holds output position p = 2t+k.
        e1 = jnp.maximum(jnp.dot(d, wc1_ref[...],
                                 preferred_element_type=f32) + bc1_ref[...], 0.0)
        # ConvTranspose1d(k=3, s=2): per-tap contributions, still in lane domain.
        a = jnp.dot(e1, wc2_ref[...], preferred_element_type=f32)  # (B, S2*3H)

        def tap(t, k):  # contribution of input position t, tap k -> (B, H)
            base = (3 * t + k) * H
            return a[:, base:base + H]

        # overlap-add of the stride-2 taps into a (B, S+1, H) scratch slab.
        yfull_ref[:, 0, :] = tap(0, 0)
        for t in range(1, S2):
            yfull_ref[:, 2 * t, :] = tap(t, 0) + tap(t - 1, 2)
        yfull_ref[:, 2 * S2, :] = tap(S2 - 1, 2)
        for t in range(S2):
            yfull_ref[:, 2 * t + 1, :] = tap(t, 1)

        # bias + ReLU once on the whole slab, then the final Linear per sample,
        # written straight into the (B, S+1, Cin) output block (no glue scatter).
        y = jnp.maximum(yfull_ref[...] + bc2_ref[...], 0.0)
        for b in range(B):
            out_ref[b] = (jnp.dot(y[b], wm2_ref[...],
                                  preferred_element_type=f32) + bm2_ref[...])

    args = (x, p['w1'], p['b1'], p['w2'], p['b2'],
            p['wm'], p['bm'], p['wmu'], p['bmu'], p['wlv'], p['blv'],
            p['wd1'], p['bd1'], p['wc1'], p['bc1'], p['wc2'], p['bc2'],
            p['wm2'], p['bm2'])

    def full_spec(a):
        nd = a.ndim
        return pl.BlockSpec(a.shape, lambda i, _nd=nd: (0,) * _nd)

    out_shapes = (jax.ShapeDtypeStruct((B, S + 1, Cin), jnp.float32),
                  jax.ShapeDtypeStruct((B, L), jnp.float32),
                  jax.ShapeDtypeStruct((B, L), jnp.float32))
    out_specs = (pl.BlockSpec((B, S + 1, Cin), lambda i: (0, 0, 0)),
                 pl.BlockSpec((B, L), lambda i: (0, 0)),
                 pl.BlockSpec((B, L), lambda i: (0, 0)))

    return pl.pallas_call(
        kernel,
        out_shape=out_shapes,
        grid=(1,),
        in_specs=[full_spec(a) for a in args],
        out_specs=out_specs,
        scratch_shapes=[pltpu.VMEM((B, S + 2, Cin), jnp.float32),   # padded conv1 in
                        pltpu.VMEM((B, S2 + 2, H), jnp.float32),    # padded conv2 in
                        pltpu.VMEM((B, S + 1, H), jnp.float32)],    # convT2 overlap-add
        compiler_params=pltpu.CompilerParams(dimension_semantics=("arbitrary",)),
    )(*args)


# ----------------------------------------------------------------------------
# Deterministic parameter init (PyTorch shapes, then re-laid-out for the kernel)
# ----------------------------------------------------------------------------

def init_params(key, S, Cin, H, L):
    S2, S4 = S // 2, S // 4
    keys = jax.random.split(key, 18)

    def u(k, shape, fan_in):
        bound = 1.0 / float(np.sqrt(fan_in))
        return jax.random.uniform(k, shape, jnp.float32, -bound, bound)

    tp = dict(  # PyTorch-shaped parameters
        e_conv1_w=u(keys[0], (H, Cin, 3), Cin * 3), e_conv1_b=u(keys[1], (H,), Cin * 3),
        e_conv2_w=u(keys[2], (H, H, 3), H * 3),     e_conv2_b=u(keys[3], (H,), H * 3),
        e_mlp_w=u(keys[4], (L, H), H),              e_mlp_b=u(keys[5], (L,), H),
        e_mu_w=u(keys[6], (L, L), L),               e_mu_b=u(keys[7], (L,), L),
        e_lv_w=u(keys[8], (L, L), L),               e_lv_b=u(keys[9], (L,), L),
        d_mlp1_w=u(keys[10], (H * S4, L), L),       d_mlp1_b=u(keys[11], (H * S4,), L),
        d_conv1_w=u(keys[12], (H, H, 2), H * 2),    d_conv1_b=u(keys[13], (H,), H * 2),
        d_conv2_w=u(keys[14], (H, H, 3), H * 3),    d_conv2_b=u(keys[15], (H,), H * 3),
        d_mlp2_w=u(keys[16], (Cin, H), H),          d_mlp2_b=u(keys[17], (Cin,), H),
    )

    # ---- Pallas-layout / pre-fused parameters (all re-layout is free, at init) ----
    # encoder convs: im2col weights, rows ordered k-major then ci.
    w1 = jnp.transpose(tp['e_conv1_w'], (2, 1, 0)).reshape(3 * Cin, H)
    w2 = jnp.transpose(tp['e_conv2_w'], (2, 1, 0)).reshape(3 * H, H)
    # decoder mlp1: permute output columns so d lanes are (position t, channel c).
    wd1 = jnp.transpose(tp['d_mlp1_w'].reshape(H, S4, L), (1, 0, 2)).reshape(S4 * H, L).T
    bd1 = jnp.transpose(tp['d_mlp1_b'].reshape(H, S4), (1, 0)).reshape(1, S4 * H)
    # convT1 (k=2, s=2): block-diagonal lane-domain weight (S4*H, S2*H).
    wc1cat = jnp.transpose(tp['d_conv1_w'], (0, 2, 1)).reshape(H, 2 * H)  # [ci, k*H+co]
    wc1 = jnp.zeros((S4 * H, S2 * H), jnp.float32)
    for t in range(S4):
        wc1 = wc1.at[t * H:(t + 1) * H, 2 * t * H:(2 * t + 2) * H].set(wc1cat)
    bc1 = jnp.tile(tp['d_conv1_b'], S2).reshape(1, S2 * H)
    # convT2 (k=3, s=2): block-diagonal per-tap weight (S2*H, 3*S2*H).
    wc2cat = jnp.transpose(tp['d_conv2_w'], (0, 2, 1)).reshape(H, 3 * H)  # [ci, k*H+co]
    wc2 = jnp.zeros((S2 * H, 3 * S2 * H), jnp.float32)
    for t in range(S2):
        wc2 = wc2.at[t * H:(t + 1) * H, 3 * t * H:(3 * t + 3) * H].set(wc2cat)

    pp = dict(
        w1=w1, b1=tp['e_conv1_b'].reshape(1, H),
        w2=w2, b2=tp['e_conv2_b'].reshape(1, H),
        wm=tp['e_mlp_w'].T, bm=tp['e_mlp_b'].reshape(1, L),
        wmu=tp['e_mu_w'].T, bmu=tp['e_mu_b'].reshape(1, L),
        wlv=tp['e_lv_w'].T, blv=tp['e_lv_b'].reshape(1, L),
        wd1=wd1, bd1=bd1,
        wc1=wc1, bc1=bc1,
        wc2=wc2, bc2=tp['d_conv2_b'].reshape(1, H),
        wm2=tp['d_mlp2_w'].T, bm2=tp['d_mlp2_b'].reshape(1, Cin),
    )
    return tp, pp


# ----------------------------------------------------------------------------
# Pure-JAX reference (from PyTorch-shaped params) for a numerical sanity check
# ----------------------------------------------------------------------------

def reference_forward(x, tp, S, Cin, H, L):
    B = x.shape[0]

    def conv1d(x_nlc, w, b):  # w: (Co, Ci, K), padding=1
        Co, Ci, K = w.shape
        Lin = x_nlc.shape[1]
        xp = jnp.pad(x_nlc, ((0, 0), (1, 1), (0, 0)))
        out = jnp.zeros((B, Lin, Co), jnp.float32) + b
        for k in range(K):
            out = out + jnp.einsum('blc,oc->blo', xp[:, k:k + Lin, :], w[:, :, k])
        return out

    h = jax.nn.relu(conv1d(x, tp['e_conv1_w'], tp['e_conv1_b']))
    h = jnp.maximum(h[:, 0::2, :], h[:, 1::2, :])
    h = jax.nn.relu(conv1d(h, tp['e_conv2_w'], tp['e_conv2_b']))
    h = jnp.maximum(h[:, 0::2, :], h[:, 1::2, :])
    s = jnp.sum(h, axis=1)
    enc = s @ tp['e_mlp_w'].T + tp['e_mlp_b']
    mean = enc @ tp['e_mu_w'].T + tp['e_mu_b']
    log_var = enc @ tp['e_lv_w'].T + tp['e_lv_b']

    d = jax.nn.relu(enc @ tp['d_mlp1_w'].T + tp['d_mlp1_b'])
    S4 = S // 4
    d = d.reshape(B, H, S4)                         # NCW, matches torch .view
    T1 = 2 * S4
    y1 = jnp.zeros((B, H, T1), jnp.float32) + tp['d_conv1_b'][None, :, None]
    for k in range(2):
        y1 = y1.at[:, :, k:k + 2 * S4:2].add(
            jnp.einsum('bct,co->bot', d, tp['d_conv1_w'][:, :, k]))
    y1 = jax.nn.relu(y1)
    T2 = 2 * T1 + 1
    y2 = jnp.zeros((B, H, T2), jnp.float32) + tp['d_conv2_b'][None, :, None]
    for k in range(3):
        y2 = y2.at[:, :, k:k + 2 * T1:2].add(
            jnp.einsum('bct,co->bot', y1, tp['d_conv2_w'][:, :, k]))
    y2 = jax.nn.relu(y2).transpose(0, 2, 1)          # (B, T2, H)
    out = y2 @ tp['d_mlp2_w'].T + tp['d_mlp2_b']
    return out, mean, log_var


# ----------------------------------------------------------------------------

if __name__ == "__main__":
    B, S, Cin, H, L = 2, 16, 4, 32, 8
    key = jax.random.PRNGKey(0)
    kx, kp = jax.random.split(key)
    x = jax.random.normal(kx, (B, S, Cin), jnp.float32)

    torch_params, pallas_params = init_params(kp, S, Cin, H, L)

    fwd = jax.jit(vae_forward)
    out, mean, log_var = fwd(x, pallas_params)
    jax.block_until_ready((out, mean, log_var))

    assert out.shape == (B, S + 1, Cin)
    assert mean.shape == (B, L) and log_var.shape == (B, L)

    ref_out, ref_mean, ref_lv = reference_forward(x, torch_params, S, Cin, H, L)
    np.testing.assert_allclose(np.asarray(out), np.asarray(ref_out), rtol=2e-3, atol=2e-3)
    np.testing.assert_allclose(np.asarray(mean), np.asarray(ref_mean), rtol=2e-3, atol=2e-3)
    np.testing.assert_allclose(np.asarray(log_var), np.asarray(ref_lv), rtol=2e-3, atol=2e-3)

    print("KERNEL_OK")
</pallas_src>

<mosaic_0001>
module attributes {stable_mosaic.version = 11 : i64} {
  func.func @kernel(%arg0: i32, %arg1: memref<2x16x4xf32, #tpu.memory_space<vmem>>, %arg2: memref<12x32xf32, #tpu.memory_space<vmem>>, %arg3: memref<1x32xf32, #tpu.memory_space<vmem>>, %arg4: memref<96x32xf32, #tpu.memory_space<vmem>>, %arg5: memref<1x32xf32, #tpu.memory_space<vmem>>, %arg6: memref<32x8xf32, #tpu.memory_space<vmem>>, %arg7: memref<1x8xf32, #tpu.memory_space<vmem>>, %arg8: memref<8x8xf32, #tpu.memory_space<vmem>>, %arg9: memref<1x8xf32, #tpu.memory_space<vmem>>, %arg10: memref<8x8xf32, #tpu.memory_space<vmem>>, %arg11: memref<1x8xf32, #tpu.memory_space<vmem>>, %arg12: memref<8x128xf32, #tpu.memory_space<vmem>>, %arg13: memref<1x128xf32, #tpu.memory_space<vmem>>, %arg14: memref<128x256xf32, #tpu.memory_space<vmem>>, %arg15: memref<1x256xf32, #tpu.memory_space<vmem>>, %arg16: memref<256x768xf32, #tpu.memory_space<vmem>>, %arg17: memref<1x32xf32, #tpu.memory_space<vmem>>, %arg18: memref<32x4xf32, #tpu.memory_space<vmem>>, %arg19: memref<1x4xf32, #tpu.memory_space<vmem>>, %arg20: memref<2x17x4xf32, #tpu.memory_space<vmem>>, %arg21: memref<2x8xf32, #tpu.memory_space<vmem>>, %arg22: memref<2x8xf32, #tpu.memory_space<vmem>>, %arg23: memref<2x18x4xf32, #tpu.memory_space<vmem>>, %arg24: memref<2x10x32xf32, #tpu.memory_space<vmem>>, %arg25: memref<2x17x32xf32, #tpu.memory_space<vmem>>) attributes {dimension_semantics = [#tpu.dimension_semantics<arbitrary>], iteration_bounds = array<i64: 1>, scalar_prefetch = 0 : i64, scratch_operands = 3 : i64, tpu.core_type = #tpu.core_type<tc>, window_params = [{pipeline_mode = #tpu.pipeline_mode<synchronous>, transform_indices = @transform_0, window_bounds = array<i64: 2, 16, 4>}, {pipeline_mode = #tpu.pipeline_mode<synchronous>, transform_indices = @transform_1, window_bounds = array<i64: 12, 32>}, {pipeline_mode = #tpu.pipeline_mode<synchronous>, transform_indices = @transform_2, window_bounds = array<i64: 1, 32>}, {pipeline_mode = #tpu.pipeline_mode<synchronous>, transform_indices = @transform_3, window_bounds = array<i64: 96, 32>}, {pipeline_mode = #tpu.pipeline_mode<synchronous>, transform_indices = @transform_4, window_bounds = array<i64: 1, 32>}, {pipeline_mode = #tpu.pipeline_mode<synchronous>, transform_indices = @transform_5, window_bounds = array<i64: 32, 8>}, {pipeline_mode = #tpu.pipeline_mode<synchronous>, transform_indices = @transform_6, window_bounds = array<i64: 1, 8>}, {pipeline_mode = #tpu.pipeline_mode<synchronous>, transform_indices = @transform_7, window_bounds = array<i64: 8, 8>}, {pipeline_mode = #tpu.pipeline_mode<synchronous>, transform_indices = @transform_8, window_bounds = array<i64: 1, 8>}, {pipeline_mode = #tpu.pipeline_mode<synchronous>, transform_indices = @transform_9, window_bounds = array<i64: 8, 8>}, {pipeline_mode = #tpu.pipeline_mode<synchronous>, transform_indices = @transform_10, window_bounds = array<i64: 1, 8>}, {pipeline_mode = #tpu.pipeline_mode<synchronous>, transform_indices = @transform_11, window_bounds = array<i64: 8, 128>}, {pipeline_mode = #tpu.pipeline_mode<synchronous>, transform_indices = @transform_12, window_bounds = array<i64: 1, 128>}, {pipeline_mode = #tpu.pipeline_mode<synchronous>, transform_indices = @transform_13, window_bounds = array<i64: 128, 256>}, {pipeline_mode = #tpu.pipeline_mode<synchronous>, transform_indices = @transform_14, window_bounds = array<i64: 1, 256>}, {pipeline_mode = #tpu.pipeline_mode<synchronous>, transform_indices = @transform_15, window_bounds = array<i64: 256, 768>}, {pipeline_mode = #tpu.pipeline_mode<synchronous>, transform_indices = @transform_16, window_bounds = array<i64: 1, 32>}, {pipeline_mode = #tpu.pipeline_mode<synchronous>, transform_indices = @transform_17, window_bounds = array<i64: 32, 4>}, {pipeline_mode = #tpu.pipeline_mode<synchronous>, transform_indices = @transform_18, window_bounds = array<i64: 1, 4>}, {pipeline_mode = #tpu.pipeline_mode<synchronous>, transform_indices = @transform_19, window_bounds = array<i64: 2, 17, 4>}, {pipeline_mode = #tpu.pipeline_mode<synchronous>, transform_indices = @transform_20, window_bounds = array<i64: 2, 8>}, {pipeline_mode = #tpu.pipeline_mode<synchronous>, transform_indices = @transform_21, window_bounds = array<i64: 2, 8>}]} {
    %cst = arith.constant 0.000000e+00 : f32
    %0 = vector.broadcast %cst : f32 to vector<2x4xf32>
    %c0 = arith.constant 0 : index
    %c0_0 = arith.constant 0 : index
    %c0_1 = arith.constant 0 : index
    %1 = vector.load %arg23[%c0, %c0_0, %c0_1] : memref<2x18x4xf32, #tpu.memory_space<vmem>>, vector<2x1x4xf32>
    %2 = vector.shape_cast %1 : vector<2x1x4xf32> to vector<2x4xf32>
    %3 = vector.shape_cast %0 : vector<2x4xf32> to vector<2x1x4xf32>
    tpu.vector_store %arg23[%c0, %c0_0, %c0_1], %3 {strides = array<i32>} : memref<2x18x4xf32, #tpu.memory_space<vmem>>, vector<2x1x4xf32>,
    %cst_2 = arith.constant 0.000000e+00 : f32
    %4 = vector.broadcast %cst_2 : f32 to vector<2x4xf32>
    %c0_3 = arith.constant 0 : index
    %c17 = arith.constant 17 : index
    %c0_4 = arith.constant 0 : index
    %5 = vector.load %arg23[%c0_3, %c17, %c0_4] : memref<2x18x4xf32, #tpu.memory_space<vmem>>, vector<2x1x4xf32>
    %6 = vector.shape_cast %5 : vector<2x1x4xf32> to vector<2x4xf32>
    %7 = vector.shape_cast %4 : vector<2x4xf32> to vector<2x1x4xf32>
    tpu.vector_store %arg23[%c0_3, %c17, %c0_4], %7 {strides = array<i32>} : memref<2x18x4xf32, #tpu.memory_space<vmem>>, vector<2x1x4xf32>,
    %c0_5 = arith.constant 0 : index
    %c0_6 = arith.constant 0 : index
    %c0_7 = arith.constant 0 : index
    %8 = vector.load %arg1[%c0_5, %c0_6, %c0_7] : memref<2x16x4xf32, #tpu.memory_space<vmem>>, vector<2x16x4xf32>
    %c0_8 = arith.constant 0 : index
    %c1 = arith.constant 1 : index
    %c0_9 = arith.constant 0 : index
    %9 = vector.load %arg23[%c0_8, %c1, %c0_9] : memref<2x18x4xf32, #tpu.memory_space<vmem>>, vector<2x16x4xf32>
    tpu.vector_store %arg23[%c0_8, %c1, %c0_9], %8 {strides = array<i32>} : memref<2x18x4xf32, #tpu.memory_space<vmem>>, vector<2x16x4xf32>,
    %c0_10 = arith.constant 0 : index
    %c0_11 = arith.constant 0 : index
    %c0_12 = arith.constant 0 : index
    %10 = vector.load %arg23[%c0_10, %c0_11, %c0_12] : memref<2x18x4xf32, #tpu.memory_space<vmem>>, vector<2x18x4xf32>
    %11 = vector.extract_strided_slice %10 {offsets = [0, 0, 0], sizes = [2, 16, 4], strides = [1, 1, 1]} : vector<2x18x4xf32> to vector<2x16x4xf32>
    %12 = vector.extract_strided_slice %10 {offsets = [0, 1, 0], sizes = [2, 16, 4], strides = [1, 1, 1]} : vector<2x18x4xf32> to vector<2x16x4xf32>
    %13 = vector.extract_strided_slice %10 {offsets = [0, 2, 0], sizes = [2, 16, 4], strides = [1, 1, 1]} : vector<2x18x4xf32> to vector<2x16x4xf32>
    %14 = tpu.concatenate %11, %12, %13 in 2 : vector<2x16x4xf32>, vector<2x16x4xf32>, vector<2x16x4xf32> -> vector<2x16x12xf32>
    %15 = vector.shape_cast %14 : vector<2x16x12xf32> to vector<32x12xf32>
    %c0_13 = arith.constant 0 : index
    %c0_14 = arith.constant 0 : index
    %16 = vector.load %arg2[%c0_13, %c0_14] : memref<12x32xf32, #tpu.memory_space<vmem>>, vector<12x32xf32>
    %cst_15 = arith.constant dense<0.000000e+00> : vector<32x32xf32>
    %17 = tpu.matmul %15, %16, %cst_15 {dimension_numbers = #tpu.dot_dimension_numbers<[1], [0], [0], [1], [0, 0, 1, 1], [], []>} : vector<32x12xf32>, vector<12x32xf32>, vector<32x32xf32> -> vector<32x32xf32>
    %c0_16 = arith.constant 0 : index
    %c0_17 = arith.constant 0 : index
    %18 = vector.load %arg3[%c0_16, %c0_17] : memref<1x32xf32, #tpu.memory_space<vmem>>, vector<1x32xf32>
    %19 = vector.broadcast %18 : vector<1x32xf32> to vector<32x32xf32>
    %20 = arith.addf %17, %19 : vector<32x32xf32>
    %cst_18 = arith.constant 0.000000e+00 : f32
    %21 = vector.broadcast %cst_18 : f32 to vector<32x32xf32>
    %22 = arith.maximumf %20, %21 : vector<32x32xf32>
    %23 = vector.shape_cast %22 : vector<32x32xf32> to vector<2x16x32xf32>
    %cst_19 = arith.constant 0.000000e+00 : f32
    %24 = vector.broadcast %cst_19 : f32 to vector<2x32xf32>
    %c0_20 = arith.constant 0 : index
    %c0_21 = arith.constant 0 : index
    %c0_22 = arith.constant 0 : index
    %25 = vector.load %arg24[%c0_20, %c0_21, %c0_22] : memref<2x10x32xf32, #tpu.memory_space<vmem>>, vector<2x1x32xf32>
    %26 = vector.shape_cast %25 : vector<2x1x32xf32> to vector<2x32xf32>
    %27 = vector.shape_cast %24 : vector<2x32xf32> to vector<2x1x32xf32>
    tpu.vector_store %arg24[%c0_20, %c0_21, %c0_22], %27 {strides = array<i32>} : memref<2x10x32xf32, #tpu.memory_space<vmem>>, vector<2x1x32xf32>,
    %cst_23 = arith.constant 0.000000e+00 : f32
    %28 = vector.broadcast %cst_23 : f32 to vector<2x32xf32>
    %c0_24 = arith.constant 0 : index
    %c9 = arith.constant 9 : index
    %c0_25 = arith.constant 0 : index
    %29 = vector.load %arg24[%c0_24, %c9, %c0_25] : memref<2x10x32xf32, #tpu.memory_space<vmem>>, vector<2x1x32xf32>
    %30 = vector.shape_cast %29 : vector<2x1x32xf32> to vector<2x32xf32>
    %31 = vector.shape_cast %28 : vector<2x32xf32> to vector<2x1x32xf32>
    tpu.vector_store %arg24[%c0_24, %c9, %c0_25], %31 {strides = array<i32>} : memref<2x10x32xf32, #tpu.memory_space<vmem>>, vector<2x1x32xf32>,
    %32 = vector.extract_strided_slice %23 {offsets = [0, 0, 0], sizes = [2, 1, 32], strides = [1, 1, 1]} : vector<2x16x32xf32> to vector<2x1x32xf32>
    %33 = vector.shape_cast %32 : vector<2x1x32xf32> to vector<2x32xf32>
    %34 = vector.extract_strided_slice %23 {offsets = [0, 1, 0], sizes = [2, 1, 32], strides = [1, 1, 1]} : vector<2x16x32xf32> to vector<2x1x32xf32>
    %35 = vector.shape_cast %34 : vector<2x1x32xf32> to vector<2x32xf32>
    %36 = arith.maximumf %33, %35 : vector<2x32xf32>
    %c0_26 = arith.constant 0 : index
    %c1_27 = arith.constant 1 : index
    %c0_28 = arith.constant 0 : index
    %37 = vector.load %arg24[%c0_26, %c1_27, %c0_28] : memref<2x10x32xf32, #tpu.memory_space<vmem>>, vector<2x1x32xf32>
    %38 = vector.shape_cast %37 : vector<2x1x32xf32> to vector<2x32xf32>
    %39 = vector.shape_cast %36 : vector<2x32xf32> to vector<2x1x32xf32>
    tpu.vector_store %arg24[%c0_26, %c1_27, %c0_28], %39 {strides = array<i32>} : memref<2x10x32xf32, #tpu.memory_space<vmem>>, vector<2x1x32xf32>,
    %40 = vector.extract_strided_slice %23 {offsets = [0, 2, 0], sizes = [2, 1, 32], strides = [1, 1, 1]} : vector<2x16x32xf32> to vector<2x1x32xf32>
    %41 = vector.shape_cast %40 : vector<2x1x32xf32> to vector<2x32xf32>
    %42 = vector.extract_strided_slice %23 {offsets = [0, 3, 0], sizes = [2, 1, 32], strides = [1, 1, 1]} : vector<2x16x32xf32> to vector<2x1x32xf32>
    %43 = vector.shape_cast %42 : vector<2x1x32xf32> to vector<2x32xf32>
    %44 = arith.maximumf %41, %43 : vector<2x32xf32>
    %c0_29 = arith.constant 0 : index
    %c2 = arith.constant 2 : index
    %c0_30 = arith.constant 0 : index
    %45 = vector.load %arg24[%c0_29, %c2, %c0_30] : memref<2x10x32xf32, #tpu.memory_space<vmem>>, vector<2x1x32xf32>
    %46 = vector.shape_cast %45 : vector<2x1x32xf32> to vector<2x32xf32>
    %47 = vector.shape_cast %44 : vector<2x32xf32> to vector<2x1x32xf32>
    tpu.vector_store %arg24[%c0_29, %c2, %c0_30], %47 {strides = array<i32>} : memref<2x10x32xf32, #tpu.memory_space<vmem>>, vector<2x1x32xf32>,
    %48 = vector.extract_strided_slice %23 {offsets = [0, 4, 0], sizes = [2, 1, 32], strides = [1, 1, 1]} : vector<2x16x32xf32> to vector<2x1x32xf32>
    %49 = vector.shape_cast %48 : vector<2x1x32xf32> to vector<2x32xf32>
    %50 = vector.extract_strided_slice %23 {offsets = [0, 5, 0], sizes = [2, 1, 32], strides = [1, 1, 1]} : vector<2x16x32xf32> to vector<2x1x32xf32>
    %51 = vector.shape_cast %50 : vector<2x1x32xf32> to vector<2x32xf32>
    %52 = arith.maximumf %49, %51 : vector<2x32xf32>
    %c0_31 = arith.constant 0 : index
    %c3 = arith.constant 3 : index
    %c0_32 = arith.constant 0 : index
    %53 = vector.load %arg24[%c0_31, %c3, %c0_32] : memref<2x10x32xf32, #tpu.memory_space<vmem>>, vector<2x1x32xf32>
    %54 = vector.shape_cast %53 : vector<2x1x32xf32> to vector<2x32xf32>
    %55 = vector.shape_cast %52 : vector<2x32xf32> to vector<2x1x32xf32>
    tpu.vector_store %arg24[%c0_31, %c3, %c0_32], %55 {strides = array<i32>} : memref<2x10x32xf32, #tpu.memory_space<vmem>>, vector<2x1x32xf32>,
    %56 = vector.extract_strided_slice %23 {offsets = [0, 6, 0], sizes = [2, 1, 32], strides = [1, 1, 1]} : vector<2x16x32xf32> to vector<2x1x32xf32>
    %57 = vector.shape_cast %56 : vector<2x1x32xf32> to vector<2x32xf32>
    %58 = vector.extract_strided_slice %23 {offsets = [0, 7, 0], sizes = [2, 1, 32], strides = [1, 1, 1]} : vector<2x16x32xf32> to vector<2x1x32xf32>
    %59 = vector.shape_cast %58 : vector<2x1x32xf32> to vector<2x32xf32>
    %60 = arith.maximumf %57, %59 : vector<2x32xf32>
    %c0_33 = arith.constant 0 : index
    %c4 = arith.constant 4 : index
    %c0_34 = arith.constant 0 : index
    %61 = vector.load %arg24[%c0_33, %c4, %c0_34] : memref<2x10x32xf32, #tpu.memory_space<vmem>>, vector<2x1x32xf32>
    %62 = vector.shape_cast %61 : vector<2x1x32xf32> to vector<2x32xf32>
    %63 = vector.shape_cast %60 : vector<2x32xf32> to vector<2x1x32xf32>
    tpu.vector_store %arg24[%c0_33, %c4, %c0_34], %63 {strides = array<i32>} : memref<2x10x32xf32, #tpu.memory_space<vmem>>, vector<2x1x32xf32>,
    %64 = vector.extract_strided_slice %23 {offsets = [0, 8, 0], sizes = [2, 1, 32], strides = [1, 1, 1]} : vector<2x16x32xf32> to vector<2x1x32xf32>
    %65 = vector.shape_cast %64 : vector<2x1x32xf32> to vector<2x32xf32>
    %66 = vector.extract_strided_slice %23 {offsets = [0, 9, 0], sizes = [2, 1, 32], strides = [1, 1, 1]} : vector<2x16x32xf32> to vector<2x1x32xf32>
    %67 = vector.shape_cast %66 : vector<2x1x32xf32> to vector<2x32xf32>
    %68 = arith.maximumf %65, %67 : vector<2x32xf32>
    %c0_35 = arith.constant 0 : index
    %c5 = arith.constant 5 : index
    %c0_36 = arith.constant 0 : index
    %69 = vector.load %arg24[%c0_35, %c5, %c0_36] : memref<2x10x32xf32, #tpu.memory_space<vmem>>, vector<2x1x32xf32>
    %70 = vector.shape_cast %69 : vector<2x1x32xf32> to vector<2x32xf32>
    %71 = vector.shape_cast %68 : vector<2x32xf32> to vector<2x1x32xf32>
    tpu.vector_store %arg24[%c0_35, %c5, %c0_36], %71 {strides = array<i32>} : memref<2x10x32xf32, #tpu.memory_space<vmem>>, vector<2x1x32xf32>,
    %72 = vector.extract_strided_slice %23 {offsets = [0, 10, 0], sizes = [2, 1, 32], strides = [1, 1, 1]} : vector<2x16x32xf32> to vector<2x1x32xf32>
    %73 = vector.shape_cast %72 : vector<2x1x32xf32> to vector<2x32xf32>
    %74 = vector.extract_strided_slice %23 {offsets = [0, 11, 0], sizes = [2, 1, 32], strides = [1, 1, 1]} : vector<2x16x32xf32> to vector<2x1x32xf32>
    %75 = vector.shape_cast %74 : vector<2x1x32xf32> to vector<2x32xf32>
    %76 = arith.maximumf %73, %75 : vector<2x32xf32>
    %c0_37 = arith.constant 0 : index
    %c6 = arith.constant 6 : index
    %c0_38 = arith.constant 0 : index
    %77 = vector.load %arg24[%c0_37, %c6, %c0_38] : memref<2x10x32xf32, #tpu.memory_space<vmem>>, vector<2x1x32xf32>
    %78 = vector.shape_cast %77 : vector<2x1x32xf32> to vector<2x32xf32>
    %79 = vector.shape_cast %76 : vector<2x32xf32> to vector<2x1x32xf32>
    tpu.vector_store %arg24[%c0_37, %c6, %c0_38], %79 {strides = array<i32>} : memref<2x10x32xf32, #tpu.memory_space<vmem>>, vector<2x1x32xf32>,
    %80 = vector.extract_strided_slice %23 {offsets = [0, 12, 0], sizes = [2, 1, 32], strides = [1, 1, 1]} : vector<2x16x32xf32> to vector<2x1x32xf32>
    %81 = vector.shape_cast %80 : vector<2x1x32xf32> to vector<2x32xf32>
    %82 = vector.extract_strided_slice %23 {offsets = [0, 13, 0], sizes = [2, 1, 32], strides = [1, 1, 1]} : vector<2x16x32xf32> to vector<2x1x32xf32>
    %83 = vector.shape_cast %82 : vector<2x1x32xf32> to vector<2x32xf32>
    %84 = arith.maximumf %81, %83 : vector<2x32xf32>
    %c0_39 = arith.constant 0 : index
    %c7 = arith.constant 7 : index
    %c0_40 = arith.constant 0 : index
    %85 = vector.load %arg24[%c0_39, %c7, %c0_40] : memref<2x10x32xf32, #tpu.memory_space<vmem>>, vector<2x1x32xf32>
    %86 = vector.shape_cast %85 : vector<2x1x32xf32> to vector<2x32xf32>
    %87 = vector.shape_cast %84 : vector<2x32xf32> to vector<2x1x32xf32>
    tpu.vector_store %arg24[%c0_39, %c7, %c0_40], %87 {strides = array<i32>} : memref<2x10x32xf32, #tpu.memory_space<vmem>>, vector<2x1x32xf32>,
    %88 = vector.extract_strided_slice %23 {offsets = [0, 14, 0], sizes = [2, 1, 32], strides = [1, 1, 1]} : vector<2x16x32xf32> to vector<2x1x32xf32>
    %89 = vector.shape_cast %88 : vector<2x1x32xf32> to vector<2x32xf32>
    %90 = vector.extract_strided_slice %23 {offsets = [0, 15, 0], sizes = [2, 1, 32], strides = [1, 1, 1]} : vector<2x16x32xf32> to vector<2x1x32xf32>
    %91 = vector.shape_cast %90 : vector<2x1x32xf32> to vector<2x32xf32>
    %92 = arith.maximumf %89, %91 : vector<2x32xf32>
    %c0_41 = arith.constant 0 : index
    %c8 = arith.constant 8 : index
    %c0_42 = arith.constant 0 : index
    %93 = vector.load %arg24[%c0_41, %c8, %c0_42] : memref<2x10x32xf32, #tpu.memory_space<vmem>>, vector<2x1x32xf32>
    %94 = vector.shape_cast %93 : vector<2x1x32xf32> to vector<2x32xf32>
    %95 = vector.shape_cast %92 : vector<2x32xf32> to vector<2x1x32xf32>
    tpu.vector_store %arg24[%c0_41, %c8, %c0_42], %95 {strides = array<i32>} : memref<2x10x32xf32, #tpu.memory_space<vmem>>, vector<2x1x32xf32>,
    %c0_43 = arith.constant 0 : index
    %c0_44 = arith.constant 0 : index
    %c0_45 = arith.constant 0 : index
    %96 = vector.load %arg24[%c0_43, %c0_44, %c0_45] : memref<2x10x32xf32, #tpu.memory_space<vmem>>, vector<2x10x32xf32>
    %97 = vector.extract_strided_slice %96 {offsets = [0, 0, 0], sizes = [2, 8, 32], strides = [1, 1, 1]} : vector<2x10x32xf32> to vector<2x8x32xf32>
    %98 = vector.extract_strided_slice %96 {offsets = [0, 1, 0], sizes = [2, 8, 32], strides = [1, 1, 1]} : vector<2x10x32xf32> to vector<2x8x32xf32>
    %99 = vector.extract_strided_slice %96 {offsets = [0, 2, 0], sizes = [2, 8, 32], strides = [1, 1, 1]} : vector<2x10x32xf32> to vector<2x8x32xf32>
    %100 = tpu.concatenate %97, %98, %99 in 2 : vector<2x8x32xf32>, vector<2x8x32xf32>, vector<2x8x32xf32> -> vector<2x8x96xf32>
    %101 = vector.shape_cast %100 : vector<2x8x96xf32> to vector<16x96xf32>
    %c0_46 = arith.constant 0 : index
    %c0_47 = arith.constant 0 : index
    %102 = vector.load %arg4[%c0_46, %c0_47] : memref<96x32xf32, #tpu.memory_space<vmem>>, vector<96x32xf32>
    %cst_48 = arith.constant dense<0.000000e+00> : vector<16x32xf32>
    %103 = tpu.matmul %101, %102, %cst_48 {dimension_numbers = #tpu.dot_dimension_numbers<[1], [0], [0], [1], [0, 0, 1, 1], [], []>} : vector<16x96xf32>, vector<96x32xf32>, vector<16x32xf32> -> vector<16x32xf32>
    %c0_49 = arith.constant 0 : index
    %c0_50 = arith.constant 0 : index
    %104 = vector.load %arg5[%c0_49, %c0_50] : memref<1x32xf32, #tpu.memory_space<vmem>>, vector<1x32xf32>
    %105 = vector.broadcast %104 : vector<1x32xf32> to vector<16x32xf32>
    %106 = arith.addf %103, %105 : vector<16x32xf32>
    %cst_51 = arith.constant 0.000000e+00 : f32
    %107 = vector.broadcast %cst_51 : f32 to vector<16x32xf32>
    %108 = arith.maximumf %106, %107 : vector<16x32xf32>
    %109 = vector.shape_cast %108 : vector<16x32xf32> to vector<2x8x32xf32>
    %cst_52 = arith.constant 0.000000e+00 : f32
    %110 = vector.broadcast %cst_52 : f32 to vector<2x32xf32>
    %111 = vector.extract_strided_slice %109 {offsets = [0, 0, 0], sizes = [2, 1, 32], strides = [1, 1, 1]} : vector<2x8x32xf32> to vector<2x1x32xf32>
    %112 = vector.shape_cast %111 : vector<2x1x32xf32> to vector<2x32xf32>
    %113 = vector.extract_strided_slice %109 {offsets = [0, 1, 0], sizes = [2, 1, 32], strides = [1, 1, 1]} : vector<2x8x32xf32> to vector<2x1x32xf32>
    %114 = vector.shape_cast %113 : vector<2x1x32xf32> to vector<2x32xf32>
    %115 = arith.maximumf %112, %114 : vector<2x32xf32>
    %116 = arith.addf %110, %115 : vector<2x32xf32>
    %117 = vector.extract_strided_slice %109 {offsets = [0, 2, 0], sizes = [2, 1, 32], strides = [1, 1, 1]} : vector<2x8x32xf32> to vector<2x1x32xf32>
    %118 = vector.shape_cast %117 : vector<2x1x32xf32> to vector<2x32xf32>
    %119 = vector.extract_strided_slice %109 {offsets = [0, 3, 0], sizes = [2, 1, 32], strides = [1, 1, 1]} : vector<2x8x32xf32> to vector<2x1x32xf32>
    %120 = vector.shape_cast %119 : vector<2x1x32xf32> to vector<2x32xf32>
    %121 = arith.maximumf %118, %120 : vector<2x32xf32>
    %122 = arith.addf %116, %121 : vector<2x32xf32>
    %123 = vector.extract_strided_slice %109 {offsets = [0, 4, 0], sizes = [2, 1, 32], strides = [1, 1, 1]} : vector<2x8x32xf32> to vector<2x1x32xf32>
    %124 = vector.shape_cast %123 : vector<2x1x32xf32> to vector<2x32xf32>
    %125 = vector.extract_strided_slice %109 {offsets = [0, 5, 0], sizes = [2, 1, 32], strides = [1, 1, 1]} : vector<2x8x32xf32> to vector<2x1x32xf32>
    %126 = vector.shape_cast %125 : vector<2x1x32xf32> to vector<2x32xf32>
    %127 = arith.maximumf %124, %126 : vector<2x32xf32>
    %128 = arith.addf %122, %127 : vector<2x32xf32>
    %129 = vector.extract_strided_slice %109 {offsets = [0, 6, 0], sizes = [2, 1, 32], strides = [1, 1, 1]} : vector<2x8x32xf32> to vector<2x1x32xf32>
    %130 = vector.shape_cast %129 : vector<2x1x32xf32> to vector<2x32xf32>
    %131 = vector.extract_strided_slice %109 {offsets = [0, 7, 0], sizes = [2, 1, 32], strides = [1, 1, 1]} : vector<2x8x32xf32> to vector<2x1x32xf32>
    %132 = vector.shape_cast %131 : vector<2x1x32xf32> to vector<2x32xf32>
    %133 = arith.maximumf %130, %132 : vector<2x32xf32>
    %134 = arith.addf %128, %133 : vector<2x32xf32>
    %c0_53 = arith.constant 0 : index
    %c0_54 = arith.constant 0 : index
    %135 = vector.load %arg6[%c0_53, %c0_54] : memref<32x8xf32, #tpu.memory_space<vmem>>, vector<32x8xf32>
    %cst_55 = arith.constant dense<0.000000e+00> : vector<2x8xf32>
    %136 = tpu.matmul %134, %135, %cst_55 {dimension_numbers = #tpu.dot_dimension_numbers<[1], [0], [0], [1], [0, 0, 1, 1], [], []>} : vector<2x32xf32>, vector<32x8xf32>, vector<2x8xf32> -> vector<2x8xf32>
    %c0_56 = arith.constant 0 : index
    %c0_57 = arith.constant 0 : index
    %137 = vector.load %arg7[%c0_56, %c0_57] : memref<1x8xf32, #tpu.memory_space<vmem>>, vector<1x8xf32>
    %138 = vector.broadcast %137 : vector<1x8xf32> to vector<2x8xf32>
    %139 = arith.addf %136, %138 : vector<2x8xf32>
    %c0_58 = arith.constant 0 : index
    %c0_59 = arith.constant 0 : index
    %140 = vector.load %arg8[%c0_58, %c0_59] : memref<8x8xf32, #tpu.memory_space<vmem>>, vector<8x8xf32>
    %cst_60 = arith.constant dense<0.000000e+00> : vector<2x8xf32>
    %141 = tpu.matmul %139, %140, %cst_60 {dimension_numbers = #tpu.dot_dimension_numbers<[1], [0], [0], [1], [0, 0, 1, 1], [], []>} : vector<2x8xf32>, vector<8x8xf32>, vector<2x8xf32> -> vector<2x8xf32>
    %c0_61 = arith.constant 0 : index
    %c0_62 = arith.constant 0 : index
    %142 = vector.load %arg9[%c0_61, %c0_62] : memref<1x8xf32, #tpu.memory_space<vmem>>, vector<1x8xf32>
    %143 = vector.broadcast %142 : vector<1x8xf32> to vector<2x8xf32>
    %144 = arith.addf %141, %143 : vector<2x8xf32>
    %c0_63 = arith.constant 0 : index
    %c0_64 = arith.constant 0 : index
    %145 = vector.load %arg21[%c0_63, %c0_64] : memref<2x8xf32, #tpu.memory_space<vmem>>, vector<2x8xf32>
    tpu.vector_store %arg21[%c0_63, %c0_64], %144 {strides = array<i32>} : memref<2x8xf32, #tpu.memory_space<vmem>>, vector<2x8xf32>,
    %c0_65 = arith.constant 0 : index
    %c0_66 = arith.constant 0 : index
    %146 = vector.load %arg10[%c0_65, %c0_66] : memref<8x8xf32, #tpu.memory_space<vmem>>, vector<8x8xf32>
    %cst_67 = arith.constant dense<0.000000e+00> : vector<2x8xf32>
    %147 = tpu.matmul %139, %146, %cst_67 {dimension_numbers = #tpu.dot_dimension_numbers<[1], [0], [0], [1], [0, 0, 1, 1], [], []>} : vector<2x8xf32>, vector<8x8xf32>, vector<2x8xf32> -> vector<2x8xf32>
    %c0_68 = arith.constant 0 : index
    %c0_69 = arith.constant 0 : index
    %148 = vector.load %arg11[%c0_68, %c0_69] : memref<1x8xf32, #tpu.memory_space<vmem>>, vector<1x8xf32>
    %149 = vector.broadcast %148 : vector<1x8xf32> to vector<2x8xf32>
    %150 = arith.addf %147, %149 : vector<2x8xf32>
    %c0_70 = arith.constant 0 : index
    %c0_71 = arith.constant 0 : index
    %151 = vector.load %arg22[%c0_70, %c0_71] : memref<2x8xf32, #tpu.memory_space<vmem>>, vector<2x8xf32>
    tpu.vector_store %arg22[%c0_70, %c0_71], %150 {strides = array<i32>} : memref<2x8xf32, #tpu.memory_space<vmem>>, vector<2x8xf32>,
    %c0_72 = arith.constant 0 : index
    %c0_73 = arith.constant 0 : index
    %152 = vector.load %arg12[%c0_72, %c0_73] : memref<8x128xf32, #tpu.memory_space<vmem>>, vector<8x128xf32>
    %cst_74 = arith.constant dense<0.000000e+00> : vector<2x128xf32>
    %153 = tpu.matmul %139, %152, %cst_74 {dimension_numbers = #tpu.dot_dimension_numbers<[1], [0], [0], [1], [0, 0, 1, 1], [], []>} : vector<2x8xf32>, vector<8x128xf32>, vector<2x128xf32> -> vector<2x128xf32>
    %c0_75 = arith.constant 0 : index
    %c0_76 = arith.constant 0 : index
    %154 = vector.load %arg13[%c0_75, %c0_76] : memref<1x128xf32, #tpu.memory_space<vmem>>, vector<1x128xf32>
    %155 = vector.broadcast %154 : vector<1x128xf32> to vector<2x128xf32>
    %156 = arith.addf %153, %155 : vector<2x128xf32>
    %cst_77 = arith.constant 0.000000e+00 : f32
    %157 = vector.broadcast %cst_77 : f32 to vector<2x128xf32>
    %158 = arith.maximumf %156, %157 : vector<2x128xf32>
    %c0_78 = arith.constant 0 : index
    %c0_79 = arith.constant 0 : index
    %159 = vector.load %arg14[%c0_78, %c0_79] : memref<128x256xf32, #tpu.memory_space<vmem>>, vector<128x256xf32>
    %cst_80 = arith.constant dense<0.000000e+00> : vector<2x256xf32>
    %160 = tpu.matmul %158, %159, %cst_80 {dimension_numbers = #tpu.dot_dimension_numbers<[1], [0], [0], [1], [0, 0, 1, 1], [], []>} : vector<2x128xf32>, vector<128x256xf32>, vector<2x256xf32> -> vector<2x256xf32>
    %c0_81 = arith.constant 0 : index
    %c0_82 = arith.constant 0 : index
    %161 = vector.load %arg15[%c0_81, %c0_82] : memref<1x256xf32, #tpu.memory_space<vmem>>, vector<1x256xf32>
    %162 = vector.broadcast %161 : vector<1x256xf32> to vector<2x256xf32>
    %163 = arith.addf %160, %162 : vector<2x256xf32>
    %cst_83 = arith.constant 0.000000e+00 : f32
    %164 = vector.broadcast %cst_83 : f32 to vector<2x256xf32>
    %165 = arith.maximumf %163, %164 : vector<2x256xf32>
    %c0_84 = arith.constant 0 : index
    %c0_85 = arith.constant 0 : index
    %166 = vector.load %arg16[%c0_84, %c0_85] : memref<256x768xf32, #tpu.memory_space<vmem>>, vector<256x768xf32>
    %cst_86 = arith.constant dense<0.000000e+00> : vector<2x768xf32>
    %167 = tpu.matmul %165, %166, %cst_86 {dimension_numbers = #tpu.dot_dimension_numbers<[1], [0], [0], [1], [0, 0, 1, 1], [], []>} : vector<2x256xf32>, vector<256x768xf32>, vector<2x768xf32> -> vector<2x768xf32>
    %168 = vector.extract_strided_slice %167 {offsets = [0, 0], sizes = [2, 32], strides = [1, 1]} : vector<2x768xf32> to vector<2x32xf32>
    %c0_87 = arith.constant 0 : index
    %c0_88 = arith.constant 0 : index
    %c0_89 = arith.constant 0 : index
    %169 = vector.load %arg25[%c0_87, %c0_88, %c0_89] : memref<2x17x32xf32, #tpu.memory_space<vmem>>, vector<2x1x32xf32>
    %170 = vector.shape_cast %169 : vector<2x1x32xf32> to vector<2x32xf32>
    %171 = vector.shape_cast %168 : vector<2x32xf32> to vector<2x1x32xf32>
    tpu.vector_store %arg25[%c0_87, %c0_88, %c0_89], %171 {strides = array<i32>} : memref<2x17x32xf32, #tpu.memory_space<vmem>>, vector<2x1x32xf32>,
    %172 = vector.extract_strided_slice %167 {offsets = [0, 96], sizes = [2, 32], strides = [1, 1]} : vector<2x768xf32> to vector<2x32xf32>
    %173 = vector.extract_strided_slice %167 {offsets = [0, 64], sizes = [2, 32], strides = [1, 1]} : vector<2x768xf32> to vector<2x32xf32>
    %174 = arith.addf %172, %173 : vector<2x32xf32>
    %c0_90 = arith.constant 0 : index
    %c2_91 = arith.constant 2 : index
    %c0_92 = arith.constant 0 : index
    %175 = vector.load %arg25[%c0_90, %c2_91, %c0_92] : memref<2x17x32xf32, #tpu.memory_space<vmem>>, vector<2x1x32xf32>
    %176 = vector.shape_cast %175 : vector<2x1x32xf32> to vector<2x32xf32>
    %177 = vector.shape_cast %174 : vector<2x32xf32> to vector<2x1x32xf32>
    tpu.vector_store %arg25[%c0_90, %c2_91, %c0_92], %177 {strides = array<i32>} : memref<2x17x32xf32, #tpu.memory_space<vmem>>, vector<2x1x32xf32>,
    %178 = vector.extract_strided_slice %167 {offsets = [0, 192], sizes = [2, 32], strides = [1, 1]} : vector<2x768xf32> to vector<2x32xf32>
    %179 = vector.extract_strided_slice %167 {offsets = [0, 160], sizes = [2, 32], strides = [1, 1]} : vector<2x768xf32> to vector<2x32xf32>
    %180 = arith.addf %178, %179 : vector<2x32xf32>
    %c0_93 = arith.constant 0 : index
    %c4_94 = arith.constant 4 : index
    %c0_95 = arith.constant 0 : index
    %181 = vector.load %arg25[%c0_93, %c4_94, %c0_95] : memref<2x17x32xf32, #tpu.memory_space<vmem>>, vector<2x1x32xf32>
    %182 = vector.shape_cast %181 : vector<2x1x32xf32> to vector<2x32xf32>
    %183 = vector.shape_cast %180 : vector<2x32xf32> to vector<2x1x32xf32>
    tpu.vector_store %arg25[%c0_93, %c4_94, %c0_95], %183 {strides = array<i32>} : memref<2x17x32xf32, #tpu.memory_space<vmem>>, vector<2x1x32xf32>,
    %184 = vector.extract_strided_slice %167 {offsets = [0, 288], sizes = [2, 32], strides = [1, 1]} : vector<2x768xf32> to vector<2x32xf32>
    %185 = vector.extract_strided_slice %167 {offsets = [0, 256], sizes = [2, 32], strides = [1, 1]} : vector<2x768xf32> to vector<2x32xf32>
    %186 = arith.addf %184, %185 : vector<2x32xf32>
    %c0_96 = arith.constant 0 : index
    %c6_97 = arith.constant 6 : index
    %c0_98 = arith.constant 0 : index
    %187 = vector.load %arg25[%c0_96, %c6_97, %c0_98] : memref<2x17x32xf32, #tpu.memory_space<vmem>>, vector<2x1x32xf32>
    %188 = vector.shape_cast %187 : vector<2x1x32xf32> to vector<2x32xf32>
    %189 = vector.shape_cast %186 : vector<2x32xf32> to vector<2x1x32xf32>
    tpu.vector_store %arg25[%c0_96, %c6_97, %c0_98], %189 {strides = array<i32>} : memref<2x17x32xf32, #tpu.memory_space<vmem>>, vector<2x1x32xf32>,
    %190 = vector.extract_strided_slice %167 {offsets = [0, 384], sizes = [2, 32], strides = [1, 1]} : vector<2x768xf32> to vector<2x32xf32>
    %191 = vector.extract_strided_slice %167 {offsets = [0, 352], sizes = [2, 32], strides = [1, 1]} : vector<2x768xf32> to vector<2x32xf32>
    %192 = arith.addf %190, %191 : vector<2x32xf32>
    %c0_99 = arith.constant 0 : index
    %c8_100 = arith.constant 8 : index
    %c0_101 = arith.constant 0 : index
    %193 = vector.load %arg25[%c0_99, %c8_100, %c0_101] : memref<2x17x32xf32, #tpu.memory_space<vmem>>, vector<2x1x32xf32>
    %194 = vector.shape_cast %193 : vector<2x1x32xf32> to vector<2x32xf32>
    %195 = vector.shape_cast %192 : vector<2x32xf32> to vector<2x1x32xf32>
    tpu.vector_store %arg25[%c0_99, %c8_100, %c0_101], %195 {strides = array<i32>} : memref<2x17x32xf32, #tpu.memory_space<vmem>>, vector<2x1x32xf32>,
    %196 = vector.extract_strided_slice %167 {offsets = [0, 480], sizes = [2, 32], strides = [1, 1]} : vector<2x768xf32> to vector<2x32xf32>
    %197 = vector.extract_strided_slice %167 {offsets = [0, 448], sizes = [2, 32], strides = [1, 1]} : vector<2x768xf32> to vector<2x32xf32>
    %198 = arith.addf %196, %197 : vector<2x32xf32>
    %c0_102 = arith.constant 0 : index
    %c10 = arith.constant 10 : index
    %c0_103 = arith.constant 0 : index
    %199 = vector.load %arg25[%c0_102, %c10, %c0_103] : memref<2x17x32xf32, #tpu.memory_space<vmem>>, vector<2x1x32xf32>
    %200 = vector.shape_cast %199 : vector<2x1x32xf32> to vector<2x32xf32>
    %201 = vector.shape_cast %198 : vector<2x32xf32> to vector<2x1x32xf32>
    tpu.vector_store %arg25[%c0_102, %c10, %c0_103], %201 {strides = array<i32>} : memref<2x17x32xf32, #tpu.memory_space<vmem>>, vector<2x1x32xf32>,
    %202 = vector.extract_strided_slice %167 {offsets = [0, 576], sizes = [2, 32], strides = [1, 1]} : vector<2x768xf32> to vector<2x32xf32>
    %203 = vector.extract_strided_slice %167 {offsets = [0, 544], sizes = [2, 32], strides = [1, 1]} : vector<2x768xf32> to vector<2x32xf32>
    %204 = arith.addf %202, %203 : vector<2x32xf32>
    %c0_104 = arith.constant 0 : index
    %c12 = arith.constant 12 : index
    %c0_105 = arith.constant 0 : index
    %205 = vector.load %arg25[%c0_104, %c12, %c0_105] : memref<2x17x32xf32, #tpu.memory_space<vmem>>, vector<2x1x32xf32>
    %206 = vector.shape_cast %205 : vector<2x1x32xf32> to vector<2x32xf32>
    %207 = vector.shape_cast %204 : vector<2x32xf32> to vector<2x1x32xf32>
    tpu.vector_store %arg25[%c0_104, %c12, %c0_105], %207 {strides = array<i32>} : memref<2x17x32xf32, #tpu.memory_space<vmem>>, vector<2x1x32xf32>,
    %208 = vector.extract_strided_slice %167 {offsets = [0, 672], sizes = [2, 32], strides = [1, 1]} : vector<2x768xf32> to vector<2x32xf32>
    %209 = vector.extract_strided_slice %167 {offsets = [0, 640], sizes = [2, 32], strides = [1, 1]} : vector<2x768xf32> to vector<2x32xf32>
    %210 = arith.addf %208, %209 : vector<2x32xf32>
    %c0_106 = arith.constant 0 : index
    %c14 = arith.constant 14 : index
    %c0_107 = arith.constant 0 : index
    %211 = vector.load %arg25[%c0_106, %c14, %c0_107] : memref<2x17x32xf32, #tpu.memory_space<vmem>>, vector<2x1x32xf32>
    %212 = vector.shape_cast %211 : vector<2x1x32xf32> to vector<2x32xf32>
    %213 = vector.shape_cast %210 : vector<2x32xf32> to vector<2x1x32xf32>
    tpu.vector_store %arg25[%c0_106, %c14, %c0_107], %213 {strides = array<i32>} : memref<2x17x32xf32, #tpu.memory_space<vmem>>, vector<2x1x32xf32>,
    %214 = vector.extract_strided_slice %167 {offsets = [0, 736], sizes = [2, 32], strides = [1, 1]} : vector<2x768xf32> to vector<2x32xf32>
    %c0_108 = arith.constant 0 : index
    %c16 = arith.constant 16 : index
    %c0_109 = arith.constant 0 : index
    %215 = vector.load %arg25[%c0_108, %c16, %c0_109] : memref<2x17x32xf32, #tpu.memory_space<vmem>>, vector<2x1x32xf32>
    %216 = vector.shape_cast %215 : vector<2x1x32xf32> to vector<2x32xf32>
    %217 = vector.shape_cast %214 : vector<2x32xf32> to vector<2x1x32xf32>
    tpu.vector_store %arg25[%c0_108, %c16, %c0_109], %217 {strides = array<i32>} : memref<2x17x32xf32, #tpu.memory_space<vmem>>, vector<2x1x32xf32>,
    %218 = vector.extract_strided_slice %167 {offsets = [0, 32], sizes = [2, 32], strides = [1, 1]} : vector<2x768xf32> to vector<2x32xf32>
    %c0_110 = arith.constant 0 : index
    %c1_111 = arith.constant 1 : index
    %c0_112 = arith.constant 0 : index
    %219 = vector.load %arg25[%c0_110, %c1_111, %c0_112] : memref<2x17x32xf32, #tpu.memory_space<vmem>>, vector<2x1x32xf32>
    %220 = vector.shape_cast %219 : vector<2x1x32xf32> to vector<2x32xf32>
    %221 = vector.shape_cast %218 : vector<2x32xf32> to vector<2x1x32xf32>
    tpu.vector_store %arg25[%c0_110, %c1_111, %c0_112], %221 {strides = array<i32>} : memref<2x17x32xf32, #tpu.memory_space<vmem>>, vector<2x1x32xf32>,
    %222 = vector.extract_strided_slice %167 {offsets = [0, 128], sizes = [2, 32], strides = [1, 1]} : vector<2x768xf32> to vector<2x32xf32>
    %c0_113 = arith.constant 0 : index
    %c3_114 = arith.constant 3 : index
    %c0_115 = arith.constant 0 : index
    %223 = vector.load %arg25[%c0_113, %c3_114, %c0_115] : memref<2x17x32xf32, #tpu.memory_space<vmem>>, vector<2x1x32xf32>
    %224 = vector.shape_cast %223 : vector<2x1x32xf32> to vector<2x32xf32>
    %225 = vector.shape_cast %222 : vector<2x32xf32> to vector<2x1x32xf32>
    tpu.vector_store %arg25[%c0_113, %c3_114, %c0_115], %225 {strides = array<i32>} : memref<2x17x32xf32, #tpu.memory_space<vmem>>, vector<2x1x32xf32>,
    %226 = vector.extract_strided_slice %167 {offsets = [0, 224], sizes = [2, 32], strides = [1, 1]} : vector<2x768xf32> to vector<2x32xf32>
    %c0_116 = arith.constant 0 : index
    %c5_117 = arith.constant 5 : index
    %c0_118 = arith.constant 0 : index
    %227 = vector.load %arg25[%c0_116, %c5_117, %c0_118] : memref<2x17x32xf32, #tpu.memory_space<vmem>>, vector<2x1x32xf32>
    %228 = vector.shape_cast %227 : vector<2x1x32xf32> to vector<2x32xf32>
    %229 = vector.shape_cast %226 : vector<2x32xf32> to vector<2x1x32xf32>
    tpu.vector_store %arg25[%c0_116, %c5_117, %c0_118], %229 {strides = array<i32>} : memref<2x17x32xf32, #tpu.memory_space<vmem>>, vector<2x1x32xf32>,
    %230 = vector.extract_strided_slice %167 {offsets = [0, 320], sizes = [2, 32], strides = [1, 1]} : vector<2x768xf32> to vector<2x32xf32>
    %c0_119 = arith.constant 0 : index
    %c7_120 = arith.constant 7 : index
    %c0_121 = arith.constant 0 : index
    %231 = vector.load %arg25[%c0_119, %c7_120, %c0_121] : memref<2x17x32xf32, #tpu.memory_space<vmem>>, vector<2x1x32xf32>
    %232 = vector.shape_cast %231 : vector<2x1x32xf32> to vector<2x32xf32>
    %233 = vector.shape_cast %230 : vector<2x32xf32> to vector<2x1x32xf32>
    tpu.vector_store %arg25[%c0_119, %c7_120, %c0_121], %233 {strides = array<i32>} : memref<2x17x32xf32, #tpu.memory_space<vmem>>, vector<2x1x32xf32>,
    %234 = vector.extract_strided_slice %167 {offsets = [0, 416], sizes = [2, 32], strides = [1, 1]} : vector<2x768xf32> to vector<2x32xf32>
    %c0_122 = arith.constant 0 : index
    %c9_123 = arith.constant 9 : index
    %c0_124 = arith.constant 0 : index
    %235 = vector.load %arg25[%c0_122, %c9_123, %c0_124] : memref<2x17x32xf32, #tpu.memory_space<vmem>>, vector<2x1x32xf32>
    %236 = vector.shape_cast %235 : vector<2x1x32xf32> to vector<2x32xf32>
    %237 = vector.shape_cast %234 : vector<2x32xf32> to vector<2x1x32xf32>
    tpu.vector_store %arg25[%c0_122, %c9_123, %c0_124], %237 {strides = array<i32>} : memref<2x17x32xf32, #tpu.memory_space<vmem>>, vector<2x1x32xf32>,
    %238 = vector.extract_strided_slice %167 {offsets = [0, 512], sizes = [2, 32], strides = [1, 1]} : vector<2x768xf32> to vector<2x32xf32>
    %c0_125 = arith.constant 0 : index
    %c11 = arith.constant 11 : index
    %c0_126 = arith.constant 0 : index
    %239 = vector.load %arg25[%c0_125, %c11, %c0_126] : memref<2x17x32xf32, #tpu.memory_space<vmem>>, vector<2x1x32xf32>
    %240 = vector.shape_cast %239 : vector<2x1x32xf32> to vector<2x32xf32>
    %241 = vector.shape_cast %238 : vector<2x32xf32> to vector<2x1x32xf32>
    tpu.vector_store %arg25[%c0_125, %c11, %c0_126], %241 {strides = array<i32>} : memref<2x17x32xf32, #tpu.memory_space<vmem>>, vector<2x1x32xf32>,
    %242 = vector.extract_strided_slice %167 {offsets = [0, 608], sizes = [2, 32], strides = [1, 1]} : vector<2x768xf32> to vector<2x32xf32>
    %c0_127 = arith.constant 0 : index
    %c13 = arith.constant 13 : index
    %c0_128 = arith.constant 0 : index
    %243 = vector.load %arg25[%c0_127, %c13, %c0_128] : memref<2x17x32xf32, #tpu.memory_space<vmem>>, vector<2x1x32xf32>
    %244 = vector.shape_cast %243 : vector<2x1x32xf32> to vector<2x32xf32>
    %245 = vector.shape_cast %242 : vector<2x32xf32> to vector<2x1x32xf32>
    tpu.vector_store %arg25[%c0_127, %c13, %c0_128], %245 {strides = array<i32>} : memref<2x17x32xf32, #tpu.memory_space<vmem>>, vector<2x1x32xf32>,
    %246 = vector.extract_strided_slice %167 {offsets = [0, 704], sizes = [2, 32], strides = [1, 1]} : vector<2x768xf32> to vector<2x32xf32>
    %c0_129 = arith.constant 0 : index
    %c15 = arith.constant 15 : index
    %c0_130 = arith.constant 0 : index
    %247 = vector.load %arg25[%c0_129, %c15, %c0_130] : memref<2x17x32xf32, #tpu.memory_space<vmem>>, vector<2x1x32xf32>
    %248 = vector.shape_cast %247 : vector<2x1x32xf32> to vector<2x32xf32>
    %249 = vector.shape_cast %246 : vector<2x32xf32> to vector<2x1x32xf32>
    tpu.vector_store %arg25[%c0_129, %c15, %c0_130], %249 {strides = array<i32>} : memref<2x17x32xf32, #tpu.memory_space<vmem>>, vector<2x1x32xf32>,
    %c0_131 = arith.constant 0 : index
    %c0_132 = arith.constant 0 : index
    %c0_133 = arith.constant 0 : index
    %250 = vector.load %arg25[%c0_131, %c0_132, %c0_133] : memref<2x17x32xf32, #tpu.memory_space<vmem>>, vector<2x17x32xf32>
    %c0_134 = arith.constant 0 : index
    %c0_135 = arith.constant 0 : index
    %251 = vector.load %arg17[%c0_134, %c0_135] : memref<1x32xf32, #tpu.memory_space<vmem>>, vector<1x32xf32>
    %252 = vector.shape_cast %251 : vector<1x32xf32> to vector<1x1x32xf32>
    %253 = vector.broadcast %252 : vector<1x1x32xf32> to vector<2x17x32xf32>
    %254 = arith.addf %250, %253 : vector<2x17x32xf32>
    %cst_136 = arith.constant 0.000000e+00 : f32
    %255 = vector.broadcast %cst_136 : f32 to vector<2x17x32xf32>
    %256 = arith.maximumf %254, %255 : vector<2x17x32xf32>
    %257 = vector.extract_strided_slice %256 {offsets = [0, 0, 0], sizes = [1, 17, 32], strides = [1, 1, 1]} : vector<2x17x32xf32> to vector<1x17x32xf32>
    %258 = vector.shape_cast %257 : vector<1x17x32xf32> to vector<17x32xf32>
    %c0_137 = arith.constant 0 : index
    %c0_138 = arith.constant 0 : index
    %259 = vector.load %arg18[%c0_137, %c0_138] : memref<32x4xf32, #tpu.memory_space<vmem>>, vector<32x4xf32>
    %cst_139 = arith.constant dense<0.000000e+00> : vector<17x4xf32>
    %260 = tpu.matmul %258, %259, %cst_139 {dimension_numbers = #tpu.dot_dimension_numbers<[1], [0], [0], [1], [0, 0, 1, 1], [], []>} : vector<17x32xf32>, vector<32x4xf32>, vector<17x4xf32> -> vector<17x4xf32>
    %c0_140 = arith.constant 0 : index
    %c0_141 = arith.constant 0 : index
    %261 = vector.load %arg19[%c0_140, %c0_141] : memref<1x4xf32, #tpu.memory_space<vmem>>, vector<1x4xf32>
    %262 = vector.broadcast %261 : vector<1x4xf32> to vector<17x4xf32>
    %263 = arith.addf %260, %262 : vector<17x4xf32>
    %c0_142 = arith.constant 0 : index
    %c0_143 = arith.constant 0 : index
    %c0_144 = arith.constant 0 : index
    %264 = vector.load %arg20[%c0_142, %c0_143, %c0_144] : memref<2x17x4xf32, #tpu.memory_space<vmem>>, vector<1x17x4xf32>
    %265 = vector.shape_cast %264 : vector<1x17x4xf32> to vector<17x4xf32>
    %266 = vector.shape_cast %263 : vector<17x4xf32> to vector<1x17x4xf32>
    tpu.vector_store %arg20[%c0_142, %c0_143, %c0_144], %266 {strides = array<i32>} : memref<2x17x4xf32, #tpu.memory_space<vmem>>, vector<1x17x4xf32>,
    %267 = vector.extract_strided_slice %256 {offsets = [1, 0, 0], sizes = [1, 17, 32], strides = [1, 1, 1]} : vector<2x17x32xf32> to vector<1x17x32xf32>
    %268 = vector.shape_cast %267 : vector<1x17x32xf32> to vector<17x32xf32>
    %c0_145 = arith.constant 0 : index
    %c0_146 = arith.constant 0 : index
    %269 = vector.load %arg18[%c0_145, %c0_146] : memref<32x4xf32, #tpu.memory_space<vmem>>, vector<32x4xf32>
    %cst_147 = arith.constant dense<0.000000e+00> : vector<17x4xf32>
    %270 = tpu.matmul %268, %269, %cst_147 {dimension_numbers = #tpu.dot_dimension_numbers<[1], [0], [0], [1], [0, 0, 1, 1], [], []>} : vector<17x32xf32>, vector<32x4xf32>, vector<17x4xf32> -> vector<17x4xf32>
    %c0_148 = arith.constant 0 : index
    %c0_149 = arith.constant 0 : index
    %271 = vector.load %arg19[%c0_148, %c0_149] : memref<1x4xf32, #tpu.memory_space<vmem>>, vector<1x4xf32>
    %272 = vector.broadcast %271 : vector<1x4xf32> to vector<17x4xf32>
    %273 = arith.addf %270, %272 : vector<17x4xf32>
    %c1_150 = arith.constant 1 : index
    %c0_151 = arith.constant 0 : index
    %c0_152 = arith.constant 0 : index
    %274 = vector.load %arg20[%c1_150, %c0_151, %c0_152] : memref<2x17x4xf32, #tpu.memory_space<vmem>>, vector<1x17x4xf32>
    %275 = vector.shape_cast %274 : vector<1x17x4xf32> to vector<17x4xf32>
    %276 = vector.shape_cast %273 : vector<17x4xf32> to vector<1x17x4xf32>
    tpu.vector_store %arg20[%c1_150, %c0_151, %c0_152], %276 {strides = array<i32>} : memref<2x17x4xf32, #tpu.memory_space<vmem>>, vector<1x17x4xf32>,
    return
  }
  func.func @transform_0(%arg0: i32) -> (i32, i32, i32) {
    %c0_i32 = arith.constant 0 : i32
    %c0_i32_0 = arith.constant 0 : i32
    %c0_i32_1 = arith.constant 0 : i32
    %c0_i32_2 = arith.constant 0 : i32
    return %c0_i32, %c0_i32_0, %c0_i32_1 : i32, i32, i32
  }
  func.func @transform_1(%arg0: i32) -> (i32, i32) {
    %c0_i32 = arith.constant 0 : i32
    %c0_i32_0 = arith.constant 0 : i32
    %c0_i32_1 = arith.constant 0 : i32
    return %c0_i32, %c0_i32_0 : i32, i32
  }
  func.func @transform_2(%arg0: i32) -> (i32, i32) {
    %c0_i32 = arith.constant 0 : i32
    %c0_i32_0 = arith.constant 0 : i32
    %c0_i32_1 = arith.constant 0 : i32
    return %c0_i32, %c0_i32_0 : i32, i32
  }
  func.func @transform_3(%arg0: i32) -> (i32, i32) {
    %c0_i32 = arith.constant 0 : i32
    %c0_i32_0 = arith.constant 0 : i32
    %c0_i32_1 = arith.constant 0 : i32
    return %c0_i32, %c0_i32_0 : i32, i32
  }
  func.func @transform_4(%arg0: i32) -> (i32, i32) {
    %c0_i32 = arith.constant 0 : i32
    %c0_i32_0 = arith.constant 0 : i32
    %c0_i32_1 = arith.constant 0 : i32
    return %c0_i32, %c0_i32_0 : i32, i32
  }
  func.func @transform_5(%arg0: i32) -> (i32, i32) {
    %c0_i32 = arith.constant 0 : i32
    %c0_i32_0 = arith.constant 0 : i32
    %c0_i32_1 = arith.constant 0 : i32
    return %c0_i32, %c0_i32_0 : i32, i32
  }
  func.func @transform_6(%arg0: i32) -> (i32, i32) {
    %c0_i32 = arith.constant 0 : i32
    %c0_i32_0 = arith.constant 0 : i32
    %c0_i32_1 = arith.constant 0 : i32
    return %c0_i32, %c0_i32_0 : i32, i32
  }
  func.func @transform_7(%arg0: i32) -> (i32, i32) {
    %c0_i32 = arith.constant 0 : i32
    %c0_i32_0 = arith.constant 0 : i32
    %c0_i32_1 = arith.constant 0 : i32
    return %c0_i32, %c0_i32_0 : i32, i32
  }
  func.func @transform_8(%arg0: i32) -> (i32, i32) {
    %c0_i32 = arith.constant 0 : i32
    %c0_i32_0 = arith.constant 0 : i32
    %c0_i32_1 = arith.constant 0 : i32
    return %c0_i32, %c0_i32_0 : i32, i32
  }
  func.func @transform_9(%arg0: i32) -> (i32, i32) {
    %c0_i32 = arith.constant 0 : i32
    %c0_i32_0 = arith.constant 0 : i32
    %c0_i32_1 = arith.constant 0 : i32
    return %c0_i32, %c0_i32_0 : i32, i32
  }
  func.func @transform_10(%arg0: i32) -> (i32, i32) {
    %c0_i32 = arith.constant 0 : i32
    %c0_i32_0 = arith.constant 0 : i32
    %c0_i32_1 = arith.constant 0 : i32
    return %c0_i32, %c0_i32_0 : i32, i32
  }
  func.func @transform_11(%arg0: i32) -> (i32, i32) {
    %c0_i32 = arith.constant 0 : i32
    %c0_i32_0 = arith.constant 0 : i32
    %c0_i32_1 = arith.constant 0 : i32
    return %c0_i32, %c0_i32_0 : i32, i32
  }
  func.func @transform_12(%arg0: i32) -> (i32, i32) {
    %c0_i32 = arith.constant 0 : i32
    %c0_i32_0 = arith.constant 0 : i32
    %c0_i32_1 = arith.constant 0 : i32
    return %c0_i32, %c0_i32_0 : i32, i32
  }
  func.func @transform_13(%arg0: i32) -> (i32, i32) {
    %c0_i32 = arith.constant 0 : i32
    %c0_i32_0 = arith.constant 0 : i32
    %c0_i32_1 = arith.constant 0 : i32
    return %c0_i32, %c0_i32_0 : i32, i32
  }
  func.func @transform_14(%arg0: i32) -> (i32, i32) {
    %c0_i32 = arith.constant 0 : i32
    %c0_i32_0 = arith.constant 0 : i32
    %c0_i32_1 = arith.constant 0 : i32
    return %c0_i32, %c0_i32_0 : i32, i32
  }
  func.func @transform_15(%arg0: i32) -> (i32, i32) {
    %c0_i32 = arith.constant 0 : i32
    %c0_i32_0 = arith.constant 0 : i32
    %c0_i32_1 = arith.constant 0 : i32
    return %c0_i32, %c0_i32_0 : i32, i32
  }
  func.func @transform_16(%arg0: i32) -> (i32, i32) {
    %c0_i32 = arith.constant 0 : i32
    %c0_i32_0 = arith.constant 0 : i32
    %c0_i32_1 = arith.constant 0 : i32
    return %c0_i32, %c0_i32_0 : i32, i32
  }
  func.func @transform_17(%arg0: i32) -> (i32, i32) {
    %c0_i32 = arith.constant 0 : i32
    %c0_i32_0 = arith.constant 0 : i32
    %c0_i32_1 = arith.constant 0 : i32
    return %c0_i32, %c0_i32_0 : i32, i32
  }
  func.func @transform_18(%arg0: i32) -> (i32, i32) {
    %c0_i32 = arith.constant 0 : i32
    %c0_i32_0 = arith.constant 0 : i32
    %c0_i32_1 = arith.constant 0 : i32
    return %c0_i32, %c0_i32_0 : i32, i32
  }
  func.func @transform_19(%arg0: i32) -> (i32, i32, i32) {
    %c0_i32 = arith.constant 0 : i32
    %c0_i32_0 = arith.constant 0 : i32
    %c0_i32_1 = arith.constant 0 : i32
    %c0_i32_2 = arith.constant 0 : i32
    return %c0_i32, %c0_i32_0, %c0_i32_1 : i32, i32, i32
  }
  func.func @transform_20(%arg0: i32) -> (i32, i32) {
    %c0_i32 = arith.constant 0 : i32
    %c0_i32_0 = arith.constant 0 : i32
    %c0_i32_1 = arith.constant 0 : i32
    return %c0_i32, %c0_i32_0 : i32, i32
  }
  func.func @transform_21(%arg0: i32) -> (i32, i32) {
    %c0_i32 = arith.constant 0 : i32
    %c0_i32_0 = arith.constant 0 : i32
    %c0_i32_1 = arith.constant 0 : i32
    return %c0_i32, %c0_i32_0 : i32, i32
  }
}

</mosaic_0001>

<llo_original>
// kernel: vae_forward.1
$region0: #{vae_forward.1}
  #allocation0 [shape = 'u32[]', space=smem, size = 0x4, offset = 0x4, fixed_abs, tag = 'smem constant byte address 0x4 - core index']
  #allocation1 [shape = 'u32[144,128]{1,0:T(1,128)}', space=vmem, size = 0x12000, scoped, tag = 'internal scratch']
  #allocation2 [shape = 'f32[2,18,4]{2,1,0:T(8,128)}', space=vmem, size = 0x6000, scoped, tag = 'scratch operand']
  #allocation3 [shape = 'f32[2,10,32]{2,1,0:T(8,128)}', space=vmem, size = 0x4000, scoped, tag = 'scratch operand']
  #allocation4 [shape = 'f32[2,17,32]{2,1,0:T(8,128)}', space=vmem, size = 0x6000, scoped, tag = 'scratch operand']
  %s0 = inlined_call_operand.vmem [shape: f32[2,16,4], index: 0, kind: input, shape index: {}]
  %s1 = inlined_call_operand.vmem [shape: f32[12,32], index: 1, kind: input, shape index: {}]
  %s2 = inlined_call_operand.hbm [shape: f32[1,32], index: 2, kind: input, shape index: {}]
  %s3 = inlined_call_operand.vmem [shape: f32[96,32], index: 3, kind: input, shape index: {}]
  %s4 = inlined_call_operand.hbm [shape: f32[1,32], index: 4, kind: input, shape index: {}]
  %s5 = inlined_call_operand.vmem [shape: f32[32,8], index: 5, kind: input, shape index: {}]
  %s6 = inlined_call_operand.hbm [shape: f32[1,8], index: 6, kind: input, shape index: {}]
  %s7 = inlined_call_operand.vmem [shape: f32[8,8], index: 7, kind: input, shape index: {}]
  %s8 = inlined_call_operand.hbm [shape: f32[1,8], index: 8, kind: input, shape index: {}]
  %s9 = inlined_call_operand.vmem [shape: f32[8,8], index: 9, kind: input, shape index: {}]
  %s10 = inlined_call_operand.hbm [shape: f32[1,8], index: 10, kind: input, shape index: {}]
  %s11 = inlined_call_operand.vmem [shape: f32[8,128], index: 11, kind: input, shape index: {}]
  %s12 = inlined_call_operand.hbm [shape: f32[1,128], index: 12, kind: input, shape index: {}]
  %s13 = inlined_call_operand.vmem [shape: f32[128,256], index: 13, kind: input, shape index: {}]
  %s14 = inlined_call_operand.hbm [shape: f32[1,256], index: 14, kind: input, shape index: {}]
  %s15 = inlined_call_operand.hbm [shape: f32[256,768], index: 15, kind: input, shape index: {}]
  %s16 = inlined_call_operand.hbm [shape: f32[1,32], index: 16, kind: input, shape index: {}]
  %s17 = inlined_call_operand.vmem [shape: f32[32,4], index: 17, kind: input, shape index: {}]
  %s18 = inlined_call_operand.hbm [shape: f32[1,4], index: 18, kind: input, shape index: {}]
  %s19 = inlined_call_operand.vmem [shape: f32[2,17,4], index: 19, kind: output, shape index: {0}]
  %s20 = inlined_call_operand.hbm [shape: f32[2,8], index: 20, kind: output, shape index: {1}]
  %s21 = inlined_call_operand.hbm [shape: f32[2,8], index: 21, kind: output, shape index: {2}]
  %22 = xla_tuple %s19, %s20, %s21
  %s23 = sld [smem:[#allocation0]]
  $region142: #{vae_forward.1} parent=0
    _
  %s25 = ssub.s32 1, %s23
  %s26 = scalar_select 0, %s25, %s23
  $region1: #{vae_forward.1} parent=0
    #allocation5 [shape = 'u8[512]{0}', space=vmem, size = 0x400, scoped, tag = 'input window, operand 2, single buffered']
    #allocation6 [shape = 's32[1]{0}', space=sflag, size = 0x4, scoped, tag = 'scoped memory for vae_forward.1']
    #allocation7 [shape = 's32[1]{0}', space=sflag, size = 0x4, scoped, tag = 'scoped memory for vae_forward.1']
    #allocation8 [shape = 'u8[512]{0}', space=vmem, size = 0x400, scoped, tag = 'input window, operand 4, single buffered']
    #allocation9 [shape = 's32[1]{0}', space=sflag, size = 0x4, scoped, tag = 'scoped memory for vae_forward.1']
    #allocation10 [shape = 'u8[512]{0}', space=vmem, size = 0x400, scoped, tag = 'input window, operand 6, single buffered']
    #allocation11 [shape = 'u8[512]{0}', space=vmem, size = 0x400, scoped, tag = 'input window, operand 8, single buffered']
    #allocation12 [shape = 's32[1]{0}', space=sflag, size = 0x4, scoped, tag = 'scoped memory for vae_forward.1']
    #allocation13 [shape = 'u8[512]{0}', space=vmem, size = 0x400, scoped, tag = 'input window, operand 10, single buffered']
    #allocation14 [shape = 'u8[512]{0}', space=vmem, size = 0x400, scoped, tag = 'input window, operand 12, single buffered']
    #allocation15 [shape = 's32[1]{0}', space=sflag, size = 0x4, scoped, tag = 'scoped memory for vae_forward.1']
    #allocation16 [shape = 'u8[1024]{0}', space=vmem, size = 0x400, scoped, tag = 'input window, operand 14, single buffered']
    #allocation17 [shape = 'u8[786432]{0}', space=vmem, size = 0xc0000, scoped, tag = 'input window, operand 15, single buffered']
    #allocation18 [shape = 's32[1]{0}', space=sflag, size = 0x4, scoped, tag = 'scoped memory for vae_forward.1']
    #allocation19 [shape = 'u8[512]{0}', space=vmem, size = 0x400, scoped, tag = 'input window, operand 16, single buffered']
    #allocation20 [shape = 'u8[512]{0}', space=vmem, size = 0x400, scoped, tag = 'input window, operand 18, single buffered']
    #allocation21 [shape = 's32[1]{0}', space=sflag, size = 0x4, scoped, tag = 'scoped memory for vae_forward.1']
    #allocation22 [shape = 'u8[1024]{0}', space=vmem, size = 0x400, scoped, tag = 'output window, operand 1, single buffered']
    #allocation23 [shape = 'u8[1024]{0}', space=vmem, size = 0x400, scoped, tag = 'output window, operand 2, single buffered']
    #allocation24 [shape = 's32[1]{0}', space=sflag, size = 0x4, scoped, tag = 'scoped memory for vae_forward.1']
    %27 = vsyncpa [#allocation6], 0
    %28 = vsyncpa [#allocation9], 0
    %29 = vsyncpa [#allocation12], 0
    %30 = vsyncpa [#allocation15], 0
    %31 = vsyncpa [#allocation18], 0
    %32 = vsyncpa [#allocation21], 0
    %33 = vsyncpa [#allocation7], 0
    %34 = vsyncpa [#allocation24], 0
    // Predicated region
    $region2: #{vae_forward.1} parent=1 // pred_check
      _
    $region3: #{vae_forward.1} parent=1 // pred_check_branch
      %36 = sbr.rel (0) target = $region5
    $region4: #{vae_forward.1} parent=1 // pred_region
      _
    $region5: #{vae_forward.1} parent=1 // pred_fallthru
      _
    // Predicated region
    $region6: #{vae_forward.1} parent=1 // pred_check
      _
    $region7: #{vae_forward.1} parent=1 // pred_check_branch
      %38 = sbr.rel (0) target = $region9
    $region8: #{vae_forward.1} parent=1 // pred_region
      _
    $region9: #{vae_forward.1} parent=1 // pred_fallthru
      _
    // Predicated region
    $region10: #{vae_forward.1} parent=1 // pred_check
      _
    $region11: #{vae_forward.1} parent=1 // pred_check_branch
      %40 = sbr.rel (0) target = $region13
    $region12: #{vae_forward.1} parent=1 // pred_region
      %s42 = ssub.s32 16, 16
      %43 = vsyncadd [#allocation6], %s42
      %s45 = sshll.u32 [#allocation5], 4
      %s46 = int_to_ptr.vmem [resolvable:$true] %s45
      %48 = dma.hbm_to_vmem [thread:$0]  %s2, 16, %s46, [#allocation6]
    $region13: #{vae_forward.1} parent=1 // pred_fallthru
      _
    // Predicated region
    $region14: #{vae_forward.1} parent=1 // pred_check
      _
    $region15: #{vae_forward.1} parent=1 // pred_check_branch
      %50 = sbr.rel (0) target = $region17
    $region16: #{vae_forward.1} parent=1 // pred_region
      _
    $region17: #{vae_forward.1} parent=1 // pred_fallthru
      _
    // Predicated region
    $region18: #{vae_forward.1} parent=1 // pred_check
      _
    $region19: #{vae_forward.1} parent=1 // pred_check_branch
      %52 = sbr.rel (0) target = $region21
    $region20: #{vae_forward.1} parent=1 // pred_region
      %s54 = ssub.s32 16, 16
      %55 = vsyncadd [#allocation9], %s54
      %s57 = sshll.u32 [#allocation8], 4
      %s58 = int_to_ptr.vmem [resolvable:$true] %s57
      %60 = dma.hbm_to_vmem [thread:$0]  %s4, 16, %s58, [#allocation9]
    $region21: #{vae_forward.1} parent=1 // pred_fallthru
      _
    // Predicated region
    $region22: #{vae_forward.1} parent=1 // pred_check
      _
    $region23: #{vae_forward.1} parent=1 // pred_check_branch
      %62 = sbr.rel (0) target = $region25
    $region24: #{vae_forward.1} parent=1 // pred_region
      _
    $region25: #{vae_forward.1} parent=1 // pred_fallthru
      _
    // Predicated region
    $region26: #{vae_forward.1} parent=1 // pred_check
      _
    $region27: #{vae_forward.1} parent=1 // pred_check_branch
      %64 = sbr.rel (0) target = $region29
    $region28: #{vae_forward.1} parent=1 // pred_region
      %s66 = ssub.s32 16, 16
      %67 = vsyncadd [#allocation9], %s66
      %s69 = sshll.u32 [#allocation10], 4
      %s70 = int_to_ptr.vmem [resolvable:$true] %s69
      %72 = dma.hbm_to_vmem [thread:$0]  %s6, 16, %s70, [#allocation9]
    $region29: #{vae_forward.1} parent=1 // pred_fallthru
      _
    // Predicated region
    $region30: #{vae_forward.1} parent=1 // pred_check
      _
    $region31: #{vae_forward.1} parent=1 // pred_check_branch
      %74 = sbr.rel (0) target = $region33
    $region32: #{vae_forward.1} parent=1 // pred_region
      _
    $region33: #{vae_forward.1} parent=1 // pred_fallthru
      _
    // Predicated region
    $region34: #{vae_forward.1} parent=1 // pred_check
      _
    $region35: #{vae_forward.1} parent=1 // pred_check_branch
      %76 = sbr.rel (0) target = $region37
    $region36: #{vae_forward.1} parent=1 // pred_region
      %s78 = ssub.s32 16, 16
      %79 = vsyncadd [#allocation12], %s78
      %s81 = sshll.u32 [#allocation11], 4
      %s82 = int_to_ptr.vmem [resolvable:$true] %s81
      %84 = dma.hbm_to_vmem [thread:$0]  %s8, 16, %s82, [#allocation12]
    $region37: #{vae_forward.1} parent=1 // pred_fallthru
      _
    // Predicated region
    $region38: #{vae_forward.1} parent=1 // pred_check
      _
    $region39: #{vae_forward.1} parent=1 // pred_check_branch
      %86 = sbr.rel (0) target = $region41
    $region40: #{vae_forward.1} parent=1 // pred_region
      _
    $region41: #{vae_forward.1} parent=1 // pred_fallthru
      _
    // Predicated region
    $region42: #{vae_forward.1} parent=1 // pred_check
      _
    $region43: #{vae_forward.1} parent=1 // pred_check_branch
      %88 = sbr.rel (0) target = $region45
    $region44: #{vae_forward.1} parent=1 // pred_region
      %s90 = ssub.s32 16, 16
      %91 = vsyncadd [#allocation12], %s90
      %s93 = sshll.u32 [#allocation13], 4
      %s94 = int_to_ptr.vmem [resolvable:$true] %s93
      %96 = dma.hbm_to_vmem [thread:$0]  %s10, 16, %s94, [#allocation12]
    $region45: #{vae_forward.1} parent=1 // pred_fallthru
      _
    // Predicated region
    $region46: #{vae_forward.1} parent=1 // pred_check
      _
    $region47: #{vae_forward.1} parent=1 // pred_check_branch
      %98 = sbr.rel (0) target = $region49
    $region48: #{vae_forward.1} parent=1 // pred_region
      _
    $region49: #{vae_forward.1} parent=1 // pred_fallthru
      _
    // Predicated region
    $region50: #{vae_forward.1} parent=1 // pred_check
      _
    $region51: #{vae_forward.1} parent=1 // pred_check_branch
      %100 = sbr.rel (0) target = $region53
    $region52: #{vae_forward.1} parent=1 // pred_region
      %s102 = ssub.s32 16, 16
      %103 = vsyncadd [#allocation15], %s102
      %s105 = sshll.u32 [#allocation14], 4
      %s106 = int_to_ptr.vmem [resolvable:$true] %s105
      %108 = dma.hbm_to_vmem [thread:$0]  %s12, 16, %s106, [#allocation15]
    $region53: #{vae_forward.1} parent=1 // pred_fallthru
      _
    // Predicated region
    $region54: #{vae_forward.1} parent=1 // pred_check
      _
    $region55: #{vae_forward.1} parent=1 // pred_check_branch
      %110 = sbr.rel (0) target = $region57
    $region56: #{vae_forward.1} parent=1 // pred_region
      _
    $region57: #{vae_forward.1} parent=1 // pred_fallthru
      _
    // Predicated region
    $region58: #{vae_forward.1} parent=1 // pred_check
      _
    $region59: #{vae_forward.1} parent=1 // pred_check_branch
      %112 = sbr.rel (0) target = $region61
    $region60: #{vae_forward.1} parent=1 // pred_region
      %s114 = ssub.s32 32, 32
      %115 = vsyncadd [#allocation15], %s114
      %s117 = sshll.u32 [#allocation16], 4
      %s118 = int_to_ptr.vmem [resolvable:$true] %s117
      %120 = dma.hbm_to_vmem [thread:$0]  %s14, 32, %s118, [#allocation15]
    $region61: #{vae_forward.1} parent=1 // pred_fallthru
      _
    // Predicated region
    $region62: #{vae_forward.1} parent=1 // pred_check
      _
    $region63: #{vae_forward.1} parent=1 // pred_check_branch
      %122 = sbr.rel (0) target = $region65
    $region64: #{vae_forward.1} parent=1 // pred_region
      %s124 = ssub.s32 24576, 24576
      %125 = vsyncadd [#allocation18], %s124
      %s126 = sshll.u32 [#allocation17], 4
      %s127 = int_to_ptr.vmem [resolvable:$true] %s126
      %132 = dma.hbm_to_vmem [thread:$0]  %s15, 24576, %s127, [#allocation18], 768, 768, 48
    $region65: #{vae_forward.1} parent=1 // pred_fallthru
      _
    // Predicated region
    $region66: #{vae_forward.1} parent=1 // pred_check
      _
    $region67: #{vae_forward.1} parent=1 // pred_check_branch
      %134 = sbr.rel (0) target = $region69
    $region68: #{vae_forward.1} parent=1 // pred_region
      %s136 = ssub.s32 16, 16
      %137 = vsyncadd [#allocation18], %s136
      %s139 = sshll.u32 [#allocation19], 4
      %s140 = int_to_ptr.vmem [resolvable:$true] %s139
      %142 = dma.hbm_to_vmem [thread:$0]  %s16, 16, %s140, [#allocation18]
    $region69: #{vae_forward.1} parent=1 // pred_fallthru
      _
    // Predicated region
    $region70: #{vae_forward.1} parent=1 // pred_check
      _
    $region71: #{vae_forward.1} parent=1 // pred_check_branch
      %144 = sbr.rel (0) target = $region73
    $region72: #{vae_forward.1} parent=1 // pred_region
      _
    $region73: #{vae_forward.1} parent=1 // pred_fallthru
      _
    // Predicated region
    $region74: #{vae_forward.1} parent=1 // pred_check
      _
    $region75: #{vae_forward.1} parent=1 // pred_check_branch
      %146 = sbr.rel (0) target = $region77
    $region76: #{vae_forward.1} parent=1 // pred_region
      %s148 = ssub.s32 16, 16
      %149 = vsyncadd [#allocation21], %s148
      %s151 = sshll.u32 [#allocation20], 4
      %s152 = int_to_ptr.vmem [resolvable:$true] %s151
      %154 = dma.hbm_to_vmem [thread:$0]  %s18, 16, %s152, [#allocation21]
    $region77: #{vae_forward.1} parent=1 // pred_fallthru
      _
    // Predicated region
    $region78: #{vae_forward.1} parent=1 // pred_check
      _
    $region79: #{vae_forward.1} parent=1 // pred_check_branch
      %156 = sbr.rel (0) target = $region81
    $region80: #{vae_forward.1} parent=1 // pred_region
      %157 = dma.done [#allocation6], 16
    $region81: #{vae_forward.1} parent=1 // pred_fallthru
      _
    // Predicated region
    $region82: #{vae_forward.1} parent=1 // pred_check
      _
    $region83: #{vae_forward.1} parent=1 // pred_check_branch
      %159 = sbr.rel (0) target = $region85
    $region84: #{vae_forward.1} parent=1 // pred_region
      %160 = dma.done [#allocation9], 16
    $region85: #{vae_forward.1} parent=1 // pred_fallthru
      _
    // Predicated region
    $region86: #{vae_forward.1} parent=1 // pred_check
      _
    $region87: #{vae_forward.1} parent=1 // pred_check_branch
      %162 = sbr.rel (0) target = $region89
    $region88: #{vae_forward.1} parent=1 // pred_region
      %163 = dma.done [#allocation9], 16
    $region89: #{vae_forward.1} parent=1 // pred_fallthru
      _
    // Predicated region
    $region90: #{vae_forward.1} parent=1 // pred_check
      _
    $region91: #{vae_forward.1} parent=1 // pred_check_branch
      %165 = sbr.rel (0) target = $region93
    $region92: #{vae_forward.1} parent=1 // pred_region
      %166 = dma.done [#allocation12], 16
    $region93: #{vae_forward.1} parent=1 // pred_fallthru
      _
    // Predicated region
    $region94: #{vae_forward.1} parent=1 // pred_check
      _
    $region95: #{vae_forward.1} parent=1 // pred_check_branch
      %168 = sbr.rel (0) target = $region97
    $region96: #{vae_forward.1} parent=1 // pred_region
      %169 = dma.done [#allocation12], 16
    $region97: #{vae_forward.1} parent=1 // pred_fallthru
      _
    // Predicated region
    $region98: #{vae_forward.1} parent=1 // pred_check
      _
    $region99: #{vae_forward.1} parent=1 // pred_check_branch
      %171 = sbr.rel (0) target = $region101
    $region100: #{vae_forward.1} parent=1 // pred_region
      %172 = dma.done [#allocation15], 16
    $region101: #{vae_forward.1} parent=1 // pred_fallthru
      _
    // Predicated region
    $region102: #{vae_forward.1} parent=1 // pred_check
      _
    $region103: #{vae_forward.1} parent=1 // pred_check_branch
      %174 = sbr.rel (0) target = $region105
    $region104: #{vae_forward.1} parent=1 // pred_region
      %175 = dma.done [#allocation15], 32
    $region105: #{vae_forward.1} parent=1 // pred_fallthru
      _
    // Predicated region
    $region106: #{vae_forward.1} parent=1 // pred_check
      _
    $region107: #{vae_forward.1} parent=1 // pred_check_branch
      %177 = sbr.rel (0) target = $region109
    $region108: #{vae_forward.1} parent=1 // pred_region
      %178 = dma.done [#allocation18], 24576
    $region109: #{vae_forward.1} parent=1 // pred_fallthru
      _
    // Predicated region
    $region110: #{vae_forward.1} parent=1 // pred_check
      _
    $region111: #{vae_forward.1} parent=1 // pred_check_branch
      %180 = sbr.rel (0) target = $region113
    $region112: #{vae_forward.1} parent=1 // pred_region
      %181 = dma.done [#allocation18], 16
    $region113: #{vae_forward.1} parent=1 // pred_fallthru
      _
    // Predicated region
    $region114: #{vae_forward.1} parent=1 // pred_check
      _
    $region115: #{vae_forward.1} parent=1 // pred_check_branch
      %183 = sbr.rel (0) target = $region117
    $region116: #{vae_forward.1} parent=1 // pred_region
      %184 = dma.done [#allocation21], 16
    $region117: #{vae_forward.1} parent=1 // pred_fallthru
      _
    %vm185 = vcmask 24576
    %186 = vst.msk [vmem:[#allocation2] sm:$0x1] %vm185, 0.0
    %187 = vst.msk [vmem:[#allocation2 + $0x18] sm:$0x1] %vm185, 0.0
    %188 = vst.msk [vmem:[#allocation2 + $0x11] sm:$0x1] %vm185, 0.0
    %189 = vst.msk [vmem:[#allocation2 + $0x29] sm:$0x1] %vm185, 0.0
    %v190 = vld [vmem:[%s0] sm:$0xff]
    %v191 = vld [vmem:[%s0 + $0x8] sm:$0xff]
    %v192 = vld [vmem:[%s0 + $0x10] sm:$0xff]
    %v193 = vld [vmem:[%s0 + $0x18] sm:$0xff]
    %vm194 = vcmask 31744
    %195 = vst.msk [vmem:[#allocation2 + $0x1] sm:$0xff] %vm194, %v190
    %196 = vst.msk [vmem:[#allocation2 + $0x9] sm:$0xff] %vm194, %v191
    %197 = vst.msk [vmem:[#allocation2 + $0x19] sm:$0xff] %vm194, %v192
    %198 = vst.msk [vmem:[#allocation2 + $0x21] sm:$0xff] %vm194, %v193
    %v199 = vld [vmem:[#allocation2] sm:$0xff]
    %v200 = vld [vmem:[#allocation2 + $0x8] sm:$0xff]
    %v201 = vld [vmem:[#allocation2 + $0x10] sm:$0x3]
    %v202 = vld [vmem:[#allocation2 + $0x18] sm:$0xff]
    %v203 = vld [vmem:[#allocation2 + $0x20] sm:$0xff]
    %v204 = vld [vmem:[#allocation2 + $0x28] sm:$0x3]
    %vm211 = vcmask 1046528
    %v212 = vrot.slane %v199, 1
    %v213 = vrot.slane %v200, 1
    %v214 = vsel %vm211, %v212, %v213
    %v215 = vrot.slane %v201, 1
    %v216 = vsel %vm211, %v213, %v215
    %v217 = vrot.slane %v202, 1
    %v218 = vrot.slane %v203, 1
    %v219 = vsel %vm211, %v217, %v218
    %v220 = vrot.slane %v204, 1
    %v221 = vsel %vm211, %v218, %v220
    %222 = vrot.lane.b32.xlu0 %v214, 4
    %v223 = vpop.permute.xlu0 %222
    %224 = vrot.lane.b32.xlu0 %v216, 4
    %v225 = vpop.permute.xlu0 %224
    %226 = vrot.lane.b32.xlu0 %v219, 4
    %v227 = vpop.permute.xlu0 %226
    %228 = vrot.lane.b32.xlu0 %v221, 4
    %v229 = vpop.permute.xlu0 %228
    %vm234 = vcmask 1045504
    %v235 = vrot.slane %v199, 2
    %v236 = vrot.slane %v200, 2
    %v237 = vsel %vm234, %v235, %v236
    %v238 = vrot.slane %v201, 2
    %v239 = vsel %vm234, %v236, %v238
    %v240 = vrot.slane %v202, 2
    %v241 = vrot.slane %v203, 2
    %v242 = vsel %vm234, %v240, %v241
    %v243 = vrot.slane %v204, 2
    %v244 = vsel %vm234, %v241, %v243
    %245 = vrot.lane.b32.xlu0 %v237, 8
    %v246 = vpop.permute.xlu0 %245
    %247 = vrot.lane.b32.xlu0 %v239, 8
    %v248 = vpop.permute.xlu0 %247
    %249 = vrot.lane.b32.xlu0 %v242, 8
    %v250 = vpop.permute.xlu0 %249
    %251 = vrot.lane.b32.xlu0 %v244, 8
    %v252 = vpop.permute.xlu0 %251
    %v257 = vsel %vm194, %v199, %v223
    %v258 = vsel %vm194, %v200, %v225
    %v259 = vsel %vm194, %v202, %v227
    %v260 = vsel %vm194, %v203, %v229
    %vm261 = vcmask 64512
    %v262 = vsel %vm261, %v257, %v246
    %v263 = vsel %vm261, %v258, %v248
    %v264 = vsel %vm261, %v259, %v250
    %v265 = vsel %vm261, %v260, %v252
    %v266 = vld [vmem:[%s1] sm:$0xff]
    %v267 = vld [vmem:[%s1 + $0x8] sm:$0xf]
    %v268 = vld [vmem:[#allocation5] sm:$0x1]
    %v270 = vlaneseq
    %v271 = vshrl.u32 %v270, 7
    %v272 = vsub.s32 0, %v271
    %v273 = vrot.slane %v268, %v272
    %vm275 = vcmask 97280
    %v277 = vsel %vm275, %v262, 0
    %v280 = vsel %vm275, %v263, 0
    %v283 = vsel %vm275, %v264, 0
    %v286 = vsel %vm275, %v265, 0
    %vm288 = vcmask 1043456
    %v290 = vsel %vm288, %v267, 0
    %292 = vmatprep.subr.mxu0 0.0
    %293 = vmatpush1.msra.mxu0 %v266
    %294 = vmatprep.subr.mxu0 0.0
    %295 = vmatpush1.msra.mxu0 %v290
    %296 = vmatprep.subr.mxu0 0.0
    %297 = vmatpush1.msra.mxu0 0.0
    %298 = vmatprep.subr.mxu0 0.0
    %299 = vmatpush1.msra.mxu0 0.0
    %300 = vmatprep.subr.mxu0 0.0
    %301 = vmatpush1.msra.mxu0 0.0
    %302 = vmatprep.subr.mxu0 0.0
    %303 = vmatpush1.msra.mxu0 0.0
    %304 = vmatprep.subr.mxu0 0.0
    %305 = vmatpush1.msra.mxu0 0.0
    %306 = vmatprep.subr.mxu0 0.0
    %307 = vmatpush1.msra.mxu0 0.0
    %308 = vmatprep.subr.mxu0 0.0
    %309 = vmatpush1.msra.mxu0 0.0
    %310 = vmatprep.subr.mxu0 0.0
    %311 = vmatpush1.msra.mxu0 0.0
    %312 = vmatprep.subr.mxu0 0.0
    %313 = vmatpush1.msra.mxu0 0.0
    %314 = vmatprep.subr.mxu0 0.0
    %315 = vmatpush1.msra.mxu0 0.0
    %316 = vmatprep.subr.mxu0 0.0
    %317 = vmatpush1.msra.mxu0 0.0
    %318 = vmatprep.subr.mxu0 0.0
    %319 = vmatpush1.msra.mxu0 0.0
    %320 = vmatprep.subr.mxu0 0.0
    %321 = vmatpush1.msra.mxu0 0.0
    %322 = vmatprep.subr.mxu0 0.0
    %323 = vmatpush1.msra.mxu0 0.0
    %324 = vmatprep.subr.mxu0 0.0
    %325 = vmatpush1.msra.mxu0 0.0
    %326 = vmatprep.subr.mxu0 0.0
    %327 = vmatpush1.msra.mxu0 0.0
    %328 = vmatprep.subr.mxu0 0.0
    %329 = vmatpush1.msra.mxu0 0.0
    %330 = vmatprep.subr.mxu0 0.0
    %331 = vmatpush1.msra.mxu0 0.0
    %332 = vmatprep.subr.mxu0 0.0
    %333 = vmatpush1.msra.mxu0 0.0
    %334 = vmatprep.subr.mxu0 0.0
    %335 = vmatpush1.msra.mxu0 0.0
    %336 = vmatprep.subr.mxu0 0.0
    %337 = vmatpush1.msra.mxu0 0.0
    %338 = vmatprep.subr.mxu0 0.0
    %339 = vmatpush1.msra.mxu0 0.0
    %340 = vmatprep.subr.mxu0 0.0
    %341 = vmatpush1.msra.mxu0 0.0
    %342 = vmatprep.subr.mxu0 0.0
    %343 = vmatpush1.msra.mxu0 0.0
    %344 = vmatprep.subr.mxu0 0.0
    %345 = vmatpush1.msra.mxu0 0.0
    %346 = vmatprep.subr.mxu0 0.0
    %347 = vmatpush1.msra.mxu0 0.0
    %348 = vmatprep.subr.mxu0 0.0
    %349 = vmatpush1.msra.mxu0 0.0
    %350 = vmatprep.subr.mxu0 0.0
    %351 = vmatpush1.msra.mxu0 0.0
    %352 = vmatprep.subr.mxu0 0.0
    %353 = vmatpush1.msra.mxu0 0.0
    %354 = vmatprep.subr.mxu0 0.0
    %355 = vmatpush1.msra.mxu0 0.0
    %356 = vmatprep.mubr.f32.mxu0 0.0
    %357 = vmatmul.mubr.f32.gmra.mrb[0].mxu0 %v277
    %v358 = vpop.f32.mrb[0].mxu0
    %v359 = vadd.f32 %v273, %v358
    %v360 = vpop.f32.mrb[0].mxu0
    %361 = vmatprep.mubr.f32.mxu0 0.0
    %362 = vmatmul.mubr.f32.gmra.mrb[0].mxu0 %v280
    %v363 = vpop.f32.mrb[0].mxu0
    %v364 = vadd.f32 %v273, %v363
    %v365 = vpop.f32.mrb[0].mxu0
    %366 = vmatprep.mubr.f32.mxu0 0.0
    %367 = vmatmul.mubr.f32.gmra.mrb[0].mxu0 %v283
    %v368 = vpop.f32.mrb[0].mxu0
    %v369 = vadd.f32 %v273, %v368
    %v370 = vpop.f32.mrb[0].mxu0
    %371 = vmatprep.mubr.f32.mxu0 0.0
    %372 = vmatmul.mubr.f32.gmra.mrb[0].mxu0 %v286
    %v373 = vpop.f32.mrb[0].mxu0
    %v374 = vadd.f32 %v273, %v373
    %v375 = vpop.f32.mrb[0].mxu0
    %376 = vdwg.mxu0
    %v377 = vmax.f32 %v359, 0.0
    %v378 = vmax.f32 %v364, 0.0
    %v379 = vmax.f32 %v369, 0.0
    %v380 = vmax.f32 %v374, 0.0
    %vm381 = vcmask 253952
    %382 = vst.msk [vmem:[#allocation3] sm:$0x1] %vm381, 0.0
    %383 = vst.msk [vmem:[#allocation3 + $0x10] sm:$0x1] %vm381, 0.0
    %384 = vst.msk [vmem:[#allocation3 + $0x9] sm:$0x1] %vm381, 0.0
    %385 = vst.msk [vmem:[#allocation3 + $0x19] sm:$0x1] %vm381, 0.0
    %v388 = vrot.slane %v377, 1
    %v389 = vrot.slane %v379, 1
    %v392 = vmax.f32 %v377, %v388
    %v393 = vmax.f32 %v379, %v389
    %394 = vst.msk [vmem:[#allocation3 + $0x1] sm:$0x1] %vm381, %v392
    %395 = vst.msk [vmem:[#allocation3 + $0x11] sm:$0x1] %vm381, %v393
    %vm396 = vcmask 256002
    %397 = vst.msk [vmem:[#allocation3] sm:$0x4] %vm396, %v392
    %398 = vst.msk [vmem:[#allocation3 + $0x10] sm:$0x4] %vm396, %v393
    %vm399 = vcmask 258052
    %400 = vst.msk [vmem:[#allocation3 - $0x1] sm:$0x10] %vm399, %v392
    %401 = vst.msk [vmem:[#allocation3 + $0xf] sm:$0x10] %vm399, %v393
    %vm402 = vcmask 260102
    %403 = vst.msk [vmem:[#allocation3 - $0x2] sm:$0x40] %vm402, %v392
    %404 = vst.msk [vmem:[#allocation3 + $0xe] sm:$0x40] %vm402, %v393
    %v407 = vrot.slane %v378, 1
    %v408 = vrot.slane %v380, 1
    %v411 = vmax.f32 %v378, %v407
    %v412 = vmax.f32 %v380, %v408
    %413 = vst.msk [vmem:[#allocation3 + $0x5] sm:$0x1] %vm381, %v411
    %414 = vst.msk [vmem:[#allocation3 + $0x15] sm:$0x1] %vm381, %v412
    %415 = vst.msk [vmem:[#allocation3 + $0x4] sm:$0x4] %vm396, %v411
    %416 = vst.msk [vmem:[#allocation3 + $0x14] sm:$0x4] %vm396, %v412
    %417 = vst.msk [vmem:[#allocation3 + $0x3] sm:$0x10] %vm399, %v411
    %418 = vst.msk [vmem:[#allocation3 + $0x13] sm:$0x10] %vm399, %v412
    %419 = vst.msk [vmem:[#allocation3 + $0x2] sm:$0x40] %vm402, %v411
    %420 = vst.msk [vmem:[#allocation3 + $0x12] sm:$0x40] %vm402, %v412
    %v421 = vld [vmem:[#allocation3] sm:$0xff]
    %v422 = vld [vmem:[#allocation3 + $0x8] sm:$0x3]
    %v423 = vld [vmem:[#allocation3 + $0x10] sm:$0xff]
    %v424 = vld [vmem:[#allocation3 + $0x18] sm:$0x3]
    %v429 = vrot.slane %v421, 1
    %v430 = vrot.slane %v422, 1
    %v431 = vsel %vm211, %v429, %v430
    %v432 = vrot.slane %v423, 1
    %v433 = vrot.slane %v424, 1
    %v434 = vsel %vm211, %v432, %v433
    %435 = vrot.lane.b32.xlu0 %v431, 32
    %v436 = vpop.permute.xlu0 %435
    %437 = vrot.lane.b32.xlu0 %v434, 32
    %v438 = vpop.permute.xlu0 %437
    %v441 = vrot.slane %v421, 2
    %v442 = vrot.slane %v422, 2
    %v443 = vsel %vm234, %v441, %v442
    %v444 = vrot.slane %v423, 2
    %v445 = vrot.slane %v424, 2
    %v446 = vsel %vm234, %v444, %v445
    %447 = vrot.lane.b32.xlu0 %v443, 64
    %v448 = vpop.permute.xlu0 %447
    %449 = vrot.lane.b32.xlu0 %v446, 64
    %v450 = vpop.permute.xlu0 %449
    %vm453 = vcmask 261120
    %v454 = vsel %vm453, %v421, %v436
    %v455 = vsel %vm453, %v423, %v438
    %vm456 = vcmask 523264
    %v457 = vsel %vm456, %v454, %v448
    %v458 = vsel %vm456, %v455, %v450
    %v459 = vld [vmem:[%s3] sm:$0xff]
    %v460 = vld [vmem:[%s3 + $0x8] sm:$0xff]
    %v461 = vld [vmem:[%s3 + $0x10] sm:$0xff]
    %v462 = vld [vmem:[%s3 + $0x18] sm:$0xff]
    %v463 = vld [vmem:[%s3 + $0x20] sm:$0xff]
    %v464 = vld [vmem:[%s3 + $0x28] sm:$0xff]
    %v465 = vld [vmem:[%s3 + $0x30] sm:$0xff]
    %v466 = vld [vmem:[%s3 + $0x38] sm:$0xff]
    %v467 = vld [vmem:[%s3 + $0x40] sm:$0xff]
    %v468 = vld [vmem:[%s3 + $0x48] sm:$0xff]
    %v469 = vld [vmem:[%s3 + $0x50] sm:$0xff]
    %v470 = vld [vmem:[%s3 + $0x58] sm:$0xff]
    %v471 = vld [vmem:[#allocation8] sm:$0x1]
    %v473 = vlaneseq
    %v474 = vshrl.u32 %v473, 7
    %v475 = vsub.s32 0, %v474
    %v476 = vrot.slane %v471, %v475
    %vm478 = vcmask 785408
    %v480 = vsel %vm478, %v457, 0
    %v483 = vsel %vm478, %v458, 0
    %485 = vmatprep.subr.mxu0 0.0
    %486 = vmatpush1.msra.mxu0 %v459
    %487 = vmatprep.subr.mxu0 0.0
    %488 = vmatpush1.msra.mxu0 %v460
    %489 = vmatprep.subr.mxu0 0.0
    %490 = vmatpush1.msra.mxu0 %v461
    %491 = vmatprep.subr.mxu0 0.0
    %492 = vmatpush1.msra.mxu0 %v462
    %493 = vmatprep.subr.mxu0 0.0
    %494 = vmatpush1.msra.mxu0 %v463
    %495 = vmatprep.subr.mxu0 0.0
    %496 = vmatpush1.msra.mxu0 %v464
    %497 = vmatprep.subr.mxu0 0.0
    %498 = vmatpush1.msra.mxu0 %v465
    %499 = vmatprep.subr.mxu0 0.0
    %500 = vmatpush1.msra.mxu0 %v466
    %501 = vmatprep.subr.mxu0 0.0
    %502 = vmatpush1.msra.mxu0 %v467
    %503 = vmatprep.subr.mxu0 0.0
    %504 = vmatpush1.msra.mxu0 %v468
    %505 = vmatprep.subr.mxu0 0.0
    %506 = vmatpush1.msra.mxu0 %v469
    %507 = vmatprep.subr.mxu0 0.0
    %508 = vmatpush1.msra.mxu0 %v470
    %509 = vmatprep.subr.mxu0 0.0
    %510 = vmatpush1.msra.mxu0 0.0
    %511 = vmatprep.subr.mxu0 0.0
    %512 = vmatpush1.msra.mxu0 0.0
    %513 = vmatprep.subr.mxu0 0.0
    %514 = vmatpush1.msra.mxu0 0.0
    %515 = vmatprep.subr.mxu0 0.0
    %516 = vmatpush1.msra.mxu0 0.0
    %517 = vmatprep.subr.mxu0 0.0
    %518 = vmatpush1.msra.mxu0 0.0
    %519 = vmatprep.subr.mxu0 0.0
    %520 = vmatpush1.msra.mxu0 0.0
    %521 = vmatprep.subr.mxu0 0.0
    %522 = vmatpush1.msra.mxu0 0.0
    %523 = vmatprep.subr.mxu0 0.0
    %524 = vmatpush1.msra.mxu0 0.0
    %525 = vmatprep.subr.mxu0 0.0
    %526 = vmatpush1.msra.mxu0 0.0
    %527 = vmatprep.subr.mxu0 0.0
    %528 = vmatpush1.msra.mxu0 0.0
    %529 = vmatprep.subr.mxu0 0.0
    %530 = vmatpush1.msra.mxu0 0.0
    %531 = vmatprep.subr.mxu0 0.0
    %532 = vmatpush1.msra.mxu0 0.0
    %533 = vmatprep.subr.mxu0 0.0
    %534 = vmatpush1.msra.mxu0 0.0
    %535 = vmatprep.subr.mxu0 0.0
    %536 = vmatpush1.msra.mxu0 0.0
    %537 = vmatprep.subr.mxu0 0.0
    %538 = vmatpush1.msra.mxu0 0.0
    %539 = vmatprep.subr.mxu0 0.0
    %540 = vmatpush1.msra.mxu0 0.0
    %541 = vmatprep.subr.mxu0 0.0
    %542 = vmatpush1.msra.mxu0 0.0
    %543 = vmatprep.subr.mxu0 0.0
    %544 = vmatpush1.msra.mxu0 0.0
    %545 = vmatprep.subr.mxu0 0.0
    %546 = vmatpush1.msra.mxu0 0.0
    %547 = vmatprep.subr.mxu0 0.0
    %548 = vmatpush1.msra.mxu0 0.0
    %549 = vmatprep.mubr.f32.mxu0 0.0
    %550 = vmatmul.mubr.f32.gmra.mrb[0].mxu0 %v480
    %v551 = vpop.f32.mrb[0].mxu0
    %v552 = vadd.f32 %v476, %v551
    %v553 = vpop.f32.mrb[0].mxu0
    %554 = vmatprep.mubr.f32.mxu0 0.0
    %555 = vmatmul.mubr.f32.gmra.mrb[0].mxu0 %v483
    %v556 = vpop.f32.mrb[0].mxu0
    %v557 = vadd.f32 %v476, %v556
    %v558 = vpop.f32.mrb[0].mxu0
    %559 = vdwg.mxu0
    %v560 = vmax.f32 %v552, 0.0
    %v561 = vmax.f32 %v557, 0.0
    %v564 = vrot.slane %v560, 1
    %v565 = vrot.slane %v561, 1
    %v568 = vmax.f32 %v560, %v564
    %v569 = vmax.f32 %v561, %v565
    %v570 = vadd.f32 %v568, 0.0
    %v571 = vadd.f32 %v569, 0.0
    %v574 = vrot.slane %v568, 2
    %v575 = vrot.slane %v569, 2
    %v578 = vadd.f32 %v570, %v574
    %v579 = vadd.f32 %v571, %v575
    %v580 = vrot.slane %v568, 4
    %v581 = vrot.slane %v569, 4
    %v584 = vadd.f32 %v578, %v580
    %v585 = vadd.f32 %v579, %v581
    %v586 = vrot.slane %v568, 6
    %v587 = vrot.slane %v569, 6
    %v590 = vadd.f32 %v584, %v586
    %v591 = vadd.f32 %v585, %v587
    %v592 = vld [vmem:[%s5] sm:$0xff]
    %v593 = vld [vmem:[%s5 + $0x8] sm:$0xff]
    %v594 = vld [vmem:[%s5 + $0x10] sm:$0xff]
    %v595 = vld [vmem:[%s5 + $0x18] sm:$0xff]
    %v596 = vld [vmem:[#allocation10] sm:$0x1]
    %v598 = vlaneseq
    %v599 = vshrl.u32 %v598, 7
    %v600 = vsub.s32 0, %v599
    %v601 = vrot.slane %v596, %v600
    %v605 = vrot.slane %v591, 7
    %vm606 = vcmask 1041409
    %v607 = vsel %vm606, %v605, %v590
    %v608 = vsel %vm453, %v607, 0
    %610 = vmatprep.subr.mxu0 0.0
    %611 = vmatpush1.msra.mxu0 %v592
    %612 = vmatprep.subr.mxu0 0.0
    %613 = vmatpush1.msra.mxu0 %v593
    %614 = vmatprep.subr.mxu0 0.0
    %615 = vmatpush1.msra.mxu0 %v594
    %616 = vmatprep.subr.mxu0 0.0
    %617 = vmatpush1.msra.mxu0 %v595
    %618 = vmatprep.subr.mxu0 0.0
    %619 = vmatpush1.msra.mxu0 0.0
    %620 = vmatprep.subr.mxu0 0.0
    %621 = vmatpush1.msra.mxu0 0.0
    %622 = vmatprep.subr.mxu0 0.0
    %623 = vmatpush1.msra.mxu0 0.0
    %624 = vmatprep.subr.mxu0 0.0
    %625 = vmatpush1.msra.mxu0 0.0
    %626 = vmatprep.subr.mxu0 0.0
    %627 = vmatpush1.msra.mxu0 0.0
    %628 = vmatprep.subr.mxu0 0.0
    %629 = vmatpush1.msra.mxu0 0.0
    %630 = vmatprep.subr.mxu0 0.0
    %631 = vmatpush1.msra.mxu0 0.0
    %632 = vmatprep.subr.mxu0 0.0
    %633 = vmatpush1.msra.mxu0 0.0
    %634 = vmatprep.subr.mxu0 0.0
    %635 = vmatpush1.msra.mxu0 0.0
    %636 = vmatprep.subr.mxu0 0.0
    %637 = vmatpush1.msra.mxu0 0.0
    %638 = vmatprep.subr.mxu0 0.0
    %639 = vmatpush1.msra.mxu0 0.0
    %640 = vmatprep.subr.mxu0 0.0
    %641 = vmatpush1.msra.mxu0 0.0
    %642 = vmatprep.subr.mxu0 0.0
    %643 = vmatpush1.msra.mxu0 0.0
    %644 = vmatprep.subr.mxu0 0.0
    %645 = vmatpush1.msra.mxu0 0.0
    %646 = vmatprep.subr.mxu0 0.0
    %647 = vmatpush1.msra.mxu0 0.0
    %648 = vmatprep.subr.mxu0 0.0
    %649 = vmatpush1.msra.mxu0 0.0
    %650 = vmatprep.subr.mxu0 0.0
    %651 = vmatpush1.msra.mxu0 0.0
    %652 = vmatprep.subr.mxu0 0.0
    %653 = vmatpush1.msra.mxu0 0.0
    %654 = vmatprep.subr.mxu0 0.0
    %655 = vmatpush1.msra.mxu0 0.0
    %656 = vmatprep.subr.mxu0 0.0
    %657 = vmatpush1.msra.mxu0 0.0
    %658 = vmatprep.subr.mxu0 0.0
    %659 = vmatpush1.msra.mxu0 0.0
    %660 = vmatprep.subr.mxu0 0.0
    %661 = vmatpush1.msra.mxu0 0.0
    %662 = vmatprep.subr.mxu0 0.0
    %663 = vmatpush1.msra.mxu0 0.0
    %664 = vmatprep.subr.mxu0 0.0
    %665 = vmatpush1.msra.mxu0 0.0
    %666 = vmatprep.subr.mxu0 0.0
    %667 = vmatpush1.msra.mxu0 0.0
    %668 = vmatprep.subr.mxu0 0.0
    %669 = vmatpush1.msra.mxu0 0.0
    %670 = vmatprep.subr.mxu0 0.0
    %671 = vmatpush1.msra.mxu0 0.0
    %672 = vmatprep.subr.mxu0 0.0
    %673 = vmatpush1.msra.mxu0 0.0
    %674 = vmatprep.mubr.f32.mxu0 0.0
    %675 = vmatmul.mubr.f32.gmra.mrb[0].mxu0 %v608
    %v676 = vpop.f32.mrb[0].mxu0
    %v677 = vadd.f32 %v601, %v676
    %v678 = vpop.f32.mrb[0].mxu0
    %679 = vdwg.mxu0
    %v680 = vld [vmem:[%s7] sm:$0xff]
    %v681 = vld [vmem:[#allocation11] sm:$0x1]
    %v683 = vlaneseq
    %v684 = vshrl.u32 %v683, 7
    %v685 = vsub.s32 0, %v684
    %v686 = vrot.slane %v681, %v685
    %v689 = vsel %vm261, %v677, 0
    %691 = vmatprep.subr.mxu0 0.0
    %692 = vmatpush1.msra.mxu0 %v680
    %693 = vmatprep.subr.mxu0 0.0
    %694 = vmatpush1.msra.mxu0 0.0
    %695 = vmatprep.subr.mxu0 0.0
    %696 = vmatpush1.msra.mxu0 0.0
    %697 = vmatprep.subr.mxu0 0.0
    %698 = vmatpush1.msra.mxu0 0.0
    %699 = vmatprep.subr.mxu0 0.0
    %700 = vmatpush1.msra.mxu0 0.0
    %701 = vmatprep.subr.mxu0 0.0
    %702 = vmatpush1.msra.mxu0 0.0
    %703 = vmatprep.subr.mxu0 0.0
    %704 = vmatpush1.msra.mxu0 0.0
    %705 = vmatprep.subr.mxu0 0.0
    %706 = vmatpush1.msra.mxu0 0.0
    %707 = vmatprep.subr.mxu0 0.0
    %708 = vmatpush1.msra.mxu0 0.0
    %709 = vmatprep.subr.mxu0 0.0
    %710 = vmatpush1.msra.mxu0 0.0
    %711 = vmatprep.subr.mxu0 0.0
    %712 = vmatpush1.msra.mxu0 0.0
    %713 = vmatprep.subr.mxu0 0.0
    %714 = vmatpush1.msra.mxu0 0.0
    %715 = vmatprep.subr.mxu0 0.0
    %716 = vmatpush1.msra.mxu0 0.0
    %717 = vmatprep.subr.mxu0 0.0
    %718 = vmatpush1.msra.mxu0 0.0
    %719 = vmatprep.subr.mxu0 0.0
    %720 = vmatpush1.msra.mxu0 0.0
    %721 = vmatprep.subr.mxu0 0.0
    %722 = vmatpush1.msra.mxu0 0.0
    %723 = vmatprep.subr.mxu0 0.0
    %724 = vmatpush1.msra.mxu0 0.0
    %725 = vmatprep.subr.mxu0 0.0
    %726 = vmatpush1.msra.mxu0 0.0
    %727 = vmatprep.subr.mxu0 0.0
    %728 = vmatpush1.msra.mxu0 0.0
    %729 = vmatprep.subr.mxu0 0.0
    %730 = vmatpush1.msra.mxu0 0.0
    %731 = vmatprep.subr.mxu0 0.0
    %732 = vmatpush1.msra.mxu0 0.0
    %733 = vmatprep.subr.mxu0 0.0
    %734 = vmatpush1.msra.mxu0 0.0
    %735 = vmatprep.subr.mxu0 0.0
    %736 = vmatpush1.msra.mxu0 0.0
    %737 = vmatprep.subr.mxu0 0.0
    %738 = vmatpush1.msra.mxu0 0.0
    %739 = vmatprep.subr.mxu0 0.0
    %740 = vmatpush1.msra.mxu0 0.0
    %741 = vmatprep.subr.mxu0 0.0
    %742 = vmatpush1.msra.mxu0 0.0
    %743 = vmatprep.subr.mxu0 0.0
    %744 = vmatpush1.msra.mxu0 0.0
    %745 = vmatprep.subr.mxu0 0.0
    %746 = vmatpush1.msra.mxu0 0.0
    %747 = vmatprep.subr.mxu0 0.0
    %748 = vmatpush1.msra.mxu0 0.0
    %749 = vmatprep.subr.mxu0 0.0
    %750 = vmatpush1.msra.mxu0 0.0
    %751 = vmatprep.subr.mxu0 0.0
    %752 = vmatpush1.msra.mxu0 0.0
    %753 = vmatprep.subr.mxu0 0.0
    %754 = vmatpush1.msra.mxu0 0.0
    %755 = vmatprep.mubr.f32.mxu0 0.0
    %756 = vmatmul.mubr.f32.gmra.mrb[0].mxu0 %v689
    %v757 = vpop.f32.mrb[0].mxu0
    %v758 = vadd.f32 %v686, %v757
    %v759 = vpop.f32.mrb[0].mxu0
    %760 = vdwg.mxu0
    %vm761 = vcmask 58368
    %762 = vst.msk [vmem:[#allocation22] sm:$0x3] %vm761, %v758
    %v763 = vld [vmem:[%s9] sm:$0xff]
    %v764 = vld [vmem:[#allocation13] sm:$0x1]
    %v766 = vlaneseq
    %v767 = vshrl.u32 %v766, 7
    %v768 = vsub.s32 0, %v767
    %v769 = vrot.slane %v764, %v768
    %771 = vmatprep.subr.mxu0 0.0
    %772 = vmatpush1.msra.mxu0 %v763
    %773 = vmatprep.subr.mxu0 0.0
    %774 = vmatpush1.msra.mxu0 0.0
    %775 = vmatprep.subr.mxu0 0.0
    %776 = vmatpush1.msra.mxu0 0.0
    %777 = vmatprep.subr.mxu0 0.0
    %778 = vmatpush1.msra.mxu0 0.0
    %779 = vmatprep.subr.mxu0 0.0
    %780 = vmatpush1.msra.mxu0 0.0
    %781 = vmatprep.subr.mxu0 0.0
    %782 = vmatpush1.msra.mxu0 0.0
    %783 = vmatprep.subr.mxu0 0.0
    %784 = vmatpush1.msra.mxu0 0.0
    %785 = vmatprep.subr.mxu0 0.0
    %786 = vmatpush1.msra.mxu0 0.0
    %787 = vmatprep.subr.mxu0 0.0
    %788 = vmatpush1.msra.mxu0 0.0
    %789 = vmatprep.subr.mxu0 0.0
    %790 = vmatpush1.msra.mxu0 0.0
    %791 = vmatprep.subr.mxu0 0.0
    %792 = vmatpush1.msra.mxu0 0.0
    %793 = vmatprep.subr.mxu0 0.0
    %794 = vmatpush1.msra.mxu0 0.0
    %795 = vmatprep.subr.mxu0 0.0
    %796 = vmatpush1.msra.mxu0 0.0
    %797 = vmatprep.subr.mxu0 0.0
    %798 = vmatpush1.msra.mxu0 0.0
    %799 = vmatprep.subr.mxu0 0.0
    %800 = vmatpush1.msra.mxu0 0.0
    %801 = vmatprep.subr.mxu0 0.0
    %802 = vmatpush1.msra.mxu0 0.0
    %803 = vmatprep.subr.mxu0 0.0
    %804 = vmatpush1.msra.mxu0 0.0
    %805 = vmatprep.subr.mxu0 0.0
    %806 = vmatpush1.msra.mxu0 0.0
    %807 = vmatprep.subr.mxu0 0.0
    %808 = vmatpush1.msra.mxu0 0.0
    %809 = vmatprep.subr.mxu0 0.0
    %810 = vmatpush1.msra.mxu0 0.0
    %811 = vmatprep.subr.mxu0 0.0
    %812 = vmatpush1.msra.mxu0 0.0
    %813 = vmatprep.subr.mxu0 0.0
    %814 = vmatpush1.msra.mxu0 0.0
    %815 = vmatprep.subr.mxu0 0.0
    %816 = vmatpush1.msra.mxu0 0.0
    %817 = vmatprep.subr.mxu0 0.0
    %818 = vmatpush1.msra.mxu0 0.0
    %819 = vmatprep.subr.mxu0 0.0
    %820 = vmatpush1.msra.mxu0 0.0
    %821 = vmatprep.subr.mxu0 0.0
    %822 = vmatpush1.msra.mxu0 0.0
    %823 = vmatprep.subr.mxu0 0.0
    %824 = vmatpush1.msra.mxu0 0.0
    %825 = vmatprep.subr.mxu0 0.0
    %826 = vmatpush1.msra.mxu0 0.0
    %827 = vmatprep.subr.mxu0 0.0
    %828 = vmatpush1.msra.mxu0 0.0
    %829 = vmatprep.subr.mxu0 0.0
    %830 = vmatpush1.msra.mxu0 0.0
    %831 = vmatprep.subr.mxu0 0.0
    %832 = vmatpush1.msra.mxu0 0.0
    %833 = vmatprep.subr.mxu0 0.0
    %834 = vmatpush1.msra.mxu0 0.0
    %835 = vmatprep.mubr.f32.mxu0 0.0
    %836 = vmatmul.mubr.f32.gmra.mrb[0].mxu0 %v689
    %v837 = vpop.f32.mrb[0].mxu0
    %v838 = vadd.f32 %v769, %v837
    %v839 = vpop.f32.mrb[0].mxu0
    %840 = vdwg.mxu0
    %841 = vst.msk [vmem:[#allocation23] sm:$0x3] %vm761, %v838
    %v842 = vld [vmem:[%s11] sm:$0xff]
    %v843 = vld [vmem:[#allocation14] sm:$0x1]
    %v845 = vlaneseq
    %v846 = vshrl.u32 %v845, 7
    %v847 = vsub.s32 0, %v846
    %v848 = vrot.slane %v843, %v847
    %850 = vmatprep.subr.mxu0 0.0
    %851 = vmatpush1.msra.mxu0 %v842
    %852 = vmatprep.subr.mxu0 0.0
    %853 = vmatpush1.msra.mxu0 0.0
    %854 = vmatprep.subr.mxu0 0.0
    %855 = vmatpush1.msra.mxu0 0.0
    %856 = vmatprep.subr.mxu0 0.0
    %857 = vmatpush1.msra.mxu0 0.0
    %858 = vmatprep.subr.mxu0 0.0
    %859 = vmatpush1.msra.mxu0 0.0
    %860 = vmatprep.subr.mxu0 0.0
    %861 = vmatpush1.msra.mxu0 0.0
    %862 = vmatprep.subr.mxu0 0.0
    %863 = vmatpush1.msra.mxu0 0.0
    %864 = vmatprep.subr.mxu0 0.0
    %865 = vmatpush1.msra.mxu0 0.0
    %866 = vmatprep.subr.mxu0 0.0
    %867 = vmatpush1.msra.mxu0 0.0
    %868 = vmatprep.subr.mxu0 0.0
    %869 = vmatpush1.msra.mxu0 0.0
    %870 = vmatprep.subr.mxu0 0.0
    %871 = vmatpush1.msra.mxu0 0.0
    %872 = vmatprep.subr.mxu0 0.0
    %873 = vmatpush1.msra.mxu0 0.0
    %874 = vmatprep.subr.mxu0 0.0
    %875 = vmatpush1.msra.mxu0 0.0
    %876 = vmatprep.subr.mxu0 0.0
    %877 = vmatpush1.msra.mxu0 0.0
    %878 = vmatprep.subr.mxu0 0.0
    %879 = vmatpush1.msra.mxu0 0.0
    %880 = vmatprep.subr.mxu0 0.0
    %881 = vmatpush1.msra.mxu0 0.0
    %882 = vmatprep.subr.mxu0 0.0
    %883 = vmatpush1.msra.mxu0 0.0
    %884 = vmatprep.subr.mxu0 0.0
    %885 = vmatpush1.msra.mxu0 0.0
    %886 = vmatprep.subr.mxu0 0.0
    %887 = vmatpush1.msra.mxu0 0.0
    %888 = vmatprep.subr.mxu0 0.0
    %889 = vmatpush1.msra.mxu0 0.0
    %890 = vmatprep.subr.mxu0 0.0
    %891 = vmatpush1.msra.mxu0 0.0
    %892 = vmatprep.subr.mxu0 0.0
    %893 = vmatpush1.msra.mxu0 0.0
    %894 = vmatprep.subr.mxu0 0.0
    %895 = vmatpush1.msra.mxu0 0.0
    %896 = vmatprep.subr.mxu0 0.0
    %897 = vmatpush1.msra.mxu0 0.0
    %898 = vmatprep.subr.mxu0 0.0
    %899 = vmatpush1.msra.mxu0 0.0
    %900 = vmatprep.subr.mxu0 0.0
    %901 = vmatpush1.msra.mxu0 0.0
    %902 = vmatprep.subr.mxu0 0.0
    %903 = vmatpush1.msra.mxu0 0.0
    %904 = vmatprep.subr.mxu0 0.0
    %905 = vmatpush1.msra.mxu0 0.0
    %906 = vmatprep.subr.mxu0 0.0
    %907 = vmatpush1.msra.mxu0 0.0
    %908 = vmatprep.subr.mxu0 0.0
    %909 = vmatpush1.msra.mxu0 0.0
    %910 = vmatprep.subr.mxu0 0.0
    %911 = vmatpush1.msra.mxu0 0.0
    %912 = vmatprep.subr.mxu0 0.0
    %913 = vmatpush1.msra.mxu0 0.0
    %914 = vmatprep.mubr.f32.mxu0 0.0
    %915 = vmatmul.mubr.f32.gmra.mrb[0].mxu0 %v689
    %v916 = vpop.f32.mrb[0].mxu0
    %v917 = vadd.f32 %v848, %v916
    %v918 = vpop.f32.mrb[0].mxu0
    %919 = vdwg.mxu0
    %v920 = vmax.f32 %v917, 0.0
    %v921 = vld [vmem:[%s13] sm:$0xff]
    %v922 = vld [vmem:[%s13 + $0x8] sm:$0xff]
    %v923 = vld [vmem:[%s13 + $0x10] sm:$0xff]
    %v924 = vld [vmem:[%s13 + $0x18] sm:$0xff]
    %v925 = vld [vmem:[%s13 + $0x20] sm:$0xff]
    %v926 = vld [vmem:[%s13 + $0x28] sm:$0xff]
    %v927 = vld [vmem:[%s13 + $0x30] sm:$0xff]
    %v928 = vld [vmem:[%s13 + $0x38] sm:$0xff]
    %v929 = vld [vmem:[%s13 + $0x40] sm:$0xff]
    %v930 = vld [vmem:[%s13 + $0x48] sm:$0xff]
    %v931 = vld [vmem:[%s13 + $0x50] sm:$0xff]
    %v932 = vld [vmem:[%s13 + $0x58] sm:$0xff]
    %v933 = vld [vmem:[%s13 + $0x60] sm:$0xff]
    %v934 = vld [vmem:[%s13 + $0x68] sm:$0xff]
    %v935 = vld [vmem:[%s13 + $0x70] sm:$0xff]
    %v936 = vld [vmem:[%s13 + $0x78] sm:$0xff]
    %v937 = vld [vmem:[%s13 + $0x80] sm:$0xff]
    %v938 = vld [vmem:[%s13 + $0x88] sm:$0xff]
    %v939 = vld [vmem:[%s13 + $0x90] sm:$0xff]
    %v940 = vld [vmem:[%s13 + $0x98] sm:$0xff]
    %v941 = vld [vmem:[%s13 + $0xa0] sm:$0xff]
    %v942 = vld [vmem:[%s13 + $0xa8] sm:$0xff]
    %v943 = vld [vmem:[%s13 + $0xb0] sm:$0xff]
    %v944 = vld [vmem:[%s13 + $0xb8] sm:$0xff]
    %v945 = vld [vmem:[%s13 + $0xc0] sm:$0xff]
    %v946 = vld [vmem:[%s13 + $0xc8] sm:$0xff]
    %v947 = vld [vmem:[%s13 + $0xd0] sm:$0xff]
    %v948 = vld [vmem:[%s13 + $0xd8] sm:$0xff]
    %v949 = vld [vmem:[%s13 + $0xe0] sm:$0xff]
    %v950 = vld [vmem:[%s13 + $0xe8] sm:$0xff]
    %v951 = vld [vmem:[%s13 + $0xf0] sm:$0xff]
    %v952 = vld [vmem:[%s13 + $0xf8] sm:$0xff]
    %v953 = vld [vmem:[#allocation16] sm:$0x3]
    %v955 = vlaneseq
    %v956 = vshrl.u32 %v955, 7
    %v957 = vsub.s32 0, %v956
    %v958 = vrot.slane %v953, %v957
    %v959 = vlaneseq
    %v960 = vshrl.u32 %v959, 7
    %v961 = vsub.s32 1, %v960
    %v962 = vrot.slane %v953, %v961
    %965 = vmatprep.subr.mxu0 %v922
    %966 = vmatpush1.msra.mxu0 %v921
    %967 = vmatprep.subr.mxu0 %v924
    %968 = vmatpush1.msra.mxu0 %v923
    %969 = vmatprep.subr.mxu0 %v926
    %970 = vmatpush1.msra.mxu0 %v925
    %971 = vmatprep.subr.mxu0 %v928
    %972 = vmatpush1.msra.mxu0 %v927
    %973 = vmatprep.subr.mxu0 %v930
    %974 = vmatpush1.msra.mxu0 %v929
    %975 = vmatprep.subr.mxu0 %v932
    %976 = vmatpush1.msra.mxu0 %v931
    %977 = vmatprep.subr.mxu0 %v934
    %978 = vmatpush1.msra.mxu0 %v933
    %979 = vmatprep.subr.mxu0 %v936
    %980 = vmatpush1.msra.mxu0 %v935
    %981 = vmatprep.subr.mxu0 %v938
    %982 = vmatpush1.msra.mxu0 %v937
    %983 = vmatprep.subr.mxu0 %v940
    %984 = vmatpush1.msra.mxu0 %v939
    %985 = vmatprep.subr.mxu0 %v942
    %986 = vmatpush1.msra.mxu0 %v941
    %987 = vmatprep.subr.mxu0 %v944
    %988 = vmatpush1.msra.mxu0 %v943
    %989 = vmatprep.subr.mxu0 %v946
    %990 = vmatpush1.msra.mxu0 %v945
    %991 = vmatprep.subr.mxu0 %v948
    %992 = vmatpush1.msra.mxu0 %v947
    %993 = vmatprep.subr.mxu0 %v950
    %994 = vmatpush1.msra.mxu0 %v949
    %995 = vmatprep.subr.mxu0 %v952
    %996 = vmatpush1.msra.mxu0 %v951
    %997 = vmatprep.subr.mxu0 0.0
    %998 = vmatpush1.msra.mxu0 0.0
    %999 = vmatprep.subr.mxu0 0.0
    %1000 = vmatpush1.msra.mxu0 0.0
    %1001 = vmatprep.subr.mxu0 0.0
    %1002 = vmatpush1.msra.mxu0 0.0
    %1003 = vmatprep.subr.mxu0 0.0
    %1004 = vmatpush1.msra.mxu0 0.0
    %1005 = vmatprep.subr.mxu0 0.0
    %1006 = vmatpush1.msra.mxu0 0.0
    %1007 = vmatprep.subr.mxu0 0.0
    %1008 = vmatpush1.msra.mxu0 0.0
    %1009 = vmatprep.subr.mxu0 0.0
    %1010 = vmatpush1.msra.mxu0 0.0
    %1011 = vmatprep.subr.mxu0 0.0
    %1012 = vmatpush1.msra.mxu0 0.0
    %1013 = vmatprep.subr.mxu0 0.0
    %1014 = vmatpush1.msra.mxu0 0.0
    %1015 = vmatprep.subr.mxu0 0.0
    %1016 = vmatpush1.msra.mxu0 0.0
    %1017 = vmatprep.subr.mxu0 0.0
    %1018 = vmatpush1.msra.mxu0 0.0
    %1019 = vmatprep.subr.mxu0 0.0
    %1020 = vmatpush1.msra.mxu0 0.0
    %1021 = vmatprep.subr.mxu0 0.0
    %1022 = vmatpush1.msra.mxu0 0.0
    %1023 = vmatprep.subr.mxu0 0.0
    %1024 = vmatpush1.msra.mxu0 0.0
    %1025 = vmatprep.subr.mxu0 0.0
    %1026 = vmatpush1.msra.mxu0 0.0
    %1027 = vmatprep.subr.mxu0 0.0
    %1028 = vmatpush1.msra.mxu0 0.0
    %1029 = vmatprep.mubr.f32.mxu0 0.0
    %1030 = vmatmul.mubr.f32.gmra.mrb[0].mxu0 %v920
    %v1031 = vpop.f32.mrb[0].mxu0
    %v1032 = vadd.f32 %v958, %v1031
    %v1033 = vpop.f32.mrb[0].mxu0
    %v1034 = vadd.f32 %v962, %v1033
    %1035 = vdwg.mxu0
    %v1036 = vmax.f32 %v1032, 0.0
    %v1037 = vmax.f32 %v1034, 0.0
    %v1038 = vld [vmem:[#allocation17] sm:$0xff]
    %v1039 = vld [vmem:[#allocation17 + $0x8] sm:$0xff]
    %v1040 = vld [vmem:[#allocation17 + $0x10] sm:$0xff]
    %v1041 = vld [vmem:[#allocation17 + $0x18] sm:$0xff]
    %v1042 = vld [vmem:[#allocation17 + $0x20] sm:$0xff]
    %v1043 = vld [vmem:[#allocation17 + $0x28] sm:$0xff]
    %v1044 = vld [vmem:[#allocation17 + $0x30] sm:$0xff]
    %v1045 = vld [vmem:[#allocation17 + $0x38] sm:$0xff]
    %v1046 = vld [vmem:[#allocation17 + $0x40] sm:$0xff]
    %v1047 = vld [vmem:[#allocation17 + $0x48] sm:$0xff]
    %v1048 = vld [vmem:[#allocation17 + $0x50] sm:$0xff]
    %v1049 = vld [vmem:[#allocation17 + $0x58] sm:$0xff]
    %v1050 = vld [vmem:[#allocation17 + $0x60] sm:$0xff]
    %v1051 = vld [vmem:[#allocation17 + $0x68] sm:$0xff]
    %v1052 = vld [vmem:[#allocation17 + $0x70] sm:$0xff]
    %v1053 = vld [vmem:[#allocation17 + $0x78] sm:$0xff]
    %v1054 = vld [vmem:[#allocation17 + $0x80] sm:$0xff]
    %v1055 = vld [vmem:[#allocation17 + $0x88] sm:$0xff]
    %v1056 = vld [vmem:[#allocation17 + $0x90] sm:$0xff]
    %v1057 = vld [vmem:[#allocation17 + $0x98] sm:$0xff]
    %v1058 = vld [vmem:[#allocation17 + $0xa0] sm:$0xff]
    %v1059 = vld [vmem:[#allocation17 + $0xa8] sm:$0xff]
    %v1060 = vld [vmem:[#allocation17 + $0xb0] sm:$0xff]
    %v1061 = vld [vmem:[#allocation17 + $0xb8] sm:$0xff]
    %v1062 = vld [vmem:[#allocation17 + $0xc0] sm:$0xff]
    %v1063 = vld [vmem:[#allocation17 + $0xc8] sm:$0xff]
    %v1064 = vld [vmem:[#allocation17 + $0xd0] sm:$0xff]
    %v1065 = vld [vmem:[#allocation17 + $0xd8] sm:$0xff]
    %v1066 = vld [vmem:[#allocation17 + $0xe0] sm:$0xff]
    %v1067 = vld [vmem:[#allocation17 + $0xe8] sm:$0xff]
    %v1068 = vld [vmem:[#allocation17 + $0xf0] sm:$0xff]
    %v1069 = vld [vmem:[#allocation17 + $0xf8] sm:$0xff]
    %v1070 = vld [vmem:[#allocation17 + $0x100] sm:$0xff]
    %v1071 = vld [vmem:[#allocation17 + $0x108] sm:$0xff]
    %v1072 = vld [vmem:[#allocation17 + $0x110] sm:$0xff]
    %v1073 = vld [vmem:[#allocation17 + $0x118] sm:$0xff]
    %v1074 = vld [vmem:[#allocation17 + $0x120] sm:$0xff]
    %v1075 = vld [vmem:[#allocation17 + $0x128] sm:$0xff]
    %v1076 = vld [vmem:[#allocation17 + $0x130] sm:$0xff]
    %v1077 = vld [vmem:[#allocation17 + $0x138] sm:$0xff]
    %v1078 = vld [vmem:[#allocation17 + $0x140] sm:$0xff]
    %v1079 = vld [vmem:[#allocation17 + $0x148] sm:$0xff]
    %v1080 = vld [vmem:[#allocation17 + $0x150] sm:$0xff]
    %v1081 = vld [vmem:[#allocation17 + $0x158] sm:$0xff]
    %v1082 = vld [vmem:[#allocation17 + $0x160] sm:$0xff]
    %v1083 = vld [vmem:[#allocation17 + $0x168] sm:$0xff]
    %v1084 = vld [vmem:[#allocation17 + $0x170] sm:$0xff]
    %v1085 = vld [vmem:[#allocation17 + $0x178] sm:$0xff]
    %v1086 = vld [vmem:[#allocation17 + $0x180] sm:$0xff]
    %v1087 = vld [vmem:[#allocation17 + $0x188] sm:$0xff]
    %v1088 = vld [vmem:[#allocation17 + $0x190] sm:$0xff]
    %v1089 = vld [vmem:[#allocation17 + $0x198] sm:$0xff]
    %v1090 = vld [vmem:[#allocation17 + $0x1a0] sm:$0xff]
    %v1091 = vld [vmem:[#allocation17 + $0x1a8] sm:$0xff]
    %v1092 = vld [vmem:[#allocation17 + $0x1b0] sm:$0xff]
    %v1093 = vld [vmem:[#allocation17 + $0x1b8] sm:$0xff]
    %v1094 = vld [vmem:[#allocation17 + $0x1c0] sm:$0xff]
    %v1095 = vld [vmem:[#allocation17 + $0x1c8] sm:$0xff]
    %v1096 = vld [vmem:[#allocation17 + $0x1d0] sm:$0xff]
    %v1097 = vld [vmem:[#allocation17 + $0x1d8] sm:$0xff]
    %v1098 = vld [vmem:[#allocation17 + $0x1e0] sm:$0xff]
    %v1099 = vld [vmem:[#allocation17 + $0x1e8] sm:$0xff]
    %v1100 = vld [vmem:[#allocation17 + $0x1f0] sm:$0xff]
    %v1101 = vld [vmem:[#allocation17 + $0x1f8] sm:$0xff]
    %v1102 = vld [vmem:[#allocation17 + $0x200] sm:$0xff]
    %v1103 = vld [vmem:[#allocation17 + $0x208] sm:$0xff]
    %v1104 = vld [vmem:[#allocation17 + $0x210] sm:$0xff]
    %v1105 = vld [vmem:[#allocation17 + $0x218] sm:$0xff]
    %v1106 = vld [vmem:[#allocation17 + $0x220] sm:$0xff]
    %v1107 = vld [vmem:[#allocation17 + $0x228] sm:$0xff]
    %v1108 = vld [vmem:[#allocation17 + $0x230] sm:$0xff]
    %v1109 = vld [vmem:[#allocation17 + $0x238] sm:$0xff]
    %v1110 = vld [vmem:[#allocation17 + $0x240] sm:$0xff]
    %v1111 = vld [vmem:[#allocation17 + $0x248] sm:$0xff]
    %v1112 = vld [vmem:[#allocation17 + $0x250] sm:$0xff]
    %v1113 = vld [vmem:[#allocation17 + $0x258] sm:$0xff]
    %v1114 = vld [vmem:[#allocation17 + $0x260] sm:$0xff]
    %v1115 = vld [vmem:[#allocation17 + $0x268] sm:$0xff]
    %v1116 = vld [vmem:[#allocation17 + $0x270] sm:$0xff]
    %v1117 = vld [vmem:[#allocation17 + $0x278] sm:$0xff]
    %v1118 = vld [vmem:[#allocation17 + $0x280] sm:$0xff]
    %v1119 = vld [vmem:[#allocation17 + $0x288] sm:$0xff]
    %v1120 = vld [vmem:[#allocation17 + $0x290] sm:$0xff]
    %v1121 = vld [vmem:[#allocation17 + $0x298] sm:$0xff]
    %v1122 = vld [vmem:[#allocation17 + $0x2a0] sm:$0xff]
    %v1123 = vld [vmem:[#allocation17 + $0x2a8] sm:$0xff]
    %v1124 = vld [vmem:[#allocation17 + $0x2b0] sm:$0xff]
    %v1125 = vld [vmem:[#allocation17 + $0x2b8] sm:$0xff]
    %v1126 = vld [vmem:[#allocation17 + $0x2c0] sm:$0xff]
    %v1127 = vld [vmem:[#allocation17 + $0x2c8] sm:$0xff]
    %v1128 = vld [vmem:[#allocation17 + $0x2d0] sm:$0xff]
    %v1129 = vld [vmem:[#allocation17 + $0x2d8] sm:$0xff]
    %v1130 = vld [vmem:[#allocation17 + $0x2e0] sm:$0xff]
    %v1131 = vld [vmem:[#allocation17 + $0x2e8] sm:$0xff]
    %v1132 = vld [vmem:[#allocation17 + $0x2f0] sm:$0xff]
    %v1133 = vld [vmem:[#allocation17 + $0x2f8] sm:$0xff]
    %v1134 = vld [vmem:[#allocation17 + $0x300] sm:$0xff]
    %v1135 = vld [vmem:[#allocation17 + $0x308] sm:$0xff]
    %v1136 = vld [vmem:[#allocation17 + $0x310] sm:$0xff]
    %v1137 = vld [vmem:[#allocation17 + $0x318] sm:$0xff]
    %v1138 = vld [vmem:[#allocation17 + $0x320] sm:$0xff]
    %v1139 = vld [vmem:[#allocation17 + $0x328] sm:$0xff]
    %v1140 = vld [vmem:[#allocation17 + $0x330] sm:$0xff]
    %v1141 = vld [vmem:[#allocation17 + $0x338] sm:$0xff]
    %v1142 = vld [vmem:[#allocation17 + $0x340] sm:$0xff]
    %v1143 = vld [vmem:[#allocation17 + $0x348] sm:$0xff]
    %v1144 = vld [vmem:[#allocation17 + $0x350] sm:$0xff]
    %v1145 = vld [vmem:[#allocation17 + $0x358] sm:$0xff]
    %v1146 = vld [vmem:[#allocation17 + $0x360] sm:$0xff]
    %v1147 = vld [vmem:[#allocation17 + $0x368] sm:$0xff]
    %v1148 = vld [vmem:[#allocation17 + $0x370] sm:$0xff]
    %v1149 = vld [vmem:[#allocation17 + $0x378] sm:$0xff]
    %v1150 = vld [vmem:[#allocation17 + $0x380] sm:$0xff]
    %v1151 = vld [vmem:[#allocation17 + $0x388] sm:$0xff]
    %v1152 = vld [vmem:[#allocation17 + $0x390] sm:$0xff]
    %v1153 = vld [vmem:[#allocation17 + $0x398] sm:$0xff]
    %v1154 = vld [vmem:[#allocation17 + $0x3a0] sm:$0xff]
    %v1155 = vld [vmem:[#allocation17 + $0x3a8] sm:$0xff]
    %v1156 = vld [vmem:[#allocation17 + $0x3b0] sm:$0xff]
    %v1157 = vld [vmem:[#allocation17 + $0x3b8] sm:$0xff]
    %v1158 = vld [vmem:[#allocation17 + $0x3c0] sm:$0xff]
    %v1159 = vld [vmem:[#allocation17 + $0x3c8] sm:$0xff]
    %v1160 = vld [vmem:[#allocation17 + $0x3d0] sm:$0xff]
    %v1161 = vld [vmem:[#allocation17 + $0x3d8] sm:$0xff]
    %v1162 = vld [vmem:[#allocation17 + $0x3e0] sm:$0xff]
    %v1163 = vld [vmem:[#allocation17 + $0x3e8] sm:$0xff]
    %v1164 = vld [vmem:[#allocation17 + $0x3f0] sm:$0xff]
    %v1165 = vld [vmem:[#allocation17 + $0x3f8] sm:$0xff]
    %v1166 = vld [vmem:[#allocation17 + $0x400] sm:$0xff]
    %v1167 = vld [vmem:[#allocation17 + $0x408] sm:$0xff]
    %v1168 = vld [vmem:[#allocation17 + $0x410] sm:$0xff]
    %v1169 = vld [vmem:[#allocation17 + $0x418] sm:$0xff]
    %v1170 = vld [vmem:[#allocation17 + $0x420] sm:$0xff]
    %v1171 = vld [vmem:[#allocation17 + $0x428] sm:$0xff]
    %v1172 = vld [vmem:[#allocation17 + $0x430] sm:$0xff]
    %v1173 = vld [vmem:[#allocation17 + $0x438] sm:$0xff]
    %v1174 = vld [vmem:[#allocation17 + $0x440] sm:$0xff]
    %v1175 = vld [vmem:[#allocation17 + $0x448] sm:$0xff]
    %v1176 = vld [vmem:[#allocation17 + $0x450] sm:$0xff]
    %v1177 = vld [vmem:[#allocation17 + $0x458] sm:$0xff]
    %v1178 = vld [vmem:[#allocation17 + $0x460] sm:$0xff]
    %v1179 = vld [vmem:[#allocation17 + $0x468] sm:$0xff]
    %v1180 = vld [vmem:[#allocation17 + $0x470] sm:$0xff]
    %v1181 = vld [vmem:[#allocation17 + $0x478] sm:$0xff]
    %v1182 = vld [vmem:[#allocation17 + $0x480] sm:$0xff]
    %v1183 = vld [vmem:[#allocation17 + $0x488] sm:$0xff]
    %v1184 = vld [vmem:[#allocation17 + $0x490] sm:$0xff]
    %v1185 = vld [vmem:[#allocation17 + $0x498] sm:$0xff]
    %v1186 = vld [vmem:[#allocation17 + $0x4a0] sm:$0xff]
    %v1187 = vld [vmem:[#allocation17 + $0x4a8] sm:$0xff]
    %v1188 = vld [vmem:[#allocation17 + $0x4b0] sm:$0xff]
    %v1189 = vld [vmem:[#allocation17 + $0x4b8] sm:$0xff]
    %v1190 = vld [vmem:[#allocation17 + $0x4c0] sm:$0xff]
    %v1191 = vld [vmem:[#allocation17 + $0x4c8] sm:$0xff]
    %v1192 = vld [vmem:[#allocation17 + $0x4d0] sm:$0xff]
    %v1193 = vld [vmem:[#allocation17 + $0x4d8] sm:$0xff]
    %v1194 = vld [vmem:[#allocation17 + $0x4e0] sm:$0xff]
    %v1195 = vld [vmem:[#allocation17 + $0x4e8] sm:$0xff]
    %v1196 = vld [vmem:[#allocation17 + $0x4f0] sm:$0xff]
    %v1197 = vld [vmem:[#allocation17 + $0x4f8] sm:$0xff]
    %v1198 = vld [vmem:[#allocation17 + $0x500] sm:$0xff]
    %v1199 = vld [vmem:[#allocation17 + $0x508] sm:$0xff]
    %v1200 = vld [vmem:[#allocation17 + $0x510] sm:$0xff]
    %v1201 = vld [vmem:[#allocation17 + $0x518] sm:$0xff]
    %v1202 = vld [vmem:[#allocation17 + $0x520] sm:$0xff]
    %v1203 = vld [vmem:[#allocation17 + $0x528] sm:$0xff]
    %v1204 = vld [vmem:[#allocation17 + $0x530] sm:$0xff]
    %v1205 = vld [vmem:[#allocation17 + $0x538] sm:$0xff]
    %v1206 = vld [vmem:[#allocation17 + $0x540] sm:$0xff]
    %v1207 = vld [vmem:[#allocation17 + $0x548] sm:$0xff]
    %v1208 = vld [vmem:[#allocation17 + $0x550] sm:$0xff]
    %v1209 = vld [vmem:[#allocation17 + $0x558] sm:$0xff]
    %v1210 = vld [vmem:[#allocation17 + $0x560] sm:$0xff]
    %v1211 = vld [vmem:[#allocation17 + $0x568] sm:$0xff]
    %v1212 = vld [vmem:[#allocation17 + $0x570] sm:$0xff]
    %v1213 = vld [vmem:[#allocation17 + $0x578] sm:$0xff]
    %v1214 = vld [vmem:[#allocation17 + $0x580] sm:$0xff]
    %v1215 = vld [vmem:[#allocation17 + $0x588] sm:$0xff]
    %v1216 = vld [vmem:[#allocation17 + $0x590] sm:$0xff]
    %v1217 = vld [vmem:[#allocation17 + $0x598] sm:$0xff]
    %v1218 = vld [vmem:[#allocation17 + $0x5a0] sm:$0xff]
    %v1219 = vld [vmem:[#allocation17 + $0x5a8] sm:$0xff]
    %v1220 = vld [vmem:[#allocation17 + $0x5b0] sm:$0xff]
    %v1221 = vld [vmem:[#allocation17 + $0x5b8] sm:$0xff]
    %v1222 = vld [vmem:[#allocation17 + $0x5c0] sm:$0xff]
    %v1223 = vld [vmem:[#allocation17 + $0x5c8] sm:$0xff]
    %v1224 = vld [vmem:[#allocation17 + $0x5d0] sm:$0xff]
    %v1225 = vld [vmem:[#allocation17 + $0x5d8] sm:$0xff]
    %v1226 = vld [vmem:[#allocation17 + $0x5e0] sm:$0xff]
    %v1227 = vld [vmem:[#allocation17 + $0x5e8] sm:$0xff]
    %v1228 = vld [vmem:[#allocation17 + $0x5f0] sm:$0xff]
    %v1229 = vld [vmem:[#allocation17 + $0x5f8] sm:$0xff]
    %1230 = vmatprep.subr.mxu0 %v1039
    %1231 = vmatpush1.msra.mxu0 %v1038
    %1232 = vmatprep.subr.mxu0 %v1045
    %1233 = vmatpush1.msra.mxu0 %v1044
    %1234 = vmatprep.subr.mxu0 %v1051
    %1235 = vmatpush1.msra.mxu0 %v1050
    %1236 = vmatprep.subr.mxu0 %v1057
    %1237 = vmatpush1.msra.mxu0 %v1056
    %1238 = vmatprep.subr.mxu0 %v1063
    %1239 = vmatpush1.msra.mxu0 %v1062
    %1240 = vmatprep.subr.mxu0 %v1069
    %1241 = vmatpush1.msra.mxu0 %v1068
    %1242 = vmatprep.subr.mxu0 %v1075
    %1243 = vmatpush1.msra.mxu0 %v1074
    %1244 = vmatprep.subr.mxu0 %v1081
    %1245 = vmatpush1.msra.mxu0 %v1080
    %1246 = vmatprep.subr.mxu0 %v1087
    %1247 = vmatpush1.msra.mxu0 %v1086
    %1248 = vmatprep.subr.mxu0 %v1093
    %1249 = vmatpush1.msra.mxu0 %v1092
    %1250 = vmatprep.subr.mxu0 %v1099
    %1251 = vmatpush1.msra.mxu0 %v1098
    %1252 = vmatprep.subr.mxu0 %v1105
    %1253 = vmatpush1.msra.mxu0 %v1104
    %1254 = vmatprep.subr.mxu0 %v1111
    %1255 = vmatpush1.msra.mxu0 %v1110
    %1256 = vmatprep.subr.mxu0 %v1117
    %1257 = vmatpush1.msra.mxu0 %v1116
    %1258 = vmatprep.subr.mxu0 %v1123
    %1259 = vmatpush1.msra.mxu0 %v1122
    %1260 = vmatprep.subr.mxu0 %v1129
    %1261 = vmatpush1.msra.mxu0 %v1128
    %1262 = vmatprep.subr.mxu0 %v1135
    %1263 = vmatpush1.msra.mxu0 %v1134
    %1264 = vmatprep.subr.mxu0 %v1141
    %1265 = vmatpush1.msra.mxu0 %v1140
    %1266 = vmatprep.subr.mxu0 %v1147
    %1267 = vmatpush1.msra.mxu0 %v1146
    %1268 = vmatprep.subr.mxu0 %v1153
    %1269 = vmatpush1.msra.mxu0 %v1152
    %1270 = vmatprep.subr.mxu0 %v1159
    %1271 = vmatpush1.msra.mxu0 %v1158
    %1272 = vmatprep.subr.mxu0 %v1165
    %1273 = vmatpush1.msra.mxu0 %v1164
    %1274 = vmatprep.subr.mxu0 %v1171
    %1275 = vmatpush1.msra.mxu0 %v1170
    %1276 = vmatprep.subr.mxu0 %v1177
    %1277 = vmatpush1.msra.mxu0 %v1176
    %1278 = vmatprep.subr.mxu0 %v1183
    %1279 = vmatpush1.msra.mxu0 %v1182
    %1280 = vmatprep.subr.mxu0 %v1189
    %1281 = vmatpush1.msra.mxu0 %v1188
    %1282 = vmatprep.subr.mxu0 %v1195
    %1283 = vmatpush1.msra.mxu0 %v1194
    %1284 = vmatprep.subr.mxu0 %v1201
    %1285 = vmatpush1.msra.mxu0 %v1200
    %1286 = vmatprep.subr.mxu0 %v1207
    %1287 = vmatpush1.msra.mxu0 %v1206
    %1288 = vmatprep.subr.mxu0 %v1213
    %1289 = vmatpush1.msra.mxu0 %v1212
    %1290 = vmatprep.subr.mxu0 %v1219
    %1291 = vmatpush1.msra.mxu0 %v1218
    %1292 = vmatprep.subr.mxu0 %v1225
    %1293 = vmatpush1.msra.mxu0 %v1224
    %1294 = vmatprep.mubr.f32.mxu0 %v1037
    %1295 = vmatmul.mubr.f32.gmra.mrb[0].mxu0 %v1036
    %v1296 = vpop.f32.mrb[0].mxu0
    %v1297 = vadd.f32 0.0, %v1296
    %v1298 = vpop.f32.mrb[0].mxu0
    %v1299 = vadd.f32 0.0, %v1298
    %1300 = vdwg.mxu0
    %1301 = vmatprep.subr.mxu0 %v1041
    %1302 = vmatpush1.msra.mxu0 %v1040
    %1303 = vmatprep.subr.mxu0 %v1047
    %1304 = vmatpush1.msra.mxu0 %v1046
    %1305 = vmatprep.subr.mxu0 %v1053
    %1306 = vmatpush1.msra.mxu0 %v1052
    %1307 = vmatprep.subr.mxu0 %v1059
    %1308 = vmatpush1.msra.mxu0 %v1058
    %1309 = vmatprep.subr.mxu0 %v1065
    %1310 = vmatpush1.msra.mxu0 %v1064
    %1311 = vmatprep.subr.mxu0 %v1071
    %1312 = vmatpush1.msra.mxu0 %v1070
    %1313 = vmatprep.subr.mxu0 %v1077
    %1314 = vmatpush1.msra.mxu0 %v1076
    %1315 = vmatprep.subr.mxu0 %v1083
    %1316 = vmatpush1.msra.mxu0 %v1082
    %1317 = vmatprep.subr.mxu0 %v1089
    %1318 = vmatpush1.msra.mxu0 %v1088
    %1319 = vmatprep.subr.mxu0 %v1095
    %1320 = vmatpush1.msra.mxu0 %v1094
    %1321 = vmatprep.subr.mxu0 %v1101
    %1322 = vmatpush1.msra.mxu0 %v1100
    %1323 = vmatprep.subr.mxu0 %v1107
    %1324 = vmatpush1.msra.mxu0 %v1106
    %1325 = vmatprep.subr.mxu0 %v1113
    %1326 = vmatpush1.msra.mxu0 %v1112
    %1327 = vmatprep.subr.mxu0 %v1119
    %1328 = vmatpush1.msra.mxu0 %v1118
    %1329 = vmatprep.subr.mxu0 %v1125
    %1330 = vmatpush1.msra.mxu0 %v1124
    %1331 = vmatprep.subr.mxu0 %v1131
    %1332 = vmatpush1.msra.mxu0 %v1130
    %1333 = vmatprep.subr.mxu0 %v1137
    %1334 = vmatpush1.msra.mxu0 %v1136
    %1335 = vmatprep.subr.mxu0 %v1143
    %1336 = vmatpush1.msra.mxu0 %v1142
    %1337 = vmatprep.subr.mxu0 %v1149
    %1338 = vmatpush1.msra.mxu0 %v1148
    %1339 = vmatprep.subr.mxu0 %v1155
    %1340 = vmatpush1.msra.mxu0 %v1154
    %1341 = vmatprep.subr.mxu0 %v1161
    %1342 = vmatpush1.msra.mxu0 %v1160
    %1343 = vmatprep.subr.mxu0 %v1167
    %1344 = vmatpush1.msra.mxu0 %v1166
    %1345 = vmatprep.subr.mxu0 %v1173
    %1346 = vmatpush1.msra.mxu0 %v1172
    %1347 = vmatprep.subr.mxu0 %v1179
    %1348 = vmatpush1.msra.mxu0 %v1178
    %1349 = vmatprep.subr.mxu0 %v1185
    %1350 = vmatpush1.msra.mxu0 %v1184
    %1351 = vmatprep.subr.mxu0 %v1191
    %1352 = vmatpush1.msra.mxu0 %v1190
    %1353 = vmatprep.subr.mxu0 %v1197
    %1354 = vmatpush1.msra.mxu0 %v1196
    %1355 = vmatprep.subr.mxu0 %v1203
    %1356 = vmatpush1.msra.mxu0 %v1202
    %1357 = vmatprep.subr.mxu0 %v1209
    %1358 = vmatpush1.msra.mxu0 %v1208
    %1359 = vmatprep.subr.mxu0 %v1215
    %1360 = vmatpush1.msra.mxu0 %v1214
    %1361 = vmatprep.subr.mxu0 %v1221
    %1362 = vmatpush1.msra.mxu0 %v1220
    %1363 = vmatprep.subr.mxu0 %v1227
    %1364 = vmatpush1.msra.mxu0 %v1226
    %1365 = vmatprep.mubr.f32.mxu0 %v1037
    %1366 = vmatmul.mubr.f32.gmra.mrb[0].mxu0 %v1036
    %v1367 = vpop.f32.mrb[0].mxu0
    %v1368 = vadd.f32 0.0, %v1367
    %v1369 = vpop.f32.mrb[0].mxu0
    %v1370 = vadd.f32 0.0, %v1369
    %1371 = vdwg.mxu0
    %1372 = vmatprep.subr.mxu0 %v1043
    %1373 = vmatpush1.msra.mxu0 %v1042
    %1374 = vmatprep.subr.mxu0 %v1049
    %1375 = vmatpush1.msra.mxu0 %v1048
    %1376 = vmatprep.subr.mxu0 %v1055
    %1377 = vmatpush1.msra.mxu0 %v1054
    %1378 = vmatprep.subr.mxu0 %v1061
    %1379 = vmatpush1.msra.mxu0 %v1060
    %1380 = vmatprep.subr.mxu0 %v1067
    %1381 = vmatpush1.msra.mxu0 %v1066
    %1382 = vmatprep.subr.mxu0 %v1073
    %1383 = vmatpush1.msra.mxu0 %v1072
    %1384 = vmatprep.subr.mxu0 %v1079
    %1385 = vmatpush1.msra.mxu0 %v1078
    %1386 = vmatprep.subr.mxu0 %v1085
    %1387 = vmatpush1.msra.mxu0 %v1084
    %1388 = vmatprep.subr.mxu0 %v1091
    %1389 = vmatpush1.msra.mxu0 %v1090
    %1390 = vmatprep.subr.mxu0 %v1097
    %1391 = vmatpush1.msra.mxu0 %v1096
    %1392 = vmatprep.subr.mxu0 %v1103
    %1393 = vmatpush1.msra.mxu0 %v1102
    %1394 = vmatprep.subr.mxu0 %v1109
    %1395 = vmatpush1.msra.mxu0 %v1108
    %1396 = vmatprep.subr.mxu0 %v1115
    %1397 = vmatpush1.msra.mxu0 %v1114
    %1398 = vmatprep.subr.mxu0 %v1121
    %1399 = vmatpush1.msra.mxu0 %v1120
    %1400 = vmatprep.subr.mxu0 %v1127
    %1401 = vmatpush1.msra.mxu0 %v1126
    %1402 = vmatprep.subr.mxu0 %v1133
    %1403 = vmatpush1.msra.mxu0 %v1132
    %1404 = vmatprep.subr.mxu0 %v1139
    %1405 = vmatpush1.msra.mxu0 %v1138
    %1406 = vmatprep.subr.mxu0 %v1145
    %1407 = vmatpush1.msra.mxu0 %v1144
    %1408 = vmatprep.subr.mxu0 %v1151
    %1409 = vmatpush1.msra.mxu0 %v1150
    %1410 = vmatprep.subr.mxu0 %v1157
    %1411 = vmatpush1.msra.mxu0 %v1156
    %1412 = vmatprep.subr.mxu0 %v1163
    %1413 = vmatpush1.msra.mxu0 %v1162
    %1414 = vmatprep.subr.mxu0 %v1169
    %1415 = vmatpush1.msra.mxu0 %v1168
    %1416 = vmatprep.subr.mxu0 %v1175
    %1417 = vmatpush1.msra.mxu0 %v1174
    %1418 = vmatprep.subr.mxu0 %v1181
    %1419 = vmatpush1.msra.mxu0 %v1180
    %1420 = vmatprep.subr.mxu0 %v1187
    %1421 = vmatpush1.msra.mxu0 %v1186
    %1422 = vmatprep.subr.mxu0 %v1193
    %1423 = vmatpush1.msra.mxu0 %v1192
    %1424 = vmatprep.subr.mxu0 %v1199
    %1425 = vmatpush1.msra.mxu0 %v1198
    %1426 = vmatprep.subr.mxu0 %v1205
    %1427 = vmatpush1.msra.mxu0 %v1204
    %1428 = vmatprep.subr.mxu0 %v1211
    %1429 = vmatpush1.msra.mxu0 %v1210
    %1430 = vmatprep.subr.mxu0 %v1217
    %1431 = vmatpush1.msra.mxu0 %v1216
    %1432 = vmatprep.subr.mxu0 %v1223
    %1433 = vmatpush1.msra.mxu0 %v1222
    %1434 = vmatprep.subr.mxu0 %v1229
    %1435 = vmatpush1.msra.mxu0 %v1228
    %1436 = vmatprep.mubr.f32.mxu0 %v1037
    %1437 = vmatmul.mubr.f32.gmra.mrb[0].mxu0 %v1036
    %v1438 = vpop.f32.mrb[0].mxu0
    %v1439 = vadd.f32 0.0, %v1438
    %v1440 = vpop.f32.mrb[0].mxu0
    %v1441 = vadd.f32 0.0, %v1440
    %1442 = vdwg.mxu0
    %v1445 = vunpack.c.l.s4 1966171168
    %v1446 = vunpack.c.0.s8 %v1445
    %v1447 = vlaneseq
    %v1448 = vshrl.u32 %v1447, 7
    %v1449 = vsub.s32 %v1446, %v1448
    %v1450 = vrot.slane %v1297, %v1449
    %v1451 = vcombine.high %v1450, %v1450
    %v1453 = vunpack.c.l.s4 1966171168
    %v1454 = vunpack.c.0.s8 %v1453
    %v1455 = vlaneseq
    %v1456 = vshrl.u32 %v1455, 7
    %v1457 = vsub.s32 %v1454, %v1456
    %v1458 = vrot.slane %v1450, %v1457
    %v1460 = vunpack.c.l.s4 1966171168
    %v1461 = vunpack.c.0.s8 %v1460
    %v1462 = vlaneseq
    %v1463 = vshrl.u32 %v1462, 7
    %v1464 = vsub.s32 %v1461, %v1463
    %v1465 = vrot.slane %v1451, %v1464
    %1468 = vst.msk [vmem:[#allocation4] sm:$0x1] %vm381, %v1458
    %1469 = vst.msk [vmem:[#allocation4 + $0x18] sm:$0x1] %vm381, %v1465
    %1470 = vrot.lane.b32.xlu0 %v1297, 32
    %v1471 = vpop.permute.xlu0 %1470
    %v1473 = vadd.f32 %v1297, %v1471
    %v1476 = vunpack.c.l.s4 1966171168
    %v1477 = vunpack.c.0.s8 %v1476
    %v1478 = vlaneseq
    %v1479 = vshrl.u32 %v1478, 7
    %v1480 = vsub.s32 %v1477, %v1479
    %v1481 = vrot.slane %v1473, %v1480
    %v1482 = vcombine.high %v1481, %v1481
    %v1484 = vunpack.c.l.s4 1966171168
    %v1485 = vunpack.c.0.s8 %v1484
    %v1486 = vlaneseq
    %v1487 = vshrl.u32 %v1486, 7
    %v1488 = vsub.s32 %v1485, %v1487
    %v1489 = vrot.slane %v1481, %v1488
    %v1491 = vunpack.c.l.s4 1966171168
    %v1492 = vunpack.c.0.s8 %v1491
    %v1493 = vlaneseq
    %v1494 = vshrl.u32 %v1493, 7
    %v1495 = vsub.s32 %v1492, %v1494
    %v1496 = vrot.slane %v1482, %v1495
    %v1497 = vlaneseq
    %v1498 = vshrl.u32 %v1497, 7
    %v1499 = vsub.s32 0, %v1498
    %v1500 = vrot.slane %v1489, %v1499
    %v1501 = vlaneseq
    %v1502 = vshrl.u32 %v1501, 7
    %v1503 = vsub.s32 0, %v1502
    %v1504 = vrot.slane %v1496, %v1503
    %1505 = vrot.lane.b32.xlu0 %v1500, 32
    %v1506 = vpop.permute.xlu0 %1505
    %1507 = vrot.lane.b32.xlu0 %v1504, 32
    %v1508 = vpop.permute.xlu0 %1507
    %1511 = vst.msk [vmem:[#allocation4 + $0x2] sm:$0x1] %vm381, %v1506
    %1512 = vst.msk [vmem:[#allocation4 + $0x1a] sm:$0x1] %vm381, %v1508
    %1514 = vrot.lane.b32.xlu0 %v1299, 32
    %v1515 = vpop.permute.xlu0 %1514
    %v1517 = vadd.f32 %v1299, %v1515
    %v1520 = vunpack.c.l.s4 1966171168
    %v1521 = vunpack.c.0.s8 %v1520
    %v1522 = vlaneseq
    %v1523 = vshrl.u32 %v1522, 7
    %v1524 = vsub.s32 %v1521, %v1523
    %v1525 = vrot.slane %v1517, %v1524
    %v1526 = vcombine.high %v1525, %v1525
    %v1528 = vunpack.c.l.s4 1966171168
    %v1529 = vunpack.c.0.s8 %v1528
    %v1530 = vlaneseq
    %v1531 = vshrl.u32 %v1530, 7
    %v1532 = vsub.s32 %v1529, %v1531
    %v1533 = vrot.slane %v1525, %v1532
    %v1535 = vunpack.c.l.s4 1966171168
    %v1536 = vunpack.c.0.s8 %v1535
    %v1537 = vlaneseq
    %v1538 = vshrl.u32 %v1537, 7
    %v1539 = vsub.s32 %v1536, %v1538
    %v1540 = vrot.slane %v1526, %v1539
    %v1541 = vlaneseq
    %v1542 = vshrl.u32 %v1541, 7
    %v1543 = vsub.s32 0, %v1542
    %v1544 = vrot.slane %v1533, %v1543
    %v1545 = vlaneseq
    %v1546 = vshrl.u32 %v1545, 7
    %v1547 = vsub.s32 0, %v1546
    %v1548 = vrot.slane %v1540, %v1547
    %1549 = vrot.lane.b32.xlu0 %v1544, 64
    %v1550 = vpop.permute.xlu0 %1549
    %1551 = vrot.lane.b32.xlu0 %v1548, 64
    %v1552 = vpop.permute.xlu0 %1551
    %1555 = vst.msk [vmem:[#allocation4 + $0x4] sm:$0x1] %vm381, %v1550
    %1556 = vst.msk [vmem:[#allocation4 + $0x1c] sm:$0x1] %vm381, %v1552
    %1558 = vrot.lane.b32.xlu0 %v1368, 32
    %v1559 = vpop.permute.xlu0 %1558
    %v1561 = vadd.f32 %v1368, %v1559
    %v1564 = vunpack.c.l.s4 1966171168
    %v1565 = vunpack.c.0.s8 %v1564
    %v1566 = vlaneseq
    %v1567 = vshrl.u32 %v1566, 7
    %v1568 = vsub.s32 %v1565, %v1567
    %v1569 = vrot.slane %v1561, %v1568
    %v1570 = vcombine.high %v1569, %v1569
    %v1572 = vunpack.c.l.s4 1966171168
    %v1573 = vunpack.c.0.s8 %v1572
    %v1574 = vlaneseq
    %v1575 = vshrl.u32 %v1574, 7
    %v1576 = vsub.s32 %v1573, %v1575
    %v1577 = vrot.slane %v1569, %v1576
    %v1579 = vunpack.c.l.s4 1966171168
    %v1580 = vunpack.c.0.s8 %v1579
    %v1581 = vlaneseq
    %v1582 = vshrl.u32 %v1581, 7
    %v1583 = vsub.s32 %v1580, %v1582
    %v1584 = vrot.slane %v1570, %v1583
    %v1585 = vlaneseq
    %v1586 = vshrl.u32 %v1585, 7
    %v1587 = vsub.s32 0, %v1586
    %v1588 = vrot.slane %v1577, %v1587
    %v1589 = vlaneseq
    %v1590 = vshrl.u32 %v1589, 7
    %v1591 = vsub.s32 0, %v1590
    %v1592 = vrot.slane %v1584, %v1591
    %1593 = vrot.lane.b32.xlu0 %v1588, 96
    %v1594 = vpop.permute.xlu0 %1593
    %1595 = vrot.lane.b32.xlu0 %v1592, 96
    %v1596 = vpop.permute.xlu0 %1595
    %1599 = vst.msk [vmem:[#allocation4 + $0x6] sm:$0x1] %vm381, %v1594
    %1600 = vst.msk [vmem:[#allocation4 + $0x1e] sm:$0x1] %vm381, %v1596
    %v1601 = vadd.f32 %v1370, %v1559
    %v1604 = vunpack.c.l.s4 1966171168
    %v1605 = vunpack.c.0.s8 %v1604
    %v1606 = vlaneseq
    %v1607 = vshrl.u32 %v1606, 7
    %v1608 = vsub.s32 %v1605, %v1607
    %v1609 = vrot.slane %v1601, %v1608
    %v1610 = vcombine.high %v1609, %v1609
    %v1612 = vunpack.c.l.s4 1966171168
    %v1613 = vunpack.c.0.s8 %v1612
    %v1614 = vlaneseq
    %v1615 = vshrl.u32 %v1614, 7
    %v1616 = vsub.s32 %v1613, %v1615
    %v1617 = vrot.slane %v1609, %v1616
    %v1619 = vunpack.c.l.s4 1966171168
    %v1620 = vunpack.c.0.s8 %v1619
    %v1621 = vlaneseq
    %v1622 = vshrl.u32 %v1621, 7
    %v1623 = vsub.s32 %v1620, %v1622
    %v1624 = vrot.slane %v1610, %v1623
    %1627 = vst.msk [vmem:[#allocation4 + $0x8] sm:$0x1] %vm381, %v1617
    %1628 = vst.msk [vmem:[#allocation4 + $0x20] sm:$0x1] %vm381, %v1624
    %1630 = vrot.lane.b32.xlu0 %v1370, 32
    %v1631 = vpop.permute.xlu0 %1630
    %v1633 = vadd.f32 %v1370, %v1631
    %v1636 = vunpack.c.l.s4 1966171168
    %v1637 = vunpack.c.0.s8 %v1636
    %v1638 = vlaneseq
    %v1639 = vshrl.u32 %v1638, 7
    %v1640 = vsub.s32 %v1637, %v1639
    %v1641 = vrot.slane %v1633, %v1640
    %v1642 = vcombine.high %v1641, %v1641
    %v1644 = vunpack.c.l.s4 1966171168
    %v1645 = vunpack.c.0.s8 %v1644
    %v1646 = vlaneseq
    %v1647 = vshrl.u32 %v1646, 7
    %v1648 = vsub.s32 %v1645, %v1647
    %v1649 = vrot.slane %v1641, %v1648
    %v1651 = vunpack.c.l.s4 1966171168
    %v1652 = vunpack.c.0.s8 %v1651
    %v1653 = vlaneseq
    %v1654 = vshrl.u32 %v1653, 7
    %v1655 = vsub.s32 %v1652, %v1654
    %v1656 = vrot.slane %v1642, %v1655
    %v1657 = vlaneseq
    %v1658 = vshrl.u32 %v1657, 7
    %v1659 = vsub.s32 0, %v1658
    %v1660 = vrot.slane %v1649, %v1659
    %v1661 = vlaneseq
    %v1662 = vshrl.u32 %v1661, 7
    %v1663 = vsub.s32 0, %v1662
    %v1664 = vrot.slane %v1656, %v1663
    %1665 = vrot.lane.b32.xlu0 %v1660, 32
    %v1666 = vpop.permute.xlu0 %1665
    %1667 = vrot.lane.b32.xlu0 %v1664, 32
    %v1668 = vpop.permute.xlu0 %1667
    %1671 = vst.msk [vmem:[#allocation4 + $0xa] sm:$0x1] %vm381, %v1666
    %1672 = vst.msk [vmem:[#allocation4 + $0x22] sm:$0x1] %vm381, %v1668
    %1674 = vrot.lane.b32.xlu0 %v1439, 32
    %v1675 = vpop.permute.xlu0 %1674
    %v1677 = vadd.f32 %v1439, %v1675
    %v1680 = vunpack.c.l.s4 1966171168
    %v1681 = vunpack.c.0.s8 %v1680
    %v1682 = vlaneseq
    %v1683 = vshrl.u32 %v1682, 7
    %v1684 = vsub.s32 %v1681, %v1683
    %v1685 = vrot.slane %v1677, %v1684
    %v1686 = vcombine.high %v1685, %v1685
    %v1688 = vunpack.c.l.s4 1966171168
    %v1689 = vunpack.c.0.s8 %v1688
    %v1690 = vlaneseq
    %v1691 = vshrl.u32 %v1690, 7
    %v1692 = vsub.s32 %v1689, %v1691
    %v1693 = vrot.slane %v1685, %v1692
    %v1695 = vunpack.c.l.s4 1966171168
    %v1696 = vunpack.c.0.s8 %v1695
    %v1697 = vlaneseq
    %v1698 = vshrl.u32 %v1697, 7
    %v1699 = vsub.s32 %v1696, %v1698
    %v1700 = vrot.slane %v1686, %v1699
    %v1701 = vlaneseq
    %v1702 = vshrl.u32 %v1701, 7
    %v1703 = vsub.s32 0, %v1702
    %v1704 = vrot.slane %v1693, %v1703
    %v1705 = vlaneseq
    %v1706 = vshrl.u32 %v1705, 7
    %v1707 = vsub.s32 0, %v1706
    %v1708 = vrot.slane %v1700, %v1707
    %1709 = vrot.lane.b32.xlu0 %v1704, 64
    %v1710 = vpop.permute.xlu0 %1709
    %1711 = vrot.lane.b32.xlu0 %v1708, 64
    %v1712 = vpop.permute.xlu0 %1711
    %1715 = vst.msk [vmem:[#allocation4 + $0xc] sm:$0x1] %vm381, %v1710
    %1716 = vst.msk [vmem:[#allocation4 + $0x24] sm:$0x1] %vm381, %v1712
    %1718 = vrot.lane.b32.xlu0 %v1441, 32
    %v1719 = vpop.permute.xlu0 %1718
    %v1721 = vadd.f32 %v1441, %v1719
    %v1724 = vunpack.c.l.s4 1966171168
    %v1725 = vunpack.c.0.s8 %v1724
    %v1726 = vlaneseq
    %v1727 = vshrl.u32 %v1726, 7
    %v1728 = vsub.s32 %v1725, %v1727
    %v1729 = vrot.slane %v1721, %v1728
    %v1730 = vcombine.high %v1729, %v1729
    %v1732 = vunpack.c.l.s4 1966171168
    %v1733 = vunpack.c.0.s8 %v1732
    %v1734 = vlaneseq
    %v1735 = vshrl.u32 %v1734, 7
    %v1736 = vsub.s32 %v1733, %v1735
    %v1737 = vrot.slane %v1729, %v1736
    %v1739 = vunpack.c.l.s4 1966171168
    %v1740 = vunpack.c.0.s8 %v1739
    %v1741 = vlaneseq
    %v1742 = vshrl.u32 %v1741, 7
    %v1743 = vsub.s32 %v1740, %v1742
    %v1744 = vrot.slane %v1730, %v1743
    %v1745 = vlaneseq
    %v1746 = vshrl.u32 %v1745, 7
    %v1747 = vsub.s32 0, %v1746
    %v1748 = vrot.slane %v1737, %v1747
    %v1749 = vlaneseq
    %v1750 = vshrl.u32 %v1749, 7
    %v1751 = vsub.s32 0, %v1750
    %v1752 = vrot.slane %v1744, %v1751
    %1753 = vrot.lane.b32.xlu0 %v1748, 96
    %v1754 = vpop.permute.xlu0 %1753
    %1755 = vrot.lane.b32.xlu0 %v1752, 96
    %v1756 = vpop.permute.xlu0 %1755
    %1759 = vst.msk [vmem:[#allocation4 + $0xe] sm:$0x1] %vm381, %v1754
    %1760 = vst.msk [vmem:[#allocation4 + $0x26] sm:$0x1] %vm381, %v1756
    %v1762 = vunpack.c.l.s4 1966171168
    %v1763 = vunpack.c.0.s8 %v1762
    %v1764 = vlaneseq
    %v1765 = vshrl.u32 %v1764, 7
    %v1766 = vsub.s32 %v1763, %v1765
    %v1767 = vrot.slane %v1441, %v1766
    %v1768 = vcombine.high %v1767, %v1767
    %v1770 = vunpack.c.l.s4 1966171168
    %v1771 = vunpack.c.0.s8 %v1770
    %v1772 = vlaneseq
    %v1773 = vshrl.u32 %v1772, 7
    %v1774 = vsub.s32 %v1771, %v1773
    %v1775 = vrot.slane %v1767, %v1774
    %v1777 = vunpack.c.l.s4 1966171168
    %v1778 = vunpack.c.0.s8 %v1777
    %v1779 = vlaneseq
    %v1780 = vshrl.u32 %v1779, 7
    %v1781 = vsub.s32 %v1778, %v1780
    %v1782 = vrot.slane %v1768, %v1781
    %v1783 = vlaneseq
    %v1784 = vshrl.u32 %v1783, 7
    %v1785 = vsub.s32 0, %v1784
    %v1786 = vrot.slane %v1775, %v1785
    %v1787 = vlaneseq
    %v1788 = vshrl.u32 %v1787, 7
    %v1789 = vsub.s32 0, %v1788
    %v1790 = vrot.slane %v1782, %v1789
    %1791 = vrot.lane.b32.xlu0 %v1786, 32
    %v1792 = vpop.permute.xlu0 %1791
    %1793 = vrot.lane.b32.xlu0 %v1790, 32
    %v1794 = vpop.permute.xlu0 %1793
    %1797 = vst.msk [vmem:[#allocation4 + $0x10] sm:$0x1] %vm381, %v1792
    %1798 = vst.msk [vmem:[#allocation4 + $0x28] sm:$0x1] %vm381, %v1794
    %v1799 = vlaneseq
    %v1800 = vshrl.u32 %v1799, 7
    %v1801 = vsub.s32 0, %v1800
    %v1802 = vrot.slane %v1458, %v1801
    %v1803 = vlaneseq
    %v1804 = vshrl.u32 %v1803, 7
    %v1805 = vsub.s32 0, %v1804
    %v1806 = vrot.slane %v1465, %v1805
    %1807 = vrot.lane.b32.xlu0 %v1802, 96
    %v1808 = vpop.permute.xlu0 %1807
    %1809 = vrot.lane.b32.xlu0 %v1806, 96
    %v1810 = vpop.permute.xlu0 %1809
    %1813 = vst.msk [vmem:[#allocation4 + $0x1] sm:$0x1] %vm381, %v1808
    %1814 = vst.msk [vmem:[#allocation4 + $0x19] sm:$0x1] %vm381, %v1810
    %v1816 = vunpack.c.l.s4 1966171168
    %v1817 = vunpack.c.0.s8 %v1816
    %v1818 = vlaneseq
    %v1819 = vshrl.u32 %v1818, 7
    %v1820 = vsub.s32 %v1817, %v1819
    %v1821 = vrot.slane %v1299, %v1820
    %v1822 = vcombine.high %v1821, %v1821
    %v1824 = vunpack.c.l.s4 1966171168
    %v1825 = vunpack.c.0.s8 %v1824
    %v1826 = vlaneseq
    %v1827 = vshrl.u32 %v1826, 7
    %v1828 = vsub.s32 %v1825, %v1827
    %v1829 = vrot.slane %v1821, %v1828
    %v1831 = vunpack.c.l.s4 1966171168
    %v1832 = vunpack.c.0.s8 %v1831
    %v1833 = vlaneseq
    %v1834 = vshrl.u32 %v1833, 7
    %v1835 = vsub.s32 %v1832, %v1834
    %v1836 = vrot.slane %v1822, %v1835
    %1839 = vst.msk [vmem:[#allocation4 + $0x3] sm:$0x1] %vm381, %v1829
    %1840 = vst.msk [vmem:[#allocation4 + $0x1b] sm:$0x1] %vm381, %v1836
    %v1841 = vlaneseq
    %v1842 = vshrl.u32 %v1841, 7
    %v1843 = vsub.s32 0, %v1842
    %v1844 = vrot.slane %v1829, %v1843
    %v1845 = vlaneseq
    %v1846 = vshrl.u32 %v1845, 7
    %v1847 = vsub.s32 0, %v1846
    %v1848 = vrot.slane %v1836, %v1847
    %1849 = vrot.lane.b32.xlu0 %v1844, 32
    %v1850 = vpop.permute.xlu0 %1849
    %1851 = vrot.lane.b32.xlu0 %v1848, 32
    %v1852 = vpop.permute.xlu0 %1851
    %1855 = vst.msk [vmem:[#allocation4 + $0x5] sm:$0x1] %vm381, %v1850
    %1856 = vst.msk [vmem:[#allocation4 + $0x1d] sm:$0x1] %vm381, %v1852
    %v1858 = vunpack.c.l.s4 1966171168
    %v1859 = vunpack.c.0.s8 %v1858
    %v1860 = vlaneseq
    %v1861 = vshrl.u32 %v1860, 7
    %v1862 = vsub.s32 %v1859, %v1861
    %v1863 = vrot.slane %v1368, %v1862
    %v1864 = vcombine.high %v1863, %v1863
    %v1866 = vunpack.c.l.s4 1966171168
    %v1867 = vunpack.c.0.s8 %v1866
    %v1868 = vlaneseq
    %v1869 = vshrl.u32 %v1868, 7
    %v1870 = vsub.s32 %v1867, %v1869
    %v1871 = vrot.slane %v1863, %v1870
    %v1873 = vunpack.c.l.s4 1966171168
    %v1874 = vunpack.c.0.s8 %v1873
    %v1875 = vlaneseq
    %v1876 = vshrl.u32 %v1875, 7
    %v1877 = vsub.s32 %v1874, %v1876
    %v1878 = vrot.slane %v1864, %v1877
    %v1879 = vlaneseq
    %v1880 = vshrl.u32 %v1879, 7
    %v1881 = vsub.s32 0, %v1880
    %v1882 = vrot.slane %v1871, %v1881
    %v1883 = vlaneseq
    %v1884 = vshrl.u32 %v1883, 7
    %v1885 = vsub.s32 0, %v1884
    %v1886 = vrot.slane %v1878, %v1885
    %1887 = vrot.lane.b32.xlu0 %v1882, 64
    %v1888 = vpop.permute.xlu0 %1887
    %1889 = vrot.lane.b32.xlu0 %v1886, 64
    %v1890 = vpop.permute.xlu0 %1889
    %1893 = vst.msk [vmem:[#allocation4 + $0x7] sm:$0x1] %vm381, %v1888
    %1894 = vst.msk [vmem:[#allocation4 + $0x1f] sm:$0x1] %vm381, %v1890
    %v1896 = vunpack.c.l.s4 1966171168
    %v1897 = vunpack.c.0.s8 %v1896
    %v1898 = vlaneseq
    %v1899 = vshrl.u32 %v1898, 7
    %v1900 = vsub.s32 %v1897, %v1899
    %v1901 = vrot.slane %v1370, %v1900
    %v1902 = vcombine.high %v1901, %v1901
    %v1904 = vunpack.c.l.s4 1966171168
    %v1905 = vunpack.c.0.s8 %v1904
    %v1906 = vlaneseq
    %v1907 = vshrl.u32 %v1906, 7
    %v1908 = vsub.s32 %v1905, %v1907
    %v1909 = vrot.slane %v1901, %v1908
    %v1911 = vunpack.c.l.s4 1966171168
    %v1912 = vunpack.c.0.s8 %v1911
    %v1913 = vlaneseq
    %v1914 = vshrl.u32 %v1913, 7
    %v1915 = vsub.s32 %v1912, %v1914
    %v1916 = vrot.slane %v1902, %v1915
    %v1917 = vlaneseq
    %v1918 = vshrl.u32 %v1917, 7
    %v1919 = vsub.s32 0, %v1918
    %v1920 = vrot.slane %v1909, %v1919
    %v1921 = vlaneseq
    %v1922 = vshrl.u32 %v1921, 7
    %v1923 = vsub.s32 0, %v1922
    %v1924 = vrot.slane %v1916, %v1923
    %1925 = vrot.lane.b32.xlu0 %v1920, 96
    %v1926 = vpop.permute.xlu0 %1925
    %1927 = vrot.lane.b32.xlu0 %v1924, 96
    %v1928 = vpop.permute.xlu0 %1927
    %1931 = vst.msk [vmem:[#allocation4 + $0x9] sm:$0x1] %vm381, %v1926
    %1932 = vst.msk [vmem:[#allocation4 + $0x21] sm:$0x1] %vm381, %v1928
    %v1934 = vunpack.c.l.s4 1966171168
    %v1935 = vunpack.c.0.s8 %v1934
    %v1936 = vlaneseq
    %v1937 = vshrl.u32 %v1936, 7
    %v1938 = vsub.s32 %v1935, %v1937
    %v1939 = vrot.slane %v1439, %v1938
    %v1940 = vcombine.high %v1939, %v1939
    %v1942 = vunpack.c.l.s4 1966171168
    %v1943 = vunpack.c.0.s8 %v1942
    %v1944 = vlaneseq
    %v1945 = vshrl.u32 %v1944, 7
    %v1946 = vsub.s32 %v1943, %v1945
    %v1947 = vrot.slane %v1939, %v1946
    %v1949 = vunpack.c.l.s4 1966171168
    %v1950 = vunpack.c.0.s8 %v1949
    %v1951 = vlaneseq
    %v1952 = vshrl.u32 %v1951, 7
    %v1953 = vsub.s32 %v1950, %v1952
    %v1954 = vrot.slane %v1940, %v1953
    %1957 = vst.msk [vmem:[#allocation4 + $0xb] sm:$0x1] %vm381, %v1947
    %1958 = vst.msk [vmem:[#allocation4 + $0x23] sm:$0x1] %vm381, %v1954
    %v1959 = vlaneseq
    %v1960 = vshrl.u32 %v1959, 7
    %v1961 = vsub.s32 0, %v1960
    %v1962 = vrot.slane %v1947, %v1961
    %v1963 = vlaneseq
    %v1964 = vshrl.u32 %v1963, 7
    %v1965 = vsub.s32 0, %v1964
    %v1966 = vrot.slane %v1954, %v1965
    %1967 = vrot.lane.b32.xlu0 %v1962, 32
    %v1968 = vpop.permute.xlu0 %1967
    %1969 = vrot.lane.b32.xlu0 %v1966, 32
    %v1970 = vpop.permute.xlu0 %1969
    %1973 = vst.msk [vmem:[#allocation4 + $0xd] sm:$0x1] %vm381, %v1968
    %1974 = vst.msk [vmem:[#allocation4 + $0x25] sm:$0x1] %vm381, %v1970
    %1975 = vrot.lane.b32.xlu0 %v1786, 64
    %v1976 = vpop.permute.xlu0 %1975
    %1977 = vrot.lane.b32.xlu0 %v1790, 64
    %v1978 = vpop.permute.xlu0 %1977
    %1981 = vst.msk [vmem:[#allocation4 + $0xf] sm:$0x1] %vm381, %v1976
    %1982 = vst.msk [vmem:[#allocation4 + $0x27] sm:$0x1] %vm381, %v1978
    %v1983 = vld [vmem:[#allocation4] sm:$0xff]
    %v1984 = vld [vmem:[#allocation4 + $0x8] sm:$0xff]
    %v1985 = vld [vmem:[#allocation4 + $0x10] sm:$0x1]
    %v1986 = vld [vmem:[#allocation4 + $0x18] sm:$0xff]
    %v1987 = vld [vmem:[#allocation4 + $0x20] sm:$0xff]
    %v1988 = vld [vmem:[#allocation4 + $0x28] sm:$0x1]
    %v1989 = vld [vmem:[#allocation19] sm:$0x1]
    %v1991 = vlaneseq
    %v1992 = vshrl.u32 %v1991, 7
    %v1993 = vsub.s32 0, %v1992
    %v1994 = vrot.slane %v1989, %v1993
    %v1996 = vadd.f32 %v1983, %v1994
    %v1997 = vadd.f32 %v1984, %v1994
    %v1998 = vadd.f32 %v1985, %v1994
    %v1999 = vadd.f32 %v1986, %v1994
    %v2000 = vadd.f32 %v1987, %v1994
    %v2001 = vadd.f32 %v1988, %v1994
    %v2002 = vmax.f32 %v1996, 0.0
    %v2003 = vmax.f32 %v1997, 0.0
    %v2004 = vmax.f32 %v1998, 0.0
    %v2005 = vmax.f32 %v1999, 0.0
    %v2006 = vmax.f32 %v2000, 0.0
    %v2007 = vmax.f32 %v2001, 0.0
    %v2008 = vld [vmem:[%s17] sm:$0xff]
    %v2009 = vld [vmem:[%s17 + $0x8] sm:$0xff]
    %v2010 = vld [vmem:[%s17 + $0x10] sm:$0xff]
    %v2011 = vld [vmem:[%s17 + $0x18] sm:$0xff]
    %v2012 = vld [vmem:[#allocation20] sm:$0x1]
    %v2014 = vlaneseq
    %v2015 = vshrl.u32 %v2014, 7
    %v2016 = vsub.s32 0, %v2015
    %v2017 = vrot.slane %v2012, %v2016
    %v2020 = vsel %vm453, %v2002, 0
    %v2023 = vsel %vm453, %v2003, 0
    %v2026 = vsel %vm453, %v2004, 0
    %2028 = vmatprep.subr.mxu0 0.0
    %2029 = vmatpush1.msra.mxu0 %v2008
    %2030 = vmatprep.subr.mxu0 0.0
    %2031 = vmatpush1.msra.mxu0 %v2009
    %2032 = vmatprep.subr.mxu0 0.0
    %2033 = vmatpush1.msra.mxu0 %v2010
    %2034 = vmatprep.subr.mxu0 0.0
    %2035 = vmatpush1.msra.mxu0 %v2011
    %2036 = vmatprep.subr.mxu0 0.0
    %2037 = vmatpush1.msra.mxu0 0.0
    %2038 = vmatprep.subr.mxu0 0.0
    %2039 = vmatpush1.msra.mxu0 0.0
    %2040 = vmatprep.subr.mxu0 0.0
    %2041 = vmatpush1.msra.mxu0 0.0
    %2042 = vmatprep.subr.mxu0 0.0
    %2043 = vmatpush1.msra.mxu0 0.0
    %2044 = vmatprep.subr.mxu0 0.0
    %2045 = vmatpush1.msra.mxu0 0.0
    %2046 = vmatprep.subr.mxu0 0.0
    %2047 = vmatpush1.msra.mxu0 0.0
    %2048 = vmatprep.subr.mxu0 0.0
    %2049 = vmatpush1.msra.mxu0 0.0
    %2050 = vmatprep.subr.mxu0 0.0
    %2051 = vmatpush1.msra.mxu0 0.0
    %2052 = vmatprep.subr.mxu0 0.0
    %2053 = vmatpush1.msra.mxu0 0.0
    %2054 = vmatprep.subr.mxu0 0.0
    %2055 = vmatpush1.msra.mxu0 0.0
    %2056 = vmatprep.subr.mxu0 0.0
    %2057 = vmatpush1.msra.mxu0 0.0
    %2058 = vmatprep.subr.mxu0 0.0
    %2059 = vmatpush1.msra.mxu0 0.0
    %2060 = vmatprep.subr.mxu0 0.0
    %2061 = vmatpush1.msra.mxu0 0.0
    %2062 = vmatprep.subr.mxu0 0.0
    %2063 = vmatpush1.msra.mxu0 0.0
    %2064 = vmatprep.subr.mxu0 0.0
    %2065 = vmatpush1.msra.mxu0 0.0
    %2066 = vmatprep.subr.mxu0 0.0
    %2067 = vmatpush1.msra.mxu0 0.0
    %2068 = vmatprep.subr.mxu0 0.0
    %2069 = vmatpush1.msra.mxu0 0.0
    %2070 = vmatprep.subr.mxu0 0.0
    %2071 = vmatpush1.msra.mxu0 0.0
    %2072 = vmatprep.subr.mxu0 0.0
    %2073 = vmatpush1.msra.mxu0 0.0
    %2074 = vmatprep.subr.mxu0 0.0
    %2075 = vmatpush1.msra.mxu0 0.0
    %2076 = vmatprep.subr.mxu0 0.0
    %2077 = vmatpush1.msra.mxu0 0.0
    %2078 = vmatprep.subr.mxu0 0.0
    %2079 = vmatpush1.msra.mxu0 0.0
    %2080 = vmatprep.subr.mxu0 0.0
    %2081 = vmatpush1.msra.mxu0 0.0
    %2082 = vmatprep.subr.mxu0 0.0
    %2083 = vmatpush1.msra.mxu0 0.0
    %2084 = vmatprep.subr.mxu0 0.0
    %2085 = vmatpush1.msra.mxu0 0.0
    %2086 = vmatprep.subr.mxu0 0.0
    %2087 = vmatpush1.msra.mxu0 0.0
    %2088 = vmatprep.subr.mxu0 0.0
    %2089 = vmatpush1.msra.mxu0 0.0
    %2090 = vmatprep.subr.mxu0 0.0
    %2091 = vmatpush1.msra.mxu0 0.0
    %2092 = vmatprep.mubr.f32.mxu0 0.0
    %2093 = vmatmul.mubr.f32.gmra.mrb[0].mxu0 %v2020
    %v2094 = vpop.f32.mrb[0].mxu0
    %v2095 = vadd.f32 %v2017, %v2094
    %v2096 = vpop.f32.mrb[0].mxu0
    %2097 = vmatprep.mubr.f32.mxu0 0.0
    %2098 = vmatmul.mubr.f32.gmra.mrb[0].mxu0 %v2023
    %v2099 = vpop.f32.mrb[0].mxu0
    %v2100 = vadd.f32 %v2017, %v2099
    %v2101 = vpop.f32.mrb[0].mxu0
    %2102 = vmatprep.mubr.f32.mxu0 0.0
    %2103 = vmatmul.mubr.f32.gmra.mrb[0].mxu0 %v2026
    %v2104 = vpop.f32.mrb[0].mxu0
    %v2105 = vadd.f32 %v2017, %v2104
    %v2106 = vpop.f32.mrb[0].mxu0
    %2107 = vdwg.mxu0
    %2108 = vst.msk [vmem:[%s19] sm:$0xff] %vm194, %v2095
    %2109 = vst.msk [vmem:[%s19 + $0x8] sm:$0xff] %vm194, %v2100
    %2110 = vst.msk [vmem:[%s19 + $0x10] sm:$0x1] %vm185, %v2105
    %v2111 = vld [vmem:[%s17] sm:$0xff]
    %v2112 = vld [vmem:[%s17 + $0x8] sm:$0xff]
    %v2113 = vld [vmem:[%s17 + $0x10] sm:$0xff]
    %v2114 = vld [vmem:[%s17 + $0x18] sm:$0xff]
    %v2115 = vld [vmem:[#allocation20] sm:$0x1]
    %v2117 = vlaneseq
    %v2118 = vshrl.u32 %v2117, 7
    %v2119 = vsub.s32 0, %v2118
    %v2120 = vrot.slane %v2115, %v2119
    %v2123 = vsel %vm453, %v2005, 0
    %v2126 = vsel %vm453, %v2006, 0
    %v2129 = vsel %vm453, %v2007, 0
    %2131 = vmatprep.subr.mxu0 0.0
    %2132 = vmatpush1.msra.mxu0 %v2111
    %2133 = vmatprep.subr.mxu0 0.0
    %2134 = vmatpush1.msra.mxu0 %v2112
    %2135 = vmatprep.subr.mxu0 0.0
    %2136 = vmatpush1.msra.mxu0 %v2113
    %2137 = vmatprep.subr.mxu0 0.0
    %2138 = vmatpush1.msra.mxu0 %v2114
    %2139 = vmatprep.subr.mxu0 0.0
    %2140 = vmatpush1.msra.mxu0 0.0
    %2141 = vmatprep.subr.mxu0 0.0
    %2142 = vmatpush1.msra.mxu0 0.0
    %2143 = vmatprep.subr.mxu0 0.0
    %2144 = vmatpush1.msra.mxu0 0.0
    %2145 = vmatprep.subr.mxu0 0.0
    %2146 = vmatpush1.msra.mxu0 0.0
    %2147 = vmatprep.subr.mxu0 0.0
    %2148 = vmatpush1.msra.mxu0 0.0
    %2149 = vmatprep.subr.mxu0 0.0
    %2150 = vmatpush1.msra.mxu0 0.0
    %2151 = vmatprep.subr.mxu0 0.0
    %2152 = vmatpush1.msra.mxu0 0.0
    %2153 = vmatprep.subr.mxu0 0.0
    %2154 = vmatpush1.msra.mxu0 0.0
    %2155 = vmatprep.subr.mxu0 0.0
    %2156 = vmatpush1.msra.mxu0 0.0
    %2157 = vmatprep.subr.mxu0 0.0
    %2158 = vmatpush1.msra.mxu0 0.0
    %2159 = vmatprep.subr.mxu0 0.0
    %2160 = vmatpush1.msra.mxu0 0.0
    %2161 = vmatprep.subr.mxu0 0.0
    %2162 = vmatpush1.msra.mxu0 0.0
    %2163 = vmatprep.subr.mxu0 0.0
    %2164 = vmatpush1.msra.mxu0 0.0
    %2165 = vmatprep.subr.mxu0 0.0
    %2166 = vmatpush1.msra.mxu0 0.0
    %2167 = vmatprep.subr.mxu0 0.0
    %2168 = vmatpush1.msra.mxu0 0.0
    %2169 = vmatprep.subr.mxu0 0.0
    %2170 = vmatpush1.msra.mxu0 0.0
    %2171 = vmatprep.subr.mxu0 0.0
    %2172 = vmatpush1.msra.mxu0 0.0
    %2173 = vmatprep.subr.mxu0 0.0
    %2174 = vmatpush1.msra.mxu0 0.0
    %2175 = vmatprep.subr.mxu0 0.0
    %2176 = vmatpush1.msra.mxu0 0.0
    %2177 = vmatprep.subr.mxu0 0.0
    %2178 = vmatpush1.msra.mxu0 0.0
    %2179 = vmatprep.subr.mxu0 0.0
    %2180 = vmatpush1.msra.mxu0 0.0
    %2181 = vmatprep.subr.mxu0 0.0
    %2182 = vmatpush1.msra.mxu0 0.0
    %2183 = vmatprep.subr.mxu0 0.0
    %2184 = vmatpush1.msra.mxu0 0.0
    %2185 = vmatprep.subr.mxu0 0.0
    %2186 = vmatpush1.msra.mxu0 0.0
    %2187 = vmatprep.subr.mxu0 0.0
    %2188 = vmatpush1.msra.mxu0 0.0
    %2189 = vmatprep.subr.mxu0 0.0
    %2190 = vmatpush1.msra.mxu0 0.0
    %2191 = vmatprep.subr.mxu0 0.0
    %2192 = vmatpush1.msra.mxu0 0.0
    %2193 = vmatprep.subr.mxu0 0.0
    %2194 = vmatpush1.msra.mxu0 0.0
    %2195 = vmatprep.mubr.f32.mxu0 0.0
    %2196 = vmatmul.mubr.f32.gmra.mrb[0].mxu0 %v2123
    %v2197 = vpop.f32.mrb[0].mxu0
    %v2198 = vadd.f32 %v2120, %v2197
    %v2199 = vpop.f32.mrb[0].mxu0
    %2200 = vmatprep.mubr.f32.mxu0 0.0
    %2201 = vmatmul.mubr.f32.gmra.mrb[0].mxu0 %v2126
    %v2202 = vpop.f32.mrb[0].mxu0
    %v2203 = vadd.f32 %v2120, %v2202
    %v2204 = vpop.f32.mrb[0].mxu0
    %2205 = vmatprep.mubr.f32.mxu0 0.0
    %2206 = vmatmul.mubr.f32.gmra.mrb[0].mxu0 %v2129
    %v2207 = vpop.f32.mrb[0].mxu0
    %v2208 = vadd.f32 %v2120, %v2207
    %v2209 = vpop.f32.mrb[0].mxu0
    %2210 = vdwg.mxu0
    %s2211 = scalar_lea.vmem %s19, 24
    %2212 = vst.msk [vmem:[%s2211] sm:$0xff] %vm194, %v2198
    %2213 = vst.msk [vmem:[%s2211 + $0x8] sm:$0xff] %vm194, %v2203
    %2214 = vst.msk [vmem:[%s2211 + $0x10] sm:$0x1] %vm185, %v2208
    // Predicated region
    $region118: #{vae_forward.1} parent=1 // pred_check
      _
    $region119: #{vae_forward.1} parent=1 // pred_check_branch
      %2216 = sbr.rel (0) target = $region121
    $region120: #{vae_forward.1} parent=1 // pred_region
      _
    $region121: #{vae_forward.1} parent=1 // pred_fallthru
      _
    // Predicated region
    $region122: #{vae_forward.1} parent=1 // pred_check
      _
    $region123: #{vae_forward.1} parent=1 // pred_check_branch
      %2218 = sbr.rel (0) target = $region125
    $region124: #{vae_forward.1} parent=1 // pred_region
      %s2220 = ssub.s32 32, 32
      %2221 = vsyncadd [#allocation7], %s2220
      %s2223 = sshll.u32 [#allocation22], 4
      %s2224 = int_to_ptr.vmem [resolvable:$true] %s2223
      %2226 = dma.vmem_to_hbm [thread:$0]  %s2224, 32, %s20, [#allocation7]
    $region125: #{vae_forward.1} parent=1 // pred_fallthru
      _
    // Predicated region
    $region126: #{vae_forward.1} parent=1 // pred_check
      _
    $region127: #{vae_forward.1} parent=1 // pred_check_branch
      %2228 = sbr.rel (0) target = $region129
    $region128: #{vae_forward.1} parent=1 // pred_region
      %s2230 = ssub.s32 32, 32
      %2231 = vsyncadd [#allocation24], %s2230
      %s2233 = sshll.u32 [#allocation23], 4
      %s2234 = int_to_ptr.vmem [resolvable:$true] %s2233
      %2236 = dma.vmem_to_hbm [thread:$0]  %s2234, 32, %s21, [#allocation24]
    $region129: #{vae_forward.1} parent=1 // pred_fallthru
      _
    // Predicated region
    $region130: #{vae_forward.1} parent=1 // pred_check
      _
    $region131: #{vae_forward.1} parent=1 // pred_check_branch
      %2238 = sbr.rel (0) target = $region133
    $region132: #{vae_forward.1} parent=1 // pred_region
      _
    $region133: #{vae_forward.1} parent=1 // pred_fallthru
      _
    // Predicated region
    $region134: #{vae_forward.1} parent=1 // pred_check
      _
    $region135: #{vae_forward.1} parent=1 // pred_check_branch
      %2240 = sbr.rel (0) target = $region137
    $region136: #{vae_forward.1} parent=1 // pred_region
      %2241 = dma.done [#allocation7], 32
    $region137: #{vae_forward.1} parent=1 // pred_fallthru
      _
    // Predicated region
    $region138: #{vae_forward.1} parent=1 // pred_check
      _
    $region139: #{vae_forward.1} parent=1 // pred_check_branch
      %2243 = sbr.rel (0) target = $region141
    $region140: #{vae_forward.1} parent=1 // pred_region
      %2244 = dma.done [#allocation24], 32
    $region141: #{vae_forward.1} parent=1 // pred_fallthru
      _
    %2245 = vsyncpa [#allocation6], 1
    %2246 = vsyncpa [#allocation9], 1
    %2247 = vsyncpa [#allocation12], 1
    %2248 = vsyncpa [#allocation15], 1
    %2249 = vsyncpa [#allocation18], 1
    %2250 = vsyncpa [#allocation21], 1
    %2251 = vsyncpa [#allocation7], 1
    %2252 = vsyncpa [#allocation24], 1

</llo_original>
